<compile_context>
chip_gen: v5e
topology: v5e:2x2
jax: 0.10.0
libtpu: 0.0.40
codegen_flags: <defaults>
</compile_context>

<pallas_src>
import functools

import jax
import jax.numpy as jnp
from jax import lax
from jax.experimental import pallas as pl
from jax.experimental.pallas import tpu as pltpu


# --------------------------------------------------------------------------
# helpers
# --------------------------------------------------------------------------
def _round_up(x, m):
    return (x + m - 1) // m * m


def _pick_batch_tile(Bp):
    """Largest batch tile <= 32 (multiple of 8) that divides padded batch."""
    for cand in (32, 24, 16, 8):
        if Bp % cand == 0:
            return cand
    return 8


# --------------------------------------------------------------------------
# Pallas kernels
# --------------------------------------------------------------------------
def _gru_recurrence(x_ref, wih_ref, whh_ref, bih_ref, bhh_ref,
                    h_scr, gi_scr, store_step, unroll):
    """Shared recurrence body for one (batch-block, time-block)."""
    tT, tB, _ = x_ref.shape
    Hp = whh_ref.shape[0]

    # h0 = 0, initialised in-kernel on the first time block of this batch block.
    @pl.when(pl.program_id(1) == 0)
    def _():
        h_scr[...] = jnp.zeros_like(h_scr)

    # ---- Prologue: input projection for the whole block as ONE GEMM
    #      (bias folded in), hoisted off the serial critical path.
    x2d = x_ref[...].reshape(tT * tB, -1).astype(jnp.bfloat16)
    gi_scr[...] = (
        jnp.dot(x2d, wih_ref[...], preferred_element_type=jnp.float32)
        + bih_ref[...]
    )

    whh = whh_ref[...]                                    # bf16 (Hp, 3Hp)
    bhh = jnp.broadcast_to(bhh_ref[...], (tB, 3 * Hp))    # broadcast hoisted

    def step(t, h):
        row = pl.multiple_of(t * tB, tB)
        gi = gi_scr[pl.ds(row, tB), :]                    # (tB, 3Hp) f32
        gh = jnp.dot(h.astype(jnp.bfloat16), whh,
                     preferred_element_type=jnp.float32) + bhh
        # gate blocks are lane-aligned (each gate occupies Hp = 128k lanes)
        r = jax.nn.sigmoid(gi[:, :Hp] + gh[:, :Hp])
        z = jax.nn.sigmoid(gi[:, Hp:2 * Hp] + gh[:, Hp:2 * Hp])
        n = jnp.tanh(gi[:, 2 * Hp:] + r * gh[:, 2 * Hp:])
        h_new = (1.0 - z) * n + z * h
        store_step(t, row, h_new)
        return h_new

    h_scr[...] = lax.fori_loop(0, tT, step, h_scr[...], unroll=unroll)


def _gru_seq_kernel(x_ref, wih_ref, whh_ref, bih_ref, bhh_ref,
                    out_ref, h_scr, gi_scr, *, unroll):
    """Intermediate GRU layer: emits the (bf16) hidden sequence."""
    def store(t, row, h_new):
        out_ref[t] = h_new.astype(out_ref.dtype)

    _gru_recurrence(x_ref, wih_ref, whh_ref, bih_ref, bhh_ref,
                    h_scr, gi_scr, store, unroll)


def _gru_seq_head_kernel(x_ref, wih_ref, whh_ref, bih_ref, bhh_ref,
                         wo_ref, bo_ref, out_ref, h_scr, gi_scr, hseq_scr,
                         *, unroll):
    """Last GRU layer with the Linear head fused into the block epilogue."""
    tT, tB, Op = out_ref.shape

    def store(t, row, h_new):
        hseq_scr[pl.ds(row, tB), :] = h_new

    _gru_recurrence(x_ref, wih_ref, whh_ref, bih_ref, bhh_ref,
                    h_scr, gi_scr, store, unroll)

    y = (jnp.dot(hseq_scr[...].astype(jnp.bfloat16), wo_ref[...],
                 preferred_element_type=jnp.float32)
         + bo_ref[...])
    out_ref[...] = y.reshape(tT, tB, Op)


# --------------------------------------------------------------------------
# pallas_call wrapper for one layer
# --------------------------------------------------------------------------
def _gru_layer_call(x_tbf, wih, whh, bih, bhh, head, *, tT, tB):
    Tp, Bp, Ip = x_tbf.shape
    Hp = whh.shape[0]
    nbb, ntb = Bp // tB, Tp // tT
    unroll = min(8, tT)

    in_specs = [
        pl.BlockSpec((tT, tB, Ip), lambda b, t: (t, b, 0)),
        pl.BlockSpec((Ip, 3 * Hp), lambda b, t: (0, 0)),
        pl.BlockSpec((Hp, 3 * Hp), lambda b, t: (0, 0)),
        pl.BlockSpec((1, 3 * Hp), lambda b, t: (0, 0)),
        pl.BlockSpec((1, 3 * Hp), lambda b, t: (0, 0)),
    ]
    scratch = [
        pltpu.VMEM((tB, Hp), jnp.float32),            # hidden-state carry
        pltpu.VMEM((tT * tB, 3 * Hp), jnp.float32),   # precomputed input gates
    ]
    cparams = pltpu.CompilerParams(
        dimension_semantics=("parallel", "arbitrary"),
        vmem_limit_bytes=48 * 1024 * 1024,            # stays under v7x's 64 MiB
    )

    if head is None:
        return pl.pallas_call(
            functools.partial(_gru_seq_kernel, unroll=unroll),
            out_shape=jax.ShapeDtypeStruct((Tp, Bp, Hp), jnp.bfloat16),
            grid_spec=pltpu.PrefetchScalarGridSpec(
                num_scalar_prefetch=0,
                grid=(nbb, ntb),
                in_specs=in_specs,
                out_specs=pl.BlockSpec((tT, tB, Hp), lambda b, t: (t, b, 0)),
                scratch_shapes=scratch),
            compiler_params=cparams,
        )(x_tbf, wih, whh, bih, bhh)

    wo, bo = head
    Op = wo.shape[1]
    return pl.pallas_call(
        functools.partial(_gru_seq_head_kernel, unroll=unroll),
        out_shape=jax.ShapeDtypeStruct((Tp, Bp, Op), jnp.float32),
        grid_spec=pltpu.PrefetchScalarGridSpec(
            num_scalar_prefetch=0,
            grid=(nbb, ntb),
            in_specs=in_specs + [
                pl.BlockSpec((Hp, Op), lambda b, t: (0, 0)),
                pl.BlockSpec((1, Op), lambda b, t: (0, 0)),
            ],
            out_specs=pl.BlockSpec((tT, tB, Op), lambda b, t: (t, b, 0)),
            scratch_shapes=scratch + [pltpu.VMEM((tT * tB, Hp), jnp.float32)]),
        compiler_params=cparams,
    )(x_tbf, wih, whh, bih, bhh, wo, bo)


# --------------------------------------------------------------------------
# Model forward
# --------------------------------------------------------------------------
@functools.partial(jax.jit, static_argnames=("output_size",))
def gru_model_forward(x_btf, kparams, output_size):
    """x_btf: (B, T, input_size) -> (B, T, output_size)."""
    B, T, _ = x_btf.shape
    Bp = _round_up(B, 8)          # sublane-pad batch
    tB = _pick_batch_tile(Bp)
    tT = T if T <= 128 else 128   # time tile (grid pipelines HBM traffic)
    Tp = _round_up(T, tT)

    # bf16 input (MXU operands are bf16 anyway; halves HBM traffic), time-major.
    x = jnp.transpose(x_btf, (1, 0, 2)).astype(jnp.bfloat16)
    x = jnp.pad(x, ((0, Tp - T), (0, Bp - B), (0, 0)))

    layers = kparams["layers"]
    n_layers = len(layers)
    for l, (wih, whh, bih, bhh) in enumerate(layers):
        head = kparams["head"] if l == n_layers - 1 else None
        x = _gru_layer_call(x, wih, whh, bih, bhh, head, tT=tT, tB=tB)

    y = x[:T, :B, :output_size]                 # drop time/batch/lane padding
    return jnp.transpose(y, (1, 0, 2))


# --------------------------------------------------------------------------
# Parameter init (torch layout) + one-time packing into kernel layout
# --------------------------------------------------------------------------
def init_params(key, input_size, hidden_size, num_layers, output_size):
    params = {"gru": []}
    k_gru = 1.0 / jnp.sqrt(hidden_size)
    for layer in range(num_layers):
        in_sz = input_size if layer == 0 else hidden_size
        key, k1, k2, k3, k4 = jax.random.split(key, 5)
        params["gru"].append({
            "w_ih": jax.random.uniform(k1, (3 * hidden_size, in_sz),
                                       jnp.float32, -k_gru, k_gru),
            "w_hh": jax.random.uniform(k2, (3 * hidden_size, hidden_size),
                                       jnp.float32, -k_gru, k_gru),
            "b_ih": jax.random.uniform(k3, (3 * hidden_size,),
                                       jnp.float32, -k_gru, k_gru),
            "b_hh": jax.random.uniform(k4, (3 * hidden_size,),
                                       jnp.float32, -k_gru, k_gru),
        })
    k_lin = 1.0 / jnp.sqrt(hidden_size)
    key, k1, k2 = jax.random.split(key, 3)
    params["linear"] = {
        "w": jax.random.uniform(k1, (output_size, hidden_size),
                                jnp.float32, -k_lin, k_lin),
        "b": jax.random.uniform(k2, (output_size,), jnp.float32, -k_lin, k_lin),
    }
    return params


def _pack_gate_weight(w, in_pad, Hp, dtype):
    """torch (3H, In) -> (in_pad, 3*Hp); each gate's H block lane-aligned at g*Hp."""
    three_h, in_sz = w.shape
    H = three_h // 3
    out = jnp.zeros((in_pad, 3 * Hp), jnp.float32)
    for g in range(3):
        out = out.at[:in_sz, g * Hp:g * Hp + H].set(w[g * H:(g + 1) * H, :].T)
    return out.astype(dtype)


def _pack_gate_bias(b, Hp):
    H = b.shape[0] // 3
    out = jnp.zeros((1, 3 * Hp), jnp.float32)
    for g in range(3):
        out = out.at[0, g * Hp:g * Hp + H].set(b[g * H:(g + 1) * H])
    return out


def prepare_params(params, input_size, hidden_size, num_layers, output_size):
    """Pad/transpose/bf16-cast once (outside the forward pass)."""
    Hp = _round_up(hidden_size, 128)
    Op = _round_up(output_size, 128)
    layers = []
    for l in range(num_layers):
        p = params["gru"][l]
        in_pad = input_size if l == 0 else Hp
        layers.append((
            _pack_gate_weight(p["w_ih"], in_pad, Hp, jnp.bfloat16),
            _pack_gate_weight(p["w_hh"], Hp, Hp, jnp.bfloat16),
            _pack_gate_bias(p["b_ih"], Hp),
            _pack_gate_bias(p["b_hh"], Hp),
        ))
    O, H = params["linear"]["w"].shape
    wo = (jnp.zeros((Hp, Op), jnp.float32)
          .at[:H, :O].set(params["linear"]["w"].T)).astype(jnp.bfloat16)
    bo = jnp.zeros((1, Op), jnp.float32).at[0, :O].set(params["linear"]["b"])
    return {"layers": layers, "head": (wo, bo)}


# --------------------------------------------------------------------------
# Pure-JAX f32 reference (same math as torch.nn.GRU + Linear)
# --------------------------------------------------------------------------
def reference_forward(x_btf, params, num_layers):
    x = jnp.transpose(x_btf, (1, 0, 2))
    for layer in range(num_layers):
        p = params["gru"][layer]
        H = p["w_hh"].shape[1]
        wih, whh = p["w_ih"].T, p["w_hh"].T
        bih, bhh = p["b_ih"], p["b_hh"]
        h = jnp.zeros((x.shape[1], H), jnp.float32)
        outs = []
        for t in range(x.shape[0]):
            gi = x[t] @ wih + bih
            gh = h @ whh + bhh
            r = jax.nn.sigmoid(gi[:, :H] + gh[:, :H])
            z = jax.nn.sigmoid(gi[:, H:2 * H] + gh[:, H:2 * H])
            n = jnp.tanh(gi[:, 2 * H:] + r * gh[:, 2 * H:])
            h = (1.0 - z) * n + z * h
            outs.append(h)
        x = jnp.stack(outs, axis=0)
    y = jnp.transpose(x, (1, 0, 2)) @ params["linear"]["w"].T + params["linear"]["b"]
    return y


# --------------------------------------------------------------------------
if __name__ == "__main__":
    INPUT_SIZE, HIDDEN_SIZE, NUM_LAYERS, OUTPUT_SIZE = 8, 32, 2, 4
    B, T = 2, 8

    key = jax.random.PRNGKey(0)
    key, pkey, xkey = jax.random.split(key, 3)
    params = init_params(pkey, INPUT_SIZE, HIDDEN_SIZE, NUM_LAYERS, OUTPUT_SIZE)
    kparams = prepare_params(params, INPUT_SIZE, HIDDEN_SIZE,
                             NUM_LAYERS, OUTPUT_SIZE)
    x = jax.random.normal(xkey, (B, T, INPUT_SIZE), jnp.float32)

    out = gru_model_forward(x, kparams, OUTPUT_SIZE)
    out = jax.block_until_ready(out)

    ref = reference_forward(x, params, NUM_LAYERS)
    assert out.shape == (B, T, OUTPUT_SIZE), out.shape
    # Tolerance accounts for bf16 MXU operands / bf16 activations vs f32 reference.
    max_err = float(jnp.max(jnp.abs(out - ref)))
    assert max_err < 5e-2, f"mismatch vs reference: max abs err {max_err}"

    print("KERNEL_OK")
</pallas_src>

<mosaic_0001>
module attributes {stable_mosaic.version = 11 : i64} {
  func.func @_gru_seq_kernel(%arg0: i32, %arg1: i32, %arg2: memref<8x8x8xbf16, #tpu.memory_space<vmem>>, %arg3: memref<8x384xbf16, #tpu.memory_space<vmem>>, %arg4: memref<128x384xbf16, #tpu.memory_space<vmem>>, %arg5: memref<1x384xf32, #tpu.memory_space<vmem>>, %arg6: memref<1x384xf32, #tpu.memory_space<vmem>>, %arg7: memref<8x8x128xbf16, #tpu.memory_space<vmem>>, %arg8: memref<8x128xf32, #tpu.memory_space<vmem>>, %arg9: memref<64x384xf32, #tpu.memory_space<vmem>>) attributes {dimension_semantics = [#tpu.dimension_semantics<parallel>, #tpu.dimension_semantics<arbitrary>], iteration_bounds = array<i64: 1, 1>, scalar_prefetch = 0 : i64, scratch_operands = 2 : i64, tpu.core_type = #tpu.core_type<tc>, window_params = [{transform_indices = @transform_0, window_bounds = array<i64: 8, 8, 8>}, {pipeline_mode = #tpu.pipeline_mode<synchronous>, transform_indices = @transform_1, window_bounds = array<i64: 8, 384>}, {pipeline_mode = #tpu.pipeline_mode<synchronous>, transform_indices = @transform_2, window_bounds = array<i64: 128, 384>}, {pipeline_mode = #tpu.pipeline_mode<synchronous>, transform_indices = @transform_3, window_bounds = array<i64: 1, 384>}, {pipeline_mode = #tpu.pipeline_mode<synchronous>, transform_indices = @transform_4, window_bounds = array<i64: 1, 384>}, {transform_indices = @transform_5, window_bounds = array<i64: 8, 8, 128>}]} {
    %c0_i32 = arith.constant 0 : i32
    %0 = arith.cmpi eq, %arg1, %c0_i32 : i32
    %1 = arith.extui %0 : i1 to i32
    %c0_i32_0 = arith.constant 0 : i32
    %2 = arith.cmpi ne, %1, %c0_i32_0 : i32
    scf.if %2 {
      %cst_82 = arith.constant 0.000000e+00 : f32
      %321 = vector.broadcast %cst_82 : f32 to vector<8x128xf32>
      %c0_83 = arith.constant 0 : index
      %c0_84 = arith.constant 0 : index
      %322 = vector.load %arg8[%c0_83, %c0_84] : memref<8x128xf32, #tpu.memory_space<vmem>>, vector<8x128xf32>
      tpu.vector_store %arg8[%c0_83, %c0_84], %321 {strides = array<i32>} : memref<8x128xf32, #tpu.memory_space<vmem>>, vector<8x128xf32>,
    } else {
    }
    %c0 = arith.constant 0 : index
    %c0_1 = arith.constant 0 : index
    %c0_2 = arith.constant 0 : index
    %3 = vector.load %arg2[%c0, %c0_1, %c0_2] : memref<8x8x8xbf16, #tpu.memory_space<vmem>>, vector<8x8x8xbf16>
    %4 = vector.shape_cast %3 : vector<8x8x8xbf16> to vector<64x8xbf16>
    %c0_3 = arith.constant 0 : index
    %c0_4 = arith.constant 0 : index
    %5 = vector.load %arg3[%c0_3, %c0_4] : memref<8x384xbf16, #tpu.memory_space<vmem>>, vector<8x384xbf16>
    %cst = arith.constant dense<0.000000e+00> : vector<64x384xf32>
    %6 = tpu.matmul %4, %5, %cst {dimension_numbers = #tpu.dot_dimension_numbers<[1], [0], [0], [1], [0, 0, 1, 1], [], []>} : vector<64x8xbf16>, vector<8x384xbf16>, vector<64x384xf32> -> vector<64x384xf32>
    %c0_5 = arith.constant 0 : index
    %c0_6 = arith.constant 0 : index
    %7 = vector.load %arg5[%c0_5, %c0_6] : memref<1x384xf32, #tpu.memory_space<vmem>>, vector<1x384xf32>
    %8 = vector.broadcast %7 : vector<1x384xf32> to vector<64x384xf32>
    %9 = arith.addf %6, %8 : vector<64x384xf32>
    %c0_7 = arith.constant 0 : index
    %c0_8 = arith.constant 0 : index
    %10 = vector.load %arg9[%c0_7, %c0_8] : memref<64x384xf32, #tpu.memory_space<vmem>>, vector<64x384xf32>
    tpu.vector_store %arg9[%c0_7, %c0_8], %9 {strides = array<i32>} : memref<64x384xf32, #tpu.memory_space<vmem>>, vector<64x384xf32>,
    %c0_9 = arith.constant 0 : index
    %c0_10 = arith.constant 0 : index
    %11 = vector.load %arg4[%c0_9, %c0_10] : memref<128x384xbf16, #tpu.memory_space<vmem>>, vector<128x384xbf16>
    %c0_11 = arith.constant 0 : index
    %c0_12 = arith.constant 0 : index
    %12 = vector.load %arg6[%c0_11, %c0_12] : memref<1x384xf32, #tpu.memory_space<vmem>>, vector<1x384xf32>
    %13 = vector.shape_cast %12 : vector<1x384xf32> to vector<1x384xf32>
    %14 = vector.broadcast %13 : vector<1x384xf32> to vector<8x384xf32>
    %c0_13 = arith.constant 0 : index
    %c0_14 = arith.constant 0 : index
    %15 = vector.load %arg8[%c0_13, %c0_14] : memref<8x128xf32, #tpu.memory_space<vmem>>, vector<8x128xf32>
    %c0_i32_15 = arith.constant 0 : i32
    %c8_i32 = arith.constant 8 : i32
    %16 = arith.muli %c0_i32_15, %c8_i32 : i32
    %17 = tpu.assume_multiple %16, 8 : i32
    %18 = arith.index_cast %17 : i32 to index
    %c0_16 = arith.constant 0 : index
    %19 = vector.load %arg9[%18, %c0_16] : memref<64x384xf32, #tpu.memory_space<vmem>>, vector<8x384xf32>
    %20 = arith.truncf %15 : vector<8x128xf32> to vector<8x128xbf16>
    %cst_17 = arith.constant dense<0.000000e+00> : vector<8x384xf32>
    %21 = tpu.matmul %20, %11, %cst_17 {dimension_numbers = #tpu.dot_dimension_numbers<[1], [0], [0], [1], [0, 0, 1, 1], [], []>} : vector<8x128xbf16>, vector<128x384xbf16>, vector<8x384xf32> -> vector<8x384xf32>
    %22 = arith.addf %21, %14 : vector<8x384xf32>
    %23 = vector.extract_strided_slice %19 {offsets = [0, 0], sizes = [8, 128], strides = [1, 1]} : vector<8x384xf32> to vector<8x128xf32>
    %24 = vector.extract_strided_slice %22 {offsets = [0, 0], sizes = [8, 128], strides = [1, 1]} : vector<8x384xf32> to vector<8x128xf32>
    %25 = arith.addf %23, %24 : vector<8x128xf32>
    %26 = arith.negf %25 : vector<8x128xf32>
    %27 = math.exp %26 : vector<8x128xf32>
    %cst_18 = arith.constant 1.000000e+00 : f32
    %28 = vector.broadcast %cst_18 : f32 to vector<8x128xf32>
    %29 = arith.addf %28, %27 : vector<8x128xf32>
    %30 = arith.divf %28, %29 : vector<8x128xf32>
    %31 = vector.extract_strided_slice %19 {offsets = [0, 128], sizes = [8, 128], strides = [1, 1]} : vector<8x384xf32> to vector<8x128xf32>
    %32 = vector.extract_strided_slice %22 {offsets = [0, 128], sizes = [8, 128], strides = [1, 1]} : vector<8x384xf32> to vector<8x128xf32>
    %33 = arith.addf %31, %32 : vector<8x128xf32>
    %34 = arith.negf %33 : vector<8x128xf32>
    %35 = math.exp %34 : vector<8x128xf32>
    %cst_19 = arith.constant 1.000000e+00 : f32
    %36 = vector.broadcast %cst_19 : f32 to vector<8x128xf32>
    %37 = arith.addf %36, %35 : vector<8x128xf32>
    %38 = arith.divf %36, %37 : vector<8x128xf32>
    %39 = vector.extract_strided_slice %19 {offsets = [0, 256], sizes = [8, 128], strides = [1, 1]} : vector<8x384xf32> to vector<8x128xf32>
    %40 = vector.extract_strided_slice %22 {offsets = [0, 256], sizes = [8, 128], strides = [1, 1]} : vector<8x384xf32> to vector<8x128xf32>
    %41 = arith.mulf %30, %40 : vector<8x128xf32>
    %42 = arith.addf %39, %41 : vector<8x128xf32>
    %43 = math.tanh %42 : vector<8x128xf32>
    %cst_20 = arith.constant 1.000000e+00 : f32
    %44 = vector.broadcast %cst_20 : f32 to vector<8x128xf32>
    %45 = arith.subf %44, %38 : vector<8x128xf32>
    %46 = arith.mulf %45, %43 : vector<8x128xf32>
    %47 = arith.mulf %38, %15 : vector<8x128xf32>
    %48 = arith.addf %46, %47 : vector<8x128xf32>
    %49 = arith.truncf %48 : vector<8x128xf32> to vector<8x128xbf16>
    %50 = arith.index_cast %c0_i32_15 : i32 to index
    %c0_21 = arith.constant 0 : index
    %c0_22 = arith.constant 0 : index
    %51 = vector.load %arg7[%50, %c0_21, %c0_22] : memref<8x8x128xbf16, #tpu.memory_space<vmem>>, vector<1x8x128xbf16>
    %52 = vector.shape_cast %51 : vector<1x8x128xbf16> to vector<8x128xbf16>
    %53 = vector.shape_cast %49 : vector<8x128xbf16> to vector<1x8x128xbf16>
    tpu.vector_store %arg7[%50, %c0_21, %c0_22], %53 {strides = array<i32>} : memref<8x8x128xbf16, #tpu.memory_space<vmem>>, vector<1x8x128xbf16>,
    %c1_i32 = arith.constant 1 : i32
    %c8_i32_23 = arith.constant 8 : i32
    %54 = arith.muli %c1_i32, %c8_i32_23 : i32
    %55 = tpu.assume_multiple %54, 8 : i32
    %56 = arith.index_cast %55 : i32 to index
    %c0_24 = arith.constant 0 : index
    %57 = vector.load %arg9[%56, %c0_24] : memref<64x384xf32, #tpu.memory_space<vmem>>, vector<8x384xf32>
    %58 = arith.truncf %48 : vector<8x128xf32> to vector<8x128xbf16>
    %cst_25 = arith.constant dense<0.000000e+00> : vector<8x384xf32>
    %59 = tpu.matmul %58, %11, %cst_25 {dimension_numbers = #tpu.dot_dimension_numbers<[1], [0], [0], [1], [0, 0, 1, 1], [], []>} : vector<8x128xbf16>, vector<128x384xbf16>, vector<8x384xf32> -> vector<8x384xf32>
    %60 = arith.addf %59, %14 : vector<8x384xf32>
    %61 = vector.extract_strided_slice %57 {offsets = [0, 0], sizes = [8, 128], strides = [1, 1]} : vector<8x384xf32> to vector<8x128xf32>
    %62 = vector.extract_strided_slice %60 {offsets = [0, 0], sizes = [8, 128], strides = [1, 1]} : vector<8x384xf32> to vector<8x128xf32>
    %63 = arith.addf %61, %62 : vector<8x128xf32>
    %64 = arith.negf %63 : vector<8x128xf32>
    %65 = math.exp %64 : vector<8x128xf32>
    %cst_26 = arith.constant 1.000000e+00 : f32
    %66 = vector.broadcast %cst_26 : f32 to vector<8x128xf32>
    %67 = arith.addf %66, %65 : vector<8x128xf32>
    %68 = arith.divf %66, %67 : vector<8x128xf32>
    %69 = vector.extract_strided_slice %57 {offsets = [0, 128], sizes = [8, 128], strides = [1, 1]} : vector<8x384xf32> to vector<8x128xf32>
    %70 = vector.extract_strided_slice %60 {offsets = [0, 128], sizes = [8, 128], strides = [1, 1]} : vector<8x384xf32> to vector<8x128xf32>
    %71 = arith.addf %69, %70 : vector<8x128xf32>
    %72 = arith.negf %71 : vector<8x128xf32>
    %73 = math.exp %72 : vector<8x128xf32>
    %cst_27 = arith.constant 1.000000e+00 : f32
    %74 = vector.broadcast %cst_27 : f32 to vector<8x128xf32>
    %75 = arith.addf %74, %73 : vector<8x128xf32>
    %76 = arith.divf %74, %75 : vector<8x128xf32>
    %77 = vector.extract_strided_slice %57 {offsets = [0, 256], sizes = [8, 128], strides = [1, 1]} : vector<8x384xf32> to vector<8x128xf32>
    %78 = vector.extract_strided_slice %60 {offsets = [0, 256], sizes = [8, 128], strides = [1, 1]} : vector<8x384xf32> to vector<8x128xf32>
    %79 = arith.mulf %68, %78 : vector<8x128xf32>
    %80 = arith.addf %77, %79 : vector<8x128xf32>
    %81 = math.tanh %80 : vector<8x128xf32>
    %cst_28 = arith.constant 1.000000e+00 : f32
    %82 = vector.broadcast %cst_28 : f32 to vector<8x128xf32>
    %83 = arith.subf %82, %76 : vector<8x128xf32>
    %84 = arith.mulf %83, %81 : vector<8x128xf32>
    %85 = arith.mulf %76, %48 : vector<8x128xf32>
    %86 = arith.addf %84, %85 : vector<8x128xf32>
    %87 = arith.truncf %86 : vector<8x128xf32> to vector<8x128xbf16>
    %88 = arith.index_cast %c1_i32 : i32 to index
    %c0_29 = arith.constant 0 : index
    %c0_30 = arith.constant 0 : index
    %89 = vector.load %arg7[%88, %c0_29, %c0_30] : memref<8x8x128xbf16, #tpu.memory_space<vmem>>, vector<1x8x128xbf16>
    %90 = vector.shape_cast %89 : vector<1x8x128xbf16> to vector<8x128xbf16>
    %91 = vector.shape_cast %87 : vector<8x128xbf16> to vector<1x8x128xbf16>
    tpu.vector_store %arg7[%88, %c0_29, %c0_30], %91 {strides = array<i32>} : memref<8x8x128xbf16, #tpu.memory_space<vmem>>, vector<1x8x128xbf16>,
    %c2_i32 = arith.constant 2 : i32
    %c8_i32_31 = arith.constant 8 : i32
    %92 = arith.muli %c2_i32, %c8_i32_31 : i32
    %93 = tpu.assume_multiple %92, 8 : i32
    %94 = arith.index_cast %93 : i32 to index
    %c0_32 = arith.constant 0 : index
    %95 = vector.load %arg9[%94, %c0_32] : memref<64x384xf32, #tpu.memory_space<vmem>>, vector<8x384xf32>
    %96 = arith.truncf %86 : vector<8x128xf32> to vector<8x128xbf16>
    %cst_33 = arith.constant dense<0.000000e+00> : vector<8x384xf32>
    %97 = tpu.matmul %96, %11, %cst_33 {dimension_numbers = #tpu.dot_dimension_numbers<[1], [0], [0], [1], [0, 0, 1, 1], [], []>} : vector<8x128xbf16>, vector<128x384xbf16>, vector<8x384xf32> -> vector<8x384xf32>
    %98 = arith.addf %97, %14 : vector<8x384xf32>
    %99 = vector.extract_strided_slice %95 {offsets = [0, 0], sizes = [8, 128], strides = [1, 1]} : vector<8x384xf32> to vector<8x128xf32>
    %100 = vector.extract_strided_slice %98 {offsets = [0, 0], sizes = [8, 128], strides = [1, 1]} : vector<8x384xf32> to vector<8x128xf32>
    %101 = arith.addf %99, %100 : vector<8x128xf32>
    %102 = arith.negf %101 : vector<8x128xf32>
    %103 = math.exp %102 : vector<8x128xf32>
    %cst_34 = arith.constant 1.000000e+00 : f32
    %104 = vector.broadcast %cst_34 : f32 to vector<8x128xf32>
    %105 = arith.addf %104, %103 : vector<8x128xf32>
    %106 = arith.divf %104, %105 : vector<8x128xf32>
    %107 = vector.extract_strided_slice %95 {offsets = [0, 128], sizes = [8, 128], strides = [1, 1]} : vector<8x384xf32> to vector<8x128xf32>
    %108 = vector.extract_strided_slice %98 {offsets = [0, 128], sizes = [8, 128], strides = [1, 1]} : vector<8x384xf32> to vector<8x128xf32>
    %109 = arith.addf %107, %108 : vector<8x128xf32>
    %110 = arith.negf %109 : vector<8x128xf32>
    %111 = math.exp %110 : vector<8x128xf32>
    %cst_35 = arith.constant 1.000000e+00 : f32
    %112 = vector.broadcast %cst_35 : f32 to vector<8x128xf32>
    %113 = arith.addf %112, %111 : vector<8x128xf32>
    %114 = arith.divf %112, %113 : vector<8x128xf32>
    %115 = vector.extract_strided_slice %95 {offsets = [0, 256], sizes = [8, 128], strides = [1, 1]} : vector<8x384xf32> to vector<8x128xf32>
    %116 = vector.extract_strided_slice %98 {offsets = [0, 256], sizes = [8, 128], strides = [1, 1]} : vector<8x384xf32> to vector<8x128xf32>
    %117 = arith.mulf %106, %116 : vector<8x128xf32>
    %118 = arith.addf %115, %117 : vector<8x128xf32>
    %119 = math.tanh %118 : vector<8x128xf32>
    %cst_36 = arith.constant 1.000000e+00 : f32
    %120 = vector.broadcast %cst_36 : f32 to vector<8x128xf32>
    %121 = arith.subf %120, %114 : vector<8x128xf32>
    %122 = arith.mulf %121, %119 : vector<8x128xf32>
    %123 = arith.mulf %114, %86 : vector<8x128xf32>
    %124 = arith.addf %122, %123 : vector<8x128xf32>
    %125 = arith.truncf %124 : vector<8x128xf32> to vector<8x128xbf16>
    %126 = arith.index_cast %c2_i32 : i32 to index
    %c0_37 = arith.constant 0 : index
    %c0_38 = arith.constant 0 : index
    %127 = vector.load %arg7[%126, %c0_37, %c0_38] : memref<8x8x128xbf16, #tpu.memory_space<vmem>>, vector<1x8x128xbf16>
    %128 = vector.shape_cast %127 : vector<1x8x128xbf16> to vector<8x128xbf16>
    %129 = vector.shape_cast %125 : vector<8x128xbf16> to vector<1x8x128xbf16>
    tpu.vector_store %arg7[%126, %c0_37, %c0_38], %129 {strides = array<i32>} : memref<8x8x128xbf16, #tpu.memory_space<vmem>>, vector<1x8x128xbf16>,
    %c3_i32 = arith.constant 3 : i32
    %c8_i32_39 = arith.constant 8 : i32
    %130 = arith.muli %c3_i32, %c8_i32_39 : i32
    %131 = tpu.assume_multiple %130, 8 : i32
    %132 = arith.index_cast %131 : i32 to index
    %c0_40 = arith.constant 0 : index
    %133 = vector.load %arg9[%132, %c0_40] : memref<64x384xf32, #tpu.memory_space<vmem>>, vector<8x384xf32>
    %134 = arith.truncf %124 : vector<8x128xf32> to vector<8x128xbf16>
    %cst_41 = arith.constant dense<0.000000e+00> : vector<8x384xf32>
    %135 = tpu.matmul %134, %11, %cst_41 {dimension_numbers = #tpu.dot_dimension_numbers<[1], [0], [0], [1], [0, 0, 1, 1], [], []>} : vector<8x128xbf16>, vector<128x384xbf16>, vector<8x384xf32> -> vector<8x384xf32>
    %136 = arith.addf %135, %14 : vector<8x384xf32>
    %137 = vector.extract_strided_slice %133 {offsets = [0, 0], sizes = [8, 128], strides = [1, 1]} : vector<8x384xf32> to vector<8x128xf32>
    %138 = vector.extract_strided_slice %136 {offsets = [0, 0], sizes = [8, 128], strides = [1, 1]} : vector<8x384xf32> to vector<8x128xf32>
    %139 = arith.addf %137, %138 : vector<8x128xf32>
    %140 = arith.negf %139 : vector<8x128xf32>
    %141 = math.exp %140 : vector<8x128xf32>
    %cst_42 = arith.constant 1.000000e+00 : f32
    %142 = vector.broadcast %cst_42 : f32 to vector<8x128xf32>
    %143 = arith.addf %142, %141 : vector<8x128xf32>
    %144 = arith.divf %142, %143 : vector<8x128xf32>
    %145 = vector.extract_strided_slice %133 {offsets = [0, 128], sizes = [8, 128], strides = [1, 1]} : vector<8x384xf32> to vector<8x128xf32>
    %146 = vector.extract_strided_slice %136 {offsets = [0, 128], sizes = [8, 128], strides = [1, 1]} : vector<8x384xf32> to vector<8x128xf32>
    %147 = arith.addf %145, %146 : vector<8x128xf32>
    %148 = arith.negf %147 : vector<8x128xf32>
    %149 = math.exp %148 : vector<8x128xf32>
    %cst_43 = arith.constant 1.000000e+00 : f32
    %150 = vector.broadcast %cst_43 : f32 to vector<8x128xf32>
    %151 = arith.addf %150, %149 : vector<8x128xf32>
    %152 = arith.divf %150, %151 : vector<8x128xf32>
    %153 = vector.extract_strided_slice %133 {offsets = [0, 256], sizes = [8, 128], strides = [1, 1]} : vector<8x384xf32> to vector<8x128xf32>
    %154 = vector.extract_strided_slice %136 {offsets = [0, 256], sizes = [8, 128], strides = [1, 1]} : vector<8x384xf32> to vector<8x128xf32>
    %155 = arith.mulf %144, %154 : vector<8x128xf32>
    %156 = arith.addf %153, %155 : vector<8x128xf32>
    %157 = math.tanh %156 : vector<8x128xf32>
    %cst_44 = arith.constant 1.000000e+00 : f32
    %158 = vector.broadcast %cst_44 : f32 to vector<8x128xf32>
    %159 = arith.subf %158, %152 : vector<8x128xf32>
    %160 = arith.mulf %159, %157 : vector<8x128xf32>
    %161 = arith.mulf %152, %124 : vector<8x128xf32>
    %162 = arith.addf %160, %161 : vector<8x128xf32>
    %163 = arith.truncf %162 : vector<8x128xf32> to vector<8x128xbf16>
    %164 = arith.index_cast %c3_i32 : i32 to index
    %c0_45 = arith.constant 0 : index
    %c0_46 = arith.constant 0 : index
    %165 = vector.load %arg7[%164, %c0_45, %c0_46] : memref<8x8x128xbf16, #tpu.memory_space<vmem>>, vector<1x8x128xbf16>
    %166 = vector.shape_cast %165 : vector<1x8x128xbf16> to vector<8x128xbf16>
    %167 = vector.shape_cast %163 : vector<8x128xbf16> to vector<1x8x128xbf16>
    tpu.vector_store %arg7[%164, %c0_45, %c0_46], %167 {strides = array<i32>} : memref<8x8x128xbf16, #tpu.memory_space<vmem>>, vector<1x8x128xbf16>,
    %c4_i32 = arith.constant 4 : i32
    %c8_i32_47 = arith.constant 8 : i32
    %168 = arith.muli %c4_i32, %c8_i32_47 : i32
    %169 = tpu.assume_multiple %168, 8 : i32
    %170 = arith.index_cast %169 : i32 to index
    %c0_48 = arith.constant 0 : index
    %171 = vector.load %arg9[%170, %c0_48] : memref<64x384xf32, #tpu.memory_space<vmem>>, vector<8x384xf32>
    %172 = arith.truncf %162 : vector<8x128xf32> to vector<8x128xbf16>
    %cst_49 = arith.constant dense<0.000000e+00> : vector<8x384xf32>
    %173 = tpu.matmul %172, %11, %cst_49 {dimension_numbers = #tpu.dot_dimension_numbers<[1], [0], [0], [1], [0, 0, 1, 1], [], []>} : vector<8x128xbf16>, vector<128x384xbf16>, vector<8x384xf32> -> vector<8x384xf32>
    %174 = arith.addf %173, %14 : vector<8x384xf32>
    %175 = vector.extract_strided_slice %171 {offsets = [0, 0], sizes = [8, 128], strides = [1, 1]} : vector<8x384xf32> to vector<8x128xf32>
    %176 = vector.extract_strided_slice %174 {offsets = [0, 0], sizes = [8, 128], strides = [1, 1]} : vector<8x384xf32> to vector<8x128xf32>
    %177 = arith.addf %175, %176 : vector<8x128xf32>
    %178 = arith.negf %177 : vector<8x128xf32>
    %179 = math.exp %178 : vector<8x128xf32>
    %cst_50 = arith.constant 1.000000e+00 : f32
    %180 = vector.broadcast %cst_50 : f32 to vector<8x128xf32>
    %181 = arith.addf %180, %179 : vector<8x128xf32>
    %182 = arith.divf %180, %181 : vector<8x128xf32>
    %183 = vector.extract_strided_slice %171 {offsets = [0, 128], sizes = [8, 128], strides = [1, 1]} : vector<8x384xf32> to vector<8x128xf32>
    %184 = vector.extract_strided_slice %174 {offsets = [0, 128], sizes = [8, 128], strides = [1, 1]} : vector<8x384xf32> to vector<8x128xf32>
    %185 = arith.addf %183, %184 : vector<8x128xf32>
    %186 = arith.negf %185 : vector<8x128xf32>
    %187 = math.exp %186 : vector<8x128xf32>
    %cst_51 = arith.constant 1.000000e+00 : f32
    %188 = vector.broadcast %cst_51 : f32 to vector<8x128xf32>
    %189 = arith.addf %188, %187 : vector<8x128xf32>
    %190 = arith.divf %188, %189 : vector<8x128xf32>
    %191 = vector.extract_strided_slice %171 {offsets = [0, 256], sizes = [8, 128], strides = [1, 1]} : vector<8x384xf32> to vector<8x128xf32>
    %192 = vector.extract_strided_slice %174 {offsets = [0, 256], sizes = [8, 128], strides = [1, 1]} : vector<8x384xf32> to vector<8x128xf32>
    %193 = arith.mulf %182, %192 : vector<8x128xf32>
    %194 = arith.addf %191, %193 : vector<8x128xf32>
    %195 = math.tanh %194 : vector<8x128xf32>
    %cst_52 = arith.constant 1.000000e+00 : f32
    %196 = vector.broadcast %cst_52 : f32 to vector<8x128xf32>
    %197 = arith.subf %196, %190 : vector<8x128xf32>
    %198 = arith.mulf %197, %195 : vector<8x128xf32>
    %199 = arith.mulf %190, %162 : vector<8x128xf32>
    %200 = arith.addf %198, %199 : vector<8x128xf32>
    %201 = arith.truncf %200 : vector<8x128xf32> to vector<8x128xbf16>
    %202 = arith.index_cast %c4_i32 : i32 to index
    %c0_53 = arith.constant 0 : index
    %c0_54 = arith.constant 0 : index
    %203 = vector.load %arg7[%202, %c0_53, %c0_54] : memref<8x8x128xbf16, #tpu.memory_space<vmem>>, vector<1x8x128xbf16>
    %204 = vector.shape_cast %203 : vector<1x8x128xbf16> to vector<8x128xbf16>
    %205 = vector.shape_cast %201 : vector<8x128xbf16> to vector<1x8x128xbf16>
    tpu.vector_store %arg7[%202, %c0_53, %c0_54], %205 {strides = array<i32>} : memref<8x8x128xbf16, #tpu.memory_space<vmem>>, vector<1x8x128xbf16>,
    %c5_i32 = arith.constant 5 : i32
    %c8_i32_55 = arith.constant 8 : i32
    %206 = arith.muli %c5_i32, %c8_i32_55 : i32
    %207 = tpu.assume_multiple %206, 8 : i32
    %208 = arith.index_cast %207 : i32 to index
    %c0_56 = arith.constant 0 : index
    %209 = vector.load %arg9[%208, %c0_56] : memref<64x384xf32, #tpu.memory_space<vmem>>, vector<8x384xf32>
    %210 = arith.truncf %200 : vector<8x128xf32> to vector<8x128xbf16>
    %cst_57 = arith.constant dense<0.000000e+00> : vector<8x384xf32>
    %211 = tpu.matmul %210, %11, %cst_57 {dimension_numbers = #tpu.dot_dimension_numbers<[1], [0], [0], [1], [0, 0, 1, 1], [], []>} : vector<8x128xbf16>, vector<128x384xbf16>, vector<8x384xf32> -> vector<8x384xf32>
    %212 = arith.addf %211, %14 : vector<8x384xf32>
    %213 = vector.extract_strided_slice %209 {offsets = [0, 0], sizes = [8, 128], strides = [1, 1]} : vector<8x384xf32> to vector<8x128xf32>
    %214 = vector.extract_strided_slice %212 {offsets = [0, 0], sizes = [8, 128], strides = [1, 1]} : vector<8x384xf32> to vector<8x128xf32>
    %215 = arith.addf %213, %214 : vector<8x128xf32>
    %216 = arith.negf %215 : vector<8x128xf32>
    %217 = math.exp %216 : vector<8x128xf32>
    %cst_58 = arith.constant 1.000000e+00 : f32
    %218 = vector.broadcast %cst_58 : f32 to vector<8x128xf32>
    %219 = arith.addf %218, %217 : vector<8x128xf32>
    %220 = arith.divf %218, %219 : vector<8x128xf32>
    %221 = vector.extract_strided_slice %209 {offsets = [0, 128], sizes = [8, 128], strides = [1, 1]} : vector<8x384xf32> to vector<8x128xf32>
    %222 = vector.extract_strided_slice %212 {offsets = [0, 128], sizes = [8, 128], strides = [1, 1]} : vector<8x384xf32> to vector<8x128xf32>
    %223 = arith.addf %221, %222 : vector<8x128xf32>
    %224 = arith.negf %223 : vector<8x128xf32>
    %225 = math.exp %224 : vector<8x128xf32>
    %cst_59 = arith.constant 1.000000e+00 : f32
    %226 = vector.broadcast %cst_59 : f32 to vector<8x128xf32>
    %227 = arith.addf %226, %225 : vector<8x128xf32>
    %228 = arith.divf %226, %227 : vector<8x128xf32>
    %229 = vector.extract_strided_slice %209 {offsets = [0, 256], sizes = [8, 128], strides = [1, 1]} : vector<8x384xf32> to vector<8x128xf32>
    %230 = vector.extract_strided_slice %212 {offsets = [0, 256], sizes = [8, 128], strides = [1, 1]} : vector<8x384xf32> to vector<8x128xf32>
    %231 = arith.mulf %220, %230 : vector<8x128xf32>
    %232 = arith.addf %229, %231 : vector<8x128xf32>
    %233 = math.tanh %232 : vector<8x128xf32>
    %cst_60 = arith.constant 1.000000e+00 : f32
    %234 = vector.broadcast %cst_60 : f32 to vector<8x128xf32>
    %235 = arith.subf %234, %228 : vector<8x128xf32>
    %236 = arith.mulf %235, %233 : vector<8x128xf32>
    %237 = arith.mulf %228, %200 : vector<8x128xf32>
    %238 = arith.addf %236, %237 : vector<8x128xf32>
    %239 = arith.truncf %238 : vector<8x128xf32> to vector<8x128xbf16>
    %240 = arith.index_cast %c5_i32 : i32 to index
    %c0_61 = arith.constant 0 : index
    %c0_62 = arith.constant 0 : index
    %241 = vector.load %arg7[%240, %c0_61, %c0_62] : memref<8x8x128xbf16, #tpu.memory_space<vmem>>, vector<1x8x128xbf16>
    %242 = vector.shape_cast %241 : vector<1x8x128xbf16> to vector<8x128xbf16>
    %243 = vector.shape_cast %239 : vector<8x128xbf16> to vector<1x8x128xbf16>
    tpu.vector_store %arg7[%240, %c0_61, %c0_62], %243 {strides = array<i32>} : memref<8x8x128xbf16, #tpu.memory_space<vmem>>, vector<1x8x128xbf16>,
    %c6_i32 = arith.constant 6 : i32
    %c8_i32_63 = arith.constant 8 : i32
    %244 = arith.muli %c6_i32, %c8_i32_63 : i32
    %245 = tpu.assume_multiple %244, 8 : i32
    %246 = arith.index_cast %245 : i32 to index
    %c0_64 = arith.constant 0 : index
    %247 = vector.load %arg9[%246, %c0_64] : memref<64x384xf32, #tpu.memory_space<vmem>>, vector<8x384xf32>
    %248 = arith.truncf %238 : vector<8x128xf32> to vector<8x128xbf16>
    %cst_65 = arith.constant dense<0.000000e+00> : vector<8x384xf32>
    %249 = tpu.matmul %248, %11, %cst_65 {dimension_numbers = #tpu.dot_dimension_numbers<[1], [0], [0], [1], [0, 0, 1, 1], [], []>} : vector<8x128xbf16>, vector<128x384xbf16>, vector<8x384xf32> -> vector<8x384xf32>
    %250 = arith.addf %249, %14 : vector<8x384xf32>
    %251 = vector.extract_strided_slice %247 {offsets = [0, 0], sizes = [8, 128], strides = [1, 1]} : vector<8x384xf32> to vector<8x128xf32>
    %252 = vector.extract_strided_slice %250 {offsets = [0, 0], sizes = [8, 128], strides = [1, 1]} : vector<8x384xf32> to vector<8x128xf32>
    %253 = arith.addf %251, %252 : vector<8x128xf32>
    %254 = arith.negf %253 : vector<8x128xf32>
    %255 = math.exp %254 : vector<8x128xf32>
    %cst_66 = arith.constant 1.000000e+00 : f32
    %256 = vector.broadcast %cst_66 : f32 to vector<8x128xf32>
    %257 = arith.addf %256, %255 : vector<8x128xf32>
    %258 = arith.divf %256, %257 : vector<8x128xf32>
    %259 = vector.extract_strided_slice %247 {offsets = [0, 128], sizes = [8, 128], strides = [1, 1]} : vector<8x384xf32> to vector<8x128xf32>
    %260 = vector.extract_strided_slice %250 {offsets = [0, 128], sizes = [8, 128], strides = [1, 1]} : vector<8x384xf32> to vector<8x128xf32>
    %261 = arith.addf %259, %260 : vector<8x128xf32>
    %262 = arith.negf %261 : vector<8x128xf32>
    %263 = math.exp %262 : vector<8x128xf32>
    %cst_67 = arith.constant 1.000000e+00 : f32
    %264 = vector.broadcast %cst_67 : f32 to vector<8x128xf32>
    %265 = arith.addf %264, %263 : vector<8x128xf32>
    %266 = arith.divf %264, %265 : vector<8x128xf32>
    %267 = vector.extract_strided_slice %247 {offsets = [0, 256], sizes = [8, 128], strides = [1, 1]} : vector<8x384xf32> to vector<8x128xf32>
    %268 = vector.extract_strided_slice %250 {offsets = [0, 256], sizes = [8, 128], strides = [1, 1]} : vector<8x384xf32> to vector<8x128xf32>
    %269 = arith.mulf %258, %268 : vector<8x128xf32>
    %270 = arith.addf %267, %269 : vector<8x128xf32>
    %271 = math.tanh %270 : vector<8x128xf32>
    %cst_68 = arith.constant 1.000000e+00 : f32
    %272 = vector.broadcast %cst_68 : f32 to vector<8x128xf32>
    %273 = arith.subf %272, %266 : vector<8x128xf32>
    %274 = arith.mulf %273, %271 : vector<8x128xf32>
    %275 = arith.mulf %266, %238 : vector<8x128xf32>
    %276 = arith.addf %274, %275 : vector<8x128xf32>
    %277 = arith.truncf %276 : vector<8x128xf32> to vector<8x128xbf16>
    %278 = arith.index_cast %c6_i32 : i32 to index
    %c0_69 = arith.constant 0 : index
    %c0_70 = arith.constant 0 : index
    %279 = vector.load %arg7[%278, %c0_69, %c0_70] : memref<8x8x128xbf16, #tpu.memory_space<vmem>>, vector<1x8x128xbf16>
    %280 = vector.shape_cast %279 : vector<1x8x128xbf16> to vector<8x128xbf16>
    %281 = vector.shape_cast %277 : vector<8x128xbf16> to vector<1x8x128xbf16>
    tpu.vector_store %arg7[%278, %c0_69, %c0_70], %281 {strides = array<i32>} : memref<8x8x128xbf16, #tpu.memory_space<vmem>>, vector<1x8x128xbf16>,
    %c7_i32 = arith.constant 7 : i32
    %c8_i32_71 = arith.constant 8 : i32
    %282 = arith.muli %c7_i32, %c8_i32_71 : i32
    %283 = tpu.assume_multiple %282, 8 : i32
    %284 = arith.index_cast %283 : i32 to index
    %c0_72 = arith.constant 0 : index
    %285 = vector.load %arg9[%284, %c0_72] : memref<64x384xf32, #tpu.memory_space<vmem>>, vector<8x384xf32>
    %286 = arith.truncf %276 : vector<8x128xf32> to vector<8x128xbf16>
    %cst_73 = arith.constant dense<0.000000e+00> : vector<8x384xf32>
    %287 = tpu.matmul %286, %11, %cst_73 {dimension_numbers = #tpu.dot_dimension_numbers<[1], [0], [0], [1], [0, 0, 1, 1], [], []>} : vector<8x128xbf16>, vector<128x384xbf16>, vector<8x384xf32> -> vector<8x384xf32>
    %288 = arith.addf %287, %14 : vector<8x384xf32>
    %289 = vector.extract_strided_slice %285 {offsets = [0, 0], sizes = [8, 128], strides = [1, 1]} : vector<8x384xf32> to vector<8x128xf32>
    %290 = vector.extract_strided_slice %288 {offsets = [0, 0], sizes = [8, 128], strides = [1, 1]} : vector<8x384xf32> to vector<8x128xf32>
    %291 = arith.addf %289, %290 : vector<8x128xf32>
    %292 = arith.negf %291 : vector<8x128xf32>
    %293 = math.exp %292 : vector<8x128xf32>
    %cst_74 = arith.constant 1.000000e+00 : f32
    %294 = vector.broadcast %cst_74 : f32 to vector<8x128xf32>
    %295 = arith.addf %294, %293 : vector<8x128xf32>
    %296 = arith.divf %294, %295 : vector<8x128xf32>
    %297 = vector.extract_strided_slice %285 {offsets = [0, 128], sizes = [8, 128], strides = [1, 1]} : vector<8x384xf32> to vector<8x128xf32>
    %298 = vector.extract_strided_slice %288 {offsets = [0, 128], sizes = [8, 128], strides = [1, 1]} : vector<8x384xf32> to vector<8x128xf32>
    %299 = arith.addf %297, %298 : vector<8x128xf32>
    %300 = arith.negf %299 : vector<8x128xf32>
    %301 = math.exp %300 : vector<8x128xf32>
    %cst_75 = arith.constant 1.000000e+00 : f32
    %302 = vector.broadcast %cst_75 : f32 to vector<8x128xf32>
    %303 = arith.addf %302, %301 : vector<8x128xf32>
    %304 = arith.divf %302, %303 : vector<8x128xf32>
    %305 = vector.extract_strided_slice %285 {offsets = [0, 256], sizes = [8, 128], strides = [1, 1]} : vector<8x384xf32> to vector<8x128xf32>
    %306 = vector.extract_strided_slice %288 {offsets = [0, 256], sizes = [8, 128], strides = [1, 1]} : vector<8x384xf32> to vector<8x128xf32>
    %307 = arith.mulf %296, %306 : vector<8x128xf32>
    %308 = arith.addf %305, %307 : vector<8x128xf32>
    %309 = math.tanh %308 : vector<8x128xf32>
    %cst_76 = arith.constant 1.000000e+00 : f32
    %310 = vector.broadcast %cst_76 : f32 to vector<8x128xf32>
    %311 = arith.subf %310, %304 : vector<8x128xf32>
    %312 = arith.mulf %311, %309 : vector<8x128xf32>
    %313 = arith.mulf %304, %276 : vector<8x128xf32>
    %314 = arith.addf %312, %313 : vector<8x128xf32>
    %315 = arith.truncf %314 : vector<8x128xf32> to vector<8x128xbf16>
    %316 = arith.index_cast %c7_i32 : i32 to index
    %c0_77 = arith.constant 0 : index
    %c0_78 = arith.constant 0 : index
    %317 = vector.load %arg7[%316, %c0_77, %c0_78] : memref<8x8x128xbf16, #tpu.memory_space<vmem>>, vector<1x8x128xbf16>
    %318 = vector.shape_cast %317 : vector<1x8x128xbf16> to vector<8x128xbf16>
    %319 = vector.shape_cast %315 : vector<8x128xbf16> to vector<1x8x128xbf16>
    tpu.vector_store %arg7[%316, %c0_77, %c0_78], %319 {strides = array<i32>} : memref<8x8x128xbf16, #tpu.memory_space<vmem>>, vector<1x8x128xbf16>,
    %c8_i32_79 = arith.constant 8 : i32
    %c0_80 = arith.constant 0 : index
    %c0_81 = arith.constant 0 : index
    %320 = vector.load %arg8[%c0_80, %c0_81] : memref<8x128xf32, #tpu.memory_space<vmem>>, vector<8x128xf32>
    tpu.vector_store %arg8[%c0_80, %c0_81], %314 {strides = array<i32>} : memref<8x128xf32, #tpu.memory_space<vmem>>, vector<8x128xf32>,
    return
  }
  func.func @transform_0(%arg0: i32, %arg1: i32) -> (i32, i32, i32) {
    %c0_i32 = arith.constant 0 : i32
    %c0_i32_0 = arith.constant 0 : i32
    return %arg1, %arg0, %c0_i32 : i32, i32, i32
  }
  func.func @transform_1(%arg0: i32, %arg1: i32) -> (i32, i32) {
    %c0_i32 = arith.constant 0 : i32
    %c0_i32_0 = arith.constant 0 : i32
    %c0_i32_1 = arith.constant 0 : i32
    return %c0_i32, %c0_i32_0 : i32, i32
  }
  func.func @transform_2(%arg0: i32, %arg1: i32) -> (i32, i32) {
    %c0_i32 = arith.constant 0 : i32
    %c0_i32_0 = arith.constant 0 : i32
    %c0_i32_1 = arith.constant 0 : i32
    return %c0_i32, %c0_i32_0 : i32, i32
  }
  func.func @transform_3(%arg0: i32, %arg1: i32) -> (i32, i32) {
    %c0_i32 = arith.constant 0 : i32
    %c0_i32_0 = arith.constant 0 : i32
    %c0_i32_1 = arith.constant 0 : i32
    return %c0_i32, %c0_i32_0 : i32, i32
  }
  func.func @transform_4(%arg0: i32, %arg1: i32) -> (i32, i32) {
    %c0_i32 = arith.constant 0 : i32
    %c0_i32_0 = arith.constant 0 : i32
    %c0_i32_1 = arith.constant 0 : i32
    return %c0_i32, %c0_i32_0 : i32, i32
  }
  func.func @transform_5(%arg0: i32, %arg1: i32) -> (i32, i32, i32) {
    %c0_i32 = arith.constant 0 : i32
    %c0_i32_0 = arith.constant 0 : i32
    return %arg1, %arg0, %c0_i32 : i32, i32, i32
  }
}

module attributes {stable_mosaic.version = 11 : i64} {
  func.func @_gru_seq_head_kernel(%arg0: i32, %arg1: i32, %arg2: memref<8x8x128xbf16, #tpu.memory_space<vmem>>, %arg3: memref<128x384xbf16, #tpu.memory_space<vmem>>, %arg4: memref<128x384xbf16, #tpu.memory_space<vmem>>, %arg5: memref<1x384xf32, #tpu.memory_space<vmem>>, %arg6: memref<1x384xf32, #tpu.memory_space<vmem>>, %arg7: memref<128x128xbf16, #tpu.memory_space<vmem>>, %arg8: memref<1x128xf32, #tpu.memory_space<vmem>>, %arg9: memref<8x8x128xf32, #tpu.memory_space<vmem>>, %arg10: memref<8x128xf32, #tpu.memory_space<vmem>>, %arg11: memref<64x384xf32, #tpu.memory_space<vmem>>, %arg12: memref<64x128xf32, #tpu.memory_space<vmem>>) attributes {dimension_semantics = [#tpu.dimension_semantics<parallel>, #tpu.dimension_semantics<arbitrary>], iteration_bounds = array<i64: 1, 1>, scalar_prefetch = 0 : i64, scratch_operands = 3 : i64, tpu.core_type = #tpu.core_type<tc>, window_params = [{transform_indices = @transform_0, window_bounds = array<i64: 8, 8, 128>}, {pipeline_mode = #tpu.pipeline_mode<synchronous>, transform_indices = @transform_1, window_bounds = array<i64: 128, 384>}, {pipeline_mode = #tpu.pipeline_mode<synchronous>, transform_indices = @transform_2, window_bounds = array<i64: 128, 384>}, {pipeline_mode = #tpu.pipeline_mode<synchronous>, transform_indices = @transform_3, window_bounds = array<i64: 1, 384>}, {pipeline_mode = #tpu.pipeline_mode<synchronous>, transform_indices = @transform_4, window_bounds = array<i64: 1, 384>}, {pipeline_mode = #tpu.pipeline_mode<synchronous>, transform_indices = @transform_5, window_bounds = array<i64: 128, 128>}, {pipeline_mode = #tpu.pipeline_mode<synchronous>, transform_indices = @transform_6, window_bounds = array<i64: 1, 128>}, {transform_indices = @transform_7, window_bounds = array<i64: 8, 8, 128>}]} {
    %c0_i32 = arith.constant 0 : i32
    %0 = arith.cmpi eq, %arg1, %c0_i32 : i32
    %1 = arith.extui %0 : i1 to i32
    %c0_i32_0 = arith.constant 0 : i32
    %2 = arith.cmpi ne, %1, %c0_i32_0 : i32
    scf.if %2 {
      %cst_84 = arith.constant 0.000000e+00 : f32
      %306 = vector.broadcast %cst_84 : f32 to vector<8x128xf32>
      %c0_85 = arith.constant 0 : index
      %c0_86 = arith.constant 0 : index
      %307 = vector.load %arg10[%c0_85, %c0_86] : memref<8x128xf32, #tpu.memory_space<vmem>>, vector<8x128xf32>
      tpu.vector_store %arg10[%c0_85, %c0_86], %306 {strides = array<i32>} : memref<8x128xf32, #tpu.memory_space<vmem>>, vector<8x128xf32>,
    } else {
    }
    %c0 = arith.constant 0 : index
    %c0_1 = arith.constant 0 : index
    %c0_2 = arith.constant 0 : index
    %3 = vector.load %arg2[%c0, %c0_1, %c0_2] : memref<8x8x128xbf16, #tpu.memory_space<vmem>>, vector<8x8x128xbf16>
    %4 = vector.shape_cast %3 : vector<8x8x128xbf16> to vector<64x128xbf16>
    %c0_3 = arith.constant 0 : index
    %c0_4 = arith.constant 0 : index
    %5 = vector.load %arg3[%c0_3, %c0_4] : memref<128x384xbf16, #tpu.memory_space<vmem>>, vector<128x384xbf16>
    %cst = arith.constant dense<0.000000e+00> : vector<64x384xf32>
    %6 = tpu.matmul %4, %5, %cst {dimension_numbers = #tpu.dot_dimension_numbers<[1], [0], [0], [1], [0, 0, 1, 1], [], []>} : vector<64x128xbf16>, vector<128x384xbf16>, vector<64x384xf32> -> vector<64x384xf32>
    %c0_5 = arith.constant 0 : index
    %c0_6 = arith.constant 0 : index
    %7 = vector.load %arg5[%c0_5, %c0_6] : memref<1x384xf32, #tpu.memory_space<vmem>>, vector<1x384xf32>
    %8 = vector.broadcast %7 : vector<1x384xf32> to vector<64x384xf32>
    %9 = arith.addf %6, %8 : vector<64x384xf32>
    %c0_7 = arith.constant 0 : index
    %c0_8 = arith.constant 0 : index
    %10 = vector.load %arg11[%c0_7, %c0_8] : memref<64x384xf32, #tpu.memory_space<vmem>>, vector<64x384xf32>
    tpu.vector_store %arg11[%c0_7, %c0_8], %9 {strides = array<i32>} : memref<64x384xf32, #tpu.memory_space<vmem>>, vector<64x384xf32>,
    %c0_9 = arith.constant 0 : index
    %c0_10 = arith.constant 0 : index
    %11 = vector.load %arg4[%c0_9, %c0_10] : memref<128x384xbf16, #tpu.memory_space<vmem>>, vector<128x384xbf16>
    %c0_11 = arith.constant 0 : index
    %c0_12 = arith.constant 0 : index
    %12 = vector.load %arg6[%c0_11, %c0_12] : memref<1x384xf32, #tpu.memory_space<vmem>>, vector<1x384xf32>
    %13 = vector.shape_cast %12 : vector<1x384xf32> to vector<1x384xf32>
    %14 = vector.broadcast %13 : vector<1x384xf32> to vector<8x384xf32>
    %c0_13 = arith.constant 0 : index
    %c0_14 = arith.constant 0 : index
    %15 = vector.load %arg10[%c0_13, %c0_14] : memref<8x128xf32, #tpu.memory_space<vmem>>, vector<8x128xf32>
    %c0_i32_15 = arith.constant 0 : i32
    %c8_i32 = arith.constant 8 : i32
    %16 = arith.muli %c0_i32_15, %c8_i32 : i32
    %17 = tpu.assume_multiple %16, 8 : i32
    %18 = arith.index_cast %17 : i32 to index
    %c0_16 = arith.constant 0 : index
    %19 = vector.load %arg11[%18, %c0_16] : memref<64x384xf32, #tpu.memory_space<vmem>>, vector<8x384xf32>
    %20 = arith.truncf %15 : vector<8x128xf32> to vector<8x128xbf16>
    %cst_17 = arith.constant dense<0.000000e+00> : vector<8x384xf32>
    %21 = tpu.matmul %20, %11, %cst_17 {dimension_numbers = #tpu.dot_dimension_numbers<[1], [0], [0], [1], [0, 0, 1, 1], [], []>} : vector<8x128xbf16>, vector<128x384xbf16>, vector<8x384xf32> -> vector<8x384xf32>
    %22 = arith.addf %21, %14 : vector<8x384xf32>
    %23 = vector.extract_strided_slice %19 {offsets = [0, 0], sizes = [8, 128], strides = [1, 1]} : vector<8x384xf32> to vector<8x128xf32>
    %24 = vector.extract_strided_slice %22 {offsets = [0, 0], sizes = [8, 128], strides = [1, 1]} : vector<8x384xf32> to vector<8x128xf32>
    %25 = arith.addf %23, %24 : vector<8x128xf32>
    %26 = arith.negf %25 : vector<8x128xf32>
    %27 = math.exp %26 : vector<8x128xf32>
    %cst_18 = arith.constant 1.000000e+00 : f32
    %28 = vector.broadcast %cst_18 : f32 to vector<8x128xf32>
    %29 = arith.addf %28, %27 : vector<8x128xf32>
    %30 = arith.divf %28, %29 : vector<8x128xf32>
    %31 = vector.extract_strided_slice %19 {offsets = [0, 128], sizes = [8, 128], strides = [1, 1]} : vector<8x384xf32> to vector<8x128xf32>
    %32 = vector.extract_strided_slice %22 {offsets = [0, 128], sizes = [8, 128], strides = [1, 1]} : vector<8x384xf32> to vector<8x128xf32>
    %33 = arith.addf %31, %32 : vector<8x128xf32>
    %34 = arith.negf %33 : vector<8x128xf32>
    %35 = math.exp %34 : vector<8x128xf32>
    %cst_19 = arith.constant 1.000000e+00 : f32
    %36 = vector.broadcast %cst_19 : f32 to vector<8x128xf32>
    %37 = arith.addf %36, %35 : vector<8x128xf32>
    %38 = arith.divf %36, %37 : vector<8x128xf32>
    %39 = vector.extract_strided_slice %19 {offsets = [0, 256], sizes = [8, 128], strides = [1, 1]} : vector<8x384xf32> to vector<8x128xf32>
    %40 = vector.extract_strided_slice %22 {offsets = [0, 256], sizes = [8, 128], strides = [1, 1]} : vector<8x384xf32> to vector<8x128xf32>
    %41 = arith.mulf %30, %40 : vector<8x128xf32>
    %42 = arith.addf %39, %41 : vector<8x128xf32>
    %43 = math.tanh %42 : vector<8x128xf32>
    %cst_20 = arith.constant 1.000000e+00 : f32
    %44 = vector.broadcast %cst_20 : f32 to vector<8x128xf32>
    %45 = arith.subf %44, %38 : vector<8x128xf32>
    %46 = arith.mulf %45, %43 : vector<8x128xf32>
    %47 = arith.mulf %38, %15 : vector<8x128xf32>
    %48 = arith.addf %46, %47 : vector<8x128xf32>
    %49 = arith.index_cast %17 : i32 to index
    %c0_21 = arith.constant 0 : index
    %50 = vector.load %arg12[%49, %c0_21] : memref<64x128xf32, #tpu.memory_space<vmem>>, vector<8x128xf32>
    tpu.vector_store %arg12[%49, %c0_21], %48 {strides = array<i32>} : memref<64x128xf32, #tpu.memory_space<vmem>>, vector<8x128xf32>,
    %c1_i32 = arith.constant 1 : i32
    %c8_i32_22 = arith.constant 8 : i32
    %51 = arith.muli %c1_i32, %c8_i32_22 : i32
    %52 = tpu.assume_multiple %51, 8 : i32
    %53 = arith.index_cast %52 : i32 to index
    %c0_23 = arith.constant 0 : index
    %54 = vector.load %arg11[%53, %c0_23] : memref<64x384xf32, #tpu.memory_space<vmem>>, vector<8x384xf32>
    %55 = arith.truncf %48 : vector<8x128xf32> to vector<8x128xbf16>
    %cst_24 = arith.constant dense<0.000000e+00> : vector<8x384xf32>
    %56 = tpu.matmul %55, %11, %cst_24 {dimension_numbers = #tpu.dot_dimension_numbers<[1], [0], [0], [1], [0, 0, 1, 1], [], []>} : vector<8x128xbf16>, vector<128x384xbf16>, vector<8x384xf32> -> vector<8x384xf32>
    %57 = arith.addf %56, %14 : vector<8x384xf32>
    %58 = vector.extract_strided_slice %54 {offsets = [0, 0], sizes = [8, 128], strides = [1, 1]} : vector<8x384xf32> to vector<8x128xf32>
    %59 = vector.extract_strided_slice %57 {offsets = [0, 0], sizes = [8, 128], strides = [1, 1]} : vector<8x384xf32> to vector<8x128xf32>
    %60 = arith.addf %58, %59 : vector<8x128xf32>
    %61 = arith.negf %60 : vector<8x128xf32>
    %62 = math.exp %61 : vector<8x128xf32>
    %cst_25 = arith.constant 1.000000e+00 : f32
    %63 = vector.broadcast %cst_25 : f32 to vector<8x128xf32>
    %64 = arith.addf %63, %62 : vector<8x128xf32>
    %65 = arith.divf %63, %64 : vector<8x128xf32>
    %66 = vector.extract_strided_slice %54 {offsets = [0, 128], sizes = [8, 128], strides = [1, 1]} : vector<8x384xf32> to vector<8x128xf32>
    %67 = vector.extract_strided_slice %57 {offsets = [0, 128], sizes = [8, 128], strides = [1, 1]} : vector<8x384xf32> to vector<8x128xf32>
    %68 = arith.addf %66, %67 : vector<8x128xf32>
    %69 = arith.negf %68 : vector<8x128xf32>
    %70 = math.exp %69 : vector<8x128xf32>
    %cst_26 = arith.constant 1.000000e+00 : f32
    %71 = vector.broadcast %cst_26 : f32 to vector<8x128xf32>
    %72 = arith.addf %71, %70 : vector<8x128xf32>
    %73 = arith.divf %71, %72 : vector<8x128xf32>
    %74 = vector.extract_strided_slice %54 {offsets = [0, 256], sizes = [8, 128], strides = [1, 1]} : vector<8x384xf32> to vector<8x128xf32>
    %75 = vector.extract_strided_slice %57 {offsets = [0, 256], sizes = [8, 128], strides = [1, 1]} : vector<8x384xf32> to vector<8x128xf32>
    %76 = arith.mulf %65, %75 : vector<8x128xf32>
    %77 = arith.addf %74, %76 : vector<8x128xf32>
    %78 = math.tanh %77 : vector<8x128xf32>
    %cst_27 = arith.constant 1.000000e+00 : f32
    %79 = vector.broadcast %cst_27 : f32 to vector<8x128xf32>
    %80 = arith.subf %79, %73 : vector<8x128xf32>
    %81 = arith.mulf %80, %78 : vector<8x128xf32>
    %82 = arith.mulf %73, %48 : vector<8x128xf32>
    %83 = arith.addf %81, %82 : vector<8x128xf32>
    %84 = arith.index_cast %52 : i32 to index
    %c0_28 = arith.constant 0 : index
    %85 = vector.load %arg12[%84, %c0_28] : memref<64x128xf32, #tpu.memory_space<vmem>>, vector<8x128xf32>
    tpu.vector_store %arg12[%84, %c0_28], %83 {strides = array<i32>} : memref<64x128xf32, #tpu.memory_space<vmem>>, vector<8x128xf32>,
    %c2_i32 = arith.constant 2 : i32
    %c8_i32_29 = arith.constant 8 : i32
    %86 = arith.muli %c2_i32, %c8_i32_29 : i32
    %87 = tpu.assume_multiple %86, 8 : i32
    %88 = arith.index_cast %87 : i32 to index
    %c0_30 = arith.constant 0 : index
    %89 = vector.load %arg11[%88, %c0_30] : memref<64x384xf32, #tpu.memory_space<vmem>>, vector<8x384xf32>
    %90 = arith.truncf %83 : vector<8x128xf32> to vector<8x128xbf16>
    %cst_31 = arith.constant dense<0.000000e+00> : vector<8x384xf32>
    %91 = tpu.matmul %90, %11, %cst_31 {dimension_numbers = #tpu.dot_dimension_numbers<[1], [0], [0], [1], [0, 0, 1, 1], [], []>} : vector<8x128xbf16>, vector<128x384xbf16>, vector<8x384xf32> -> vector<8x384xf32>
    %92 = arith.addf %91, %14 : vector<8x384xf32>
    %93 = vector.extract_strided_slice %89 {offsets = [0, 0], sizes = [8, 128], strides = [1, 1]} : vector<8x384xf32> to vector<8x128xf32>
    %94 = vector.extract_strided_slice %92 {offsets = [0, 0], sizes = [8, 128], strides = [1, 1]} : vector<8x384xf32> to vector<8x128xf32>
    %95 = arith.addf %93, %94 : vector<8x128xf32>
    %96 = arith.negf %95 : vector<8x128xf32>
    %97 = math.exp %96 : vector<8x128xf32>
    %cst_32 = arith.constant 1.000000e+00 : f32
    %98 = vector.broadcast %cst_32 : f32 to vector<8x128xf32>
    %99 = arith.addf %98, %97 : vector<8x128xf32>
    %100 = arith.divf %98, %99 : vector<8x128xf32>
    %101 = vector.extract_strided_slice %89 {offsets = [0, 128], sizes = [8, 128], strides = [1, 1]} : vector<8x384xf32> to vector<8x128xf32>
    %102 = vector.extract_strided_slice %92 {offsets = [0, 128], sizes = [8, 128], strides = [1, 1]} : vector<8x384xf32> to vector<8x128xf32>
    %103 = arith.addf %101, %102 : vector<8x128xf32>
    %104 = arith.negf %103 : vector<8x128xf32>
    %105 = math.exp %104 : vector<8x128xf32>
    %cst_33 = arith.constant 1.000000e+00 : f32
    %106 = vector.broadcast %cst_33 : f32 to vector<8x128xf32>
    %107 = arith.addf %106, %105 : vector<8x128xf32>
    %108 = arith.divf %106, %107 : vector<8x128xf32>
    %109 = vector.extract_strided_slice %89 {offsets = [0, 256], sizes = [8, 128], strides = [1, 1]} : vector<8x384xf32> to vector<8x128xf32>
    %110 = vector.extract_strided_slice %92 {offsets = [0, 256], sizes = [8, 128], strides = [1, 1]} : vector<8x384xf32> to vector<8x128xf32>
    %111 = arith.mulf %100, %110 : vector<8x128xf32>
    %112 = arith.addf %109, %111 : vector<8x128xf32>
    %113 = math.tanh %112 : vector<8x128xf32>
    %cst_34 = arith.constant 1.000000e+00 : f32
    %114 = vector.broadcast %cst_34 : f32 to vector<8x128xf32>
    %115 = arith.subf %114, %108 : vector<8x128xf32>
    %116 = arith.mulf %115, %113 : vector<8x128xf32>
    %117 = arith.mulf %108, %83 : vector<8x128xf32>
    %118 = arith.addf %116, %117 : vector<8x128xf32>
    %119 = arith.index_cast %87 : i32 to index
    %c0_35 = arith.constant 0 : index
    %120 = vector.load %arg12[%119, %c0_35] : memref<64x128xf32, #tpu.memory_space<vmem>>, vector<8x128xf32>
    tpu.vector_store %arg12[%119, %c0_35], %118 {strides = array<i32>} : memref<64x128xf32, #tpu.memory_space<vmem>>, vector<8x128xf32>,
    %c3_i32 = arith.constant 3 : i32
    %c8_i32_36 = arith.constant 8 : i32
    %121 = arith.muli %c3_i32, %c8_i32_36 : i32
    %122 = tpu.assume_multiple %121, 8 : i32
    %123 = arith.index_cast %122 : i32 to index
    %c0_37 = arith.constant 0 : index
    %124 = vector.load %arg11[%123, %c0_37] : memref<64x384xf32, #tpu.memory_space<vmem>>, vector<8x384xf32>
    %125 = arith.truncf %118 : vector<8x128xf32> to vector<8x128xbf16>
    %cst_38 = arith.constant dense<0.000000e+00> : vector<8x384xf32>
    %126 = tpu.matmul %125, %11, %cst_38 {dimension_numbers = #tpu.dot_dimension_numbers<[1], [0], [0], [1], [0, 0, 1, 1], [], []>} : vector<8x128xbf16>, vector<128x384xbf16>, vector<8x384xf32> -> vector<8x384xf32>
    %127 = arith.addf %126, %14 : vector<8x384xf32>
    %128 = vector.extract_strided_slice %124 {offsets = [0, 0], sizes = [8, 128], strides = [1, 1]} : vector<8x384xf32> to vector<8x128xf32>
    %129 = vector.extract_strided_slice %127 {offsets = [0, 0], sizes = [8, 128], strides = [1, 1]} : vector<8x384xf32> to vector<8x128xf32>
    %130 = arith.addf %128, %129 : vector<8x128xf32>
    %131 = arith.negf %130 : vector<8x128xf32>
    %132 = math.exp %131 : vector<8x128xf32>
    %cst_39 = arith.constant 1.000000e+00 : f32
    %133 = vector.broadcast %cst_39 : f32 to vector<8x128xf32>
    %134 = arith.addf %133, %132 : vector<8x128xf32>
    %135 = arith.divf %133, %134 : vector<8x128xf32>
    %136 = vector.extract_strided_slice %124 {offsets = [0, 128], sizes = [8, 128], strides = [1, 1]} : vector<8x384xf32> to vector<8x128xf32>
    %137 = vector.extract_strided_slice %127 {offsets = [0, 128], sizes = [8, 128], strides = [1, 1]} : vector<8x384xf32> to vector<8x128xf32>
    %138 = arith.addf %136, %137 : vector<8x128xf32>
    %139 = arith.negf %138 : vector<8x128xf32>
    %140 = math.exp %139 : vector<8x128xf32>
    %cst_40 = arith.constant 1.000000e+00 : f32
    %141 = vector.broadcast %cst_40 : f32 to vector<8x128xf32>
    %142 = arith.addf %141, %140 : vector<8x128xf32>
    %143 = arith.divf %141, %142 : vector<8x128xf32>
    %144 = vector.extract_strided_slice %124 {offsets = [0, 256], sizes = [8, 128], strides = [1, 1]} : vector<8x384xf32> to vector<8x128xf32>
    %145 = vector.extract_strided_slice %127 {offsets = [0, 256], sizes = [8, 128], strides = [1, 1]} : vector<8x384xf32> to vector<8x128xf32>
    %146 = arith.mulf %135, %145 : vector<8x128xf32>
    %147 = arith.addf %144, %146 : vector<8x128xf32>
    %148 = math.tanh %147 : vector<8x128xf32>
    %cst_41 = arith.constant 1.000000e+00 : f32
    %149 = vector.broadcast %cst_41 : f32 to vector<8x128xf32>
    %150 = arith.subf %149, %143 : vector<8x128xf32>
    %151 = arith.mulf %150, %148 : vector<8x128xf32>
    %152 = arith.mulf %143, %118 : vector<8x128xf32>
    %153 = arith.addf %151, %152 : vector<8x128xf32>
    %154 = arith.index_cast %122 : i32 to index
    %c0_42 = arith.constant 0 : index
    %155 = vector.load %arg12[%154, %c0_42] : memref<64x128xf32, #tpu.memory_space<vmem>>, vector<8x128xf32>
    tpu.vector_store %arg12[%154, %c0_42], %153 {strides = array<i32>} : memref<64x128xf32, #tpu.memory_space<vmem>>, vector<8x128xf32>,
    %c4_i32 = arith.constant 4 : i32
    %c8_i32_43 = arith.constant 8 : i32
    %156 = arith.muli %c4_i32, %c8_i32_43 : i32
    %157 = tpu.assume_multiple %156, 8 : i32
    %158 = arith.index_cast %157 : i32 to index
    %c0_44 = arith.constant 0 : index
    %159 = vector.load %arg11[%158, %c0_44] : memref<64x384xf32, #tpu.memory_space<vmem>>, vector<8x384xf32>
    %160 = arith.truncf %153 : vector<8x128xf32> to vector<8x128xbf16>
    %cst_45 = arith.constant dense<0.000000e+00> : vector<8x384xf32>
    %161 = tpu.matmul %160, %11, %cst_45 {dimension_numbers = #tpu.dot_dimension_numbers<[1], [0], [0], [1], [0, 0, 1, 1], [], []>} : vector<8x128xbf16>, vector<128x384xbf16>, vector<8x384xf32> -> vector<8x384xf32>
    %162 = arith.addf %161, %14 : vector<8x384xf32>
    %163 = vector.extract_strided_slice %159 {offsets = [0, 0], sizes = [8, 128], strides = [1, 1]} : vector<8x384xf32> to vector<8x128xf32>
    %164 = vector.extract_strided_slice %162 {offsets = [0, 0], sizes = [8, 128], strides = [1, 1]} : vector<8x384xf32> to vector<8x128xf32>
    %165 = arith.addf %163, %164 : vector<8x128xf32>
    %166 = arith.negf %165 : vector<8x128xf32>
    %167 = math.exp %166 : vector<8x128xf32>
    %cst_46 = arith.constant 1.000000e+00 : f32
    %168 = vector.broadcast %cst_46 : f32 to vector<8x128xf32>
    %169 = arith.addf %168, %167 : vector<8x128xf32>
    %170 = arith.divf %168, %169 : vector<8x128xf32>
    %171 = vector.extract_strided_slice %159 {offsets = [0, 128], sizes = [8, 128], strides = [1, 1]} : vector<8x384xf32> to vector<8x128xf32>
    %172 = vector.extract_strided_slice %162 {offsets = [0, 128], sizes = [8, 128], strides = [1, 1]} : vector<8x384xf32> to vector<8x128xf32>
    %173 = arith.addf %171, %172 : vector<8x128xf32>
    %174 = arith.negf %173 : vector<8x128xf32>
    %175 = math.exp %174 : vector<8x128xf32>
    %cst_47 = arith.constant 1.000000e+00 : f32
    %176 = vector.broadcast %cst_47 : f32 to vector<8x128xf32>
    %177 = arith.addf %176, %175 : vector<8x128xf32>
    %178 = arith.divf %176, %177 : vector<8x128xf32>
    %179 = vector.extract_strided_slice %159 {offsets = [0, 256], sizes = [8, 128], strides = [1, 1]} : vector<8x384xf32> to vector<8x128xf32>
    %180 = vector.extract_strided_slice %162 {offsets = [0, 256], sizes = [8, 128], strides = [1, 1]} : vector<8x384xf32> to vector<8x128xf32>
    %181 = arith.mulf %170, %180 : vector<8x128xf32>
    %182 = arith.addf %179, %181 : vector<8x128xf32>
    %183 = math.tanh %182 : vector<8x128xf32>
    %cst_48 = arith.constant 1.000000e+00 : f32
    %184 = vector.broadcast %cst_48 : f32 to vector<8x128xf32>
    %185 = arith.subf %184, %178 : vector<8x128xf32>
    %186 = arith.mulf %185, %183 : vector<8x128xf32>
    %187 = arith.mulf %178, %153 : vector<8x128xf32>
    %188 = arith.addf %186, %187 : vector<8x128xf32>
    %189 = arith.index_cast %157 : i32 to index
    %c0_49 = arith.constant 0 : index
    %190 = vector.load %arg12[%189, %c0_49] : memref<64x128xf32, #tpu.memory_space<vmem>>, vector<8x128xf32>
    tpu.vector_store %arg12[%189, %c0_49], %188 {strides = array<i32>} : memref<64x128xf32, #tpu.memory_space<vmem>>, vector<8x128xf32>,
    %c5_i32 = arith.constant 5 : i32
    %c8_i32_50 = arith.constant 8 : i32
    %191 = arith.muli %c5_i32, %c8_i32_50 : i32
    %192 = tpu.assume_multiple %191, 8 : i32
    %193 = arith.index_cast %192 : i32 to index
    %c0_51 = arith.constant 0 : index
    %194 = vector.load %arg11[%193, %c0_51] : memref<64x384xf32, #tpu.memory_space<vmem>>, vector<8x384xf32>
    %195 = arith.truncf %188 : vector<8x128xf32> to vector<8x128xbf16>
    %cst_52 = arith.constant dense<0.000000e+00> : vector<8x384xf32>
    %196 = tpu.matmul %195, %11, %cst_52 {dimension_numbers = #tpu.dot_dimension_numbers<[1], [0], [0], [1], [0, 0, 1, 1], [], []>} : vector<8x128xbf16>, vector<128x384xbf16>, vector<8x384xf32> -> vector<8x384xf32>
    %197 = arith.addf %196, %14 : vector<8x384xf32>
    %198 = vector.extract_strided_slice %194 {offsets = [0, 0], sizes = [8, 128], strides = [1, 1]} : vector<8x384xf32> to vector<8x128xf32>
    %199 = vector.extract_strided_slice %197 {offsets = [0, 0], sizes = [8, 128], strides = [1, 1]} : vector<8x384xf32> to vector<8x128xf32>
    %200 = arith.addf %198, %199 : vector<8x128xf32>
    %201 = arith.negf %200 : vector<8x128xf32>
    %202 = math.exp %201 : vector<8x128xf32>
    %cst_53 = arith.constant 1.000000e+00 : f32
    %203 = vector.broadcast %cst_53 : f32 to vector<8x128xf32>
    %204 = arith.addf %203, %202 : vector<8x128xf32>
    %205 = arith.divf %203, %204 : vector<8x128xf32>
    %206 = vector.extract_strided_slice %194 {offsets = [0, 128], sizes = [8, 128], strides = [1, 1]} : vector<8x384xf32> to vector<8x128xf32>
    %207 = vector.extract_strided_slice %197 {offsets = [0, 128], sizes = [8, 128], strides = [1, 1]} : vector<8x384xf32> to vector<8x128xf32>
    %208 = arith.addf %206, %207 : vector<8x128xf32>
    %209 = arith.negf %208 : vector<8x128xf32>
    %210 = math.exp %209 : vector<8x128xf32>
    %cst_54 = arith.constant 1.000000e+00 : f32
    %211 = vector.broadcast %cst_54 : f32 to vector<8x128xf32>
    %212 = arith.addf %211, %210 : vector<8x128xf32>
    %213 = arith.divf %211, %212 : vector<8x128xf32>
    %214 = vector.extract_strided_slice %194 {offsets = [0, 256], sizes = [8, 128], strides = [1, 1]} : vector<8x384xf32> to vector<8x128xf32>
    %215 = vector.extract_strided_slice %197 {offsets = [0, 256], sizes = [8, 128], strides = [1, 1]} : vector<8x384xf32> to vector<8x128xf32>
    %216 = arith.mulf %205, %215 : vector<8x128xf32>
    %217 = arith.addf %214, %216 : vector<8x128xf32>
    %218 = math.tanh %217 : vector<8x128xf32>
    %cst_55 = arith.constant 1.000000e+00 : f32
    %219 = vector.broadcast %cst_55 : f32 to vector<8x128xf32>
    %220 = arith.subf %219, %213 : vector<8x128xf32>
    %221 = arith.mulf %220, %218 : vector<8x128xf32>
    %222 = arith.mulf %213, %188 : vector<8x128xf32>
    %223 = arith.addf %221, %222 : vector<8x128xf32>
    %224 = arith.index_cast %192 : i32 to index
    %c0_56 = arith.constant 0 : index
    %225 = vector.load %arg12[%224, %c0_56] : memref<64x128xf32, #tpu.memory_space<vmem>>, vector<8x128xf32>
    tpu.vector_store %arg12[%224, %c0_56], %223 {strides = array<i32>} : memref<64x128xf32, #tpu.memory_space<vmem>>, vector<8x128xf32>,
    %c6_i32 = arith.constant 6 : i32
    %c8_i32_57 = arith.constant 8 : i32
    %226 = arith.muli %c6_i32, %c8_i32_57 : i32
    %227 = tpu.assume_multiple %226, 8 : i32
    %228 = arith.index_cast %227 : i32 to index
    %c0_58 = arith.constant 0 : index
    %229 = vector.load %arg11[%228, %c0_58] : memref<64x384xf32, #tpu.memory_space<vmem>>, vector<8x384xf32>
    %230 = arith.truncf %223 : vector<8x128xf32> to vector<8x128xbf16>
    %cst_59 = arith.constant dense<0.000000e+00> : vector<8x384xf32>
    %231 = tpu.matmul %230, %11, %cst_59 {dimension_numbers = #tpu.dot_dimension_numbers<[1], [0], [0], [1], [0, 0, 1, 1], [], []>} : vector<8x128xbf16>, vector<128x384xbf16>, vector<8x384xf32> -> vector<8x384xf32>
    %232 = arith.addf %231, %14 : vector<8x384xf32>
    %233 = vector.extract_strided_slice %229 {offsets = [0, 0], sizes = [8, 128], strides = [1, 1]} : vector<8x384xf32> to vector<8x128xf32>
    %234 = vector.extract_strided_slice %232 {offsets = [0, 0], sizes = [8, 128], strides = [1, 1]} : vector<8x384xf32> to vector<8x128xf32>
    %235 = arith.addf %233, %234 : vector<8x128xf32>
    %236 = arith.negf %235 : vector<8x128xf32>
    %237 = math.exp %236 : vector<8x128xf32>
    %cst_60 = arith.constant 1.000000e+00 : f32
    %238 = vector.broadcast %cst_60 : f32 to vector<8x128xf32>
    %239 = arith.addf %238, %237 : vector<8x128xf32>
    %240 = arith.divf %238, %239 : vector<8x128xf32>
    %241 = vector.extract_strided_slice %229 {offsets = [0, 128], sizes = [8, 128], strides = [1, 1]} : vector<8x384xf32> to vector<8x128xf32>
    %242 = vector.extract_strided_slice %232 {offsets = [0, 128], sizes = [8, 128], strides = [1, 1]} : vector<8x384xf32> to vector<8x128xf32>
    %243 = arith.addf %241, %242 : vector<8x128xf32>
    %244 = arith.negf %243 : vector<8x128xf32>
    %245 = math.exp %244 : vector<8x128xf32>
    %cst_61 = arith.constant 1.000000e+00 : f32
    %246 = vector.broadcast %cst_61 : f32 to vector<8x128xf32>
    %247 = arith.addf %246, %245 : vector<8x128xf32>
    %248 = arith.divf %246, %247 : vector<8x128xf32>
    %249 = vector.extract_strided_slice %229 {offsets = [0, 256], sizes = [8, 128], strides = [1, 1]} : vector<8x384xf32> to vector<8x128xf32>
    %250 = vector.extract_strided_slice %232 {offsets = [0, 256], sizes = [8, 128], strides = [1, 1]} : vector<8x384xf32> to vector<8x128xf32>
    %251 = arith.mulf %240, %250 : vector<8x128xf32>
    %252 = arith.addf %249, %251 : vector<8x128xf32>
    %253 = math.tanh %252 : vector<8x128xf32>
    %cst_62 = arith.constant 1.000000e+00 : f32
    %254 = vector.broadcast %cst_62 : f32 to vector<8x128xf32>
    %255 = arith.subf %254, %248 : vector<8x128xf32>
    %256 = arith.mulf %255, %253 : vector<8x128xf32>
    %257 = arith.mulf %248, %223 : vector<8x128xf32>
    %258 = arith.addf %256, %257 : vector<8x128xf32>
    %259 = arith.index_cast %227 : i32 to index
    %c0_63 = arith.constant 0 : index
    %260 = vector.load %arg12[%259, %c0_63] : memref<64x128xf32, #tpu.memory_space<vmem>>, vector<8x128xf32>
    tpu.vector_store %arg12[%259, %c0_63], %258 {strides = array<i32>} : memref<64x128xf32, #tpu.memory_space<vmem>>, vector<8x128xf32>,
    %c7_i32 = arith.constant 7 : i32
    %c8_i32_64 = arith.constant 8 : i32
    %261 = arith.muli %c7_i32, %c8_i32_64 : i32
    %262 = tpu.assume_multiple %261, 8 : i32
    %263 = arith.index_cast %262 : i32 to index
    %c0_65 = arith.constant 0 : index
    %264 = vector.load %arg11[%263, %c0_65] : memref<64x384xf32, #tpu.memory_space<vmem>>, vector<8x384xf32>
    %265 = arith.truncf %258 : vector<8x128xf32> to vector<8x128xbf16>
    %cst_66 = arith.constant dense<0.000000e+00> : vector<8x384xf32>
    %266 = tpu.matmul %265, %11, %cst_66 {dimension_numbers = #tpu.dot_dimension_numbers<[1], [0], [0], [1], [0, 0, 1, 1], [], []>} : vector<8x128xbf16>, vector<128x384xbf16>, vector<8x384xf32> -> vector<8x384xf32>
    %267 = arith.addf %266, %14 : vector<8x384xf32>
    %268 = vector.extract_strided_slice %264 {offsets = [0, 0], sizes = [8, 128], strides = [1, 1]} : vector<8x384xf32> to vector<8x128xf32>
    %269 = vector.extract_strided_slice %267 {offsets = [0, 0], sizes = [8, 128], strides = [1, 1]} : vector<8x384xf32> to vector<8x128xf32>
    %270 = arith.addf %268, %269 : vector<8x128xf32>
    %271 = arith.negf %270 : vector<8x128xf32>
    %272 = math.exp %271 : vector<8x128xf32>
    %cst_67 = arith.constant 1.000000e+00 : f32
    %273 = vector.broadcast %cst_67 : f32 to vector<8x128xf32>
    %274 = arith.addf %273, %272 : vector<8x128xf32>
    %275 = arith.divf %273, %274 : vector<8x128xf32>
    %276 = vector.extract_strided_slice %264 {offsets = [0, 128], sizes = [8, 128], strides = [1, 1]} : vector<8x384xf32> to vector<8x128xf32>
    %277 = vector.extract_strided_slice %267 {offsets = [0, 128], sizes = [8, 128], strides = [1, 1]} : vector<8x384xf32> to vector<8x128xf32>
    %278 = arith.addf %276, %277 : vector<8x128xf32>
    %279 = arith.negf %278 : vector<8x128xf32>
    %280 = math.exp %279 : vector<8x128xf32>
    %cst_68 = arith.constant 1.000000e+00 : f32
    %281 = vector.broadcast %cst_68 : f32 to vector<8x128xf32>
    %282 = arith.addf %281, %280 : vector<8x128xf32>
    %283 = arith.divf %281, %282 : vector<8x128xf32>
    %284 = vector.extract_strided_slice %264 {offsets = [0, 256], sizes = [8, 128], strides = [1, 1]} : vector<8x384xf32> to vector<8x128xf32>
    %285 = vector.extract_strided_slice %267 {offsets = [0, 256], sizes = [8, 128], strides = [1, 1]} : vector<8x384xf32> to vector<8x128xf32>
    %286 = arith.mulf %275, %285 : vector<8x128xf32>
    %287 = arith.addf %284, %286 : vector<8x128xf32>
    %288 = math.tanh %287 : vector<8x128xf32>
    %cst_69 = arith.constant 1.000000e+00 : f32
    %289 = vector.broadcast %cst_69 : f32 to vector<8x128xf32>
    %290 = arith.subf %289, %283 : vector<8x128xf32>
    %291 = arith.mulf %290, %288 : vector<8x128xf32>
    %292 = arith.mulf %283, %258 : vector<8x128xf32>
    %293 = arith.addf %291, %292 : vector<8x128xf32>
    %294 = arith.index_cast %262 : i32 to index
    %c0_70 = arith.constant 0 : index
    %295 = vector.load %arg12[%294, %c0_70] : memref<64x128xf32, #tpu.memory_space<vmem>>, vector<8x128xf32>
    tpu.vector_store %arg12[%294, %c0_70], %293 {strides = array<i32>} : memref<64x128xf32, #tpu.memory_space<vmem>>, vector<8x128xf32>,
    %c8_i32_71 = arith.constant 8 : i32
    %c0_72 = arith.constant 0 : index
    %c0_73 = arith.constant 0 : index
    %296 = vector.load %arg10[%c0_72, %c0_73] : memref<8x128xf32, #tpu.memory_space<vmem>>, vector<8x128xf32>
    tpu.vector_store %arg10[%c0_72, %c0_73], %293 {strides = array<i32>} : memref<8x128xf32, #tpu.memory_space<vmem>>, vector<8x128xf32>,
    %c0_74 = arith.constant 0 : index
    %c0_75 = arith.constant 0 : index
    %297 = vector.load %arg12[%c0_74, %c0_75] : memref<64x128xf32, #tpu.memory_space<vmem>>, vector<64x128xf32>
    %298 = arith.truncf %297 : vector<64x128xf32> to vector<64x128xbf16>
    %c0_76 = arith.constant 0 : index
    %c0_77 = arith.constant 0 : index
    %299 = vector.load %arg7[%c0_76, %c0_77] : memref<128x128xbf16, #tpu.memory_space<vmem>>, vector<128x128xbf16>
    %cst_78 = arith.constant dense<0.000000e+00> : vector<64x128xf32>
    %300 = tpu.matmul %298, %299, %cst_78 {dimension_numbers = #tpu.dot_dimension_numbers<[1], [0], [0], [1], [0, 0, 1, 1], [], []>} : vector<64x128xbf16>, vector<128x128xbf16>, vector<64x128xf32> -> vector<64x128xf32>
    %c0_79 = arith.constant 0 : index
    %c0_80 = arith.constant 0 : index
    %301 = vector.load %arg8[%c0_79, %c0_80] : memref<1x128xf32, #tpu.memory_space<vmem>>, vector<1x128xf32>
    %302 = vector.broadcast %301 : vector<1x128xf32> to vector<64x128xf32>
    %303 = arith.addf %300, %302 : vector<64x128xf32>
    %304 = vector.shape_cast %303 : vector<64x128xf32> to vector<8x8x128xf32>
    %c0_81 = arith.constant 0 : index
    %c0_82 = arith.constant 0 : index
    %c0_83 = arith.constant 0 : index
    %305 = vector.load %arg9[%c0_81, %c0_82, %c0_83] : memref<8x8x128xf32, #tpu.memory_space<vmem>>, vector<8x8x128xf32>
    tpu.vector_store %arg9[%c0_81, %c0_82, %c0_83], %304 {strides = array<i32>} : memref<8x8x128xf32, #tpu.memory_space<vmem>>, vector<8x8x128xf32>,
    return
  }
  func.func @transform_0(%arg0: i32, %arg1: i32) -> (i32, i32, i32) {
    %c0_i32 = arith.constant 0 : i32
    %c0_i32_0 = arith.constant 0 : i32
    return %arg1, %arg0, %c0_i32 : i32, i32, i32
  }
  func.func @transform_1(%arg0: i32, %arg1: i32) -> (i32, i32) {
    %c0_i32 = arith.constant 0 : i32
    %c0_i32_0 = arith.constant 0 : i32
    %c0_i32_1 = arith.constant 0 : i32
    return %c0_i32, %c0_i32_0 : i32, i32
  }
  func.func @transform_2(%arg0: i32, %arg1: i32) -> (i32, i32) {
    %c0_i32 = arith.constant 0 : i32
    %c0_i32_0 = arith.constant 0 : i32
    %c0_i32_1 = arith.constant 0 : i32
    return %c0_i32, %c0_i32_0 : i32, i32
  }
  func.func @transform_3(%arg0: i32, %arg1: i32) -> (i32, i32) {
    %c0_i32 = arith.constant 0 : i32
    %c0_i32_0 = arith.constant 0 : i32
    %c0_i32_1 = arith.constant 0 : i32
    return %c0_i32, %c0_i32_0 : i32, i32
  }
  func.func @transform_4(%arg0: i32, %arg1: i32) -> (i32, i32) {
    %c0_i32 = arith.constant 0 : i32
    %c0_i32_0 = arith.constant 0 : i32
    %c0_i32_1 = arith.constant 0 : i32
    return %c0_i32, %c0_i32_0 : i32, i32
  }
  func.func @transform_5(%arg0: i32, %arg1: i32) -> (i32, i32) {
    %c0_i32 = arith.constant 0 : i32
    %c0_i32_0 = arith.constant 0 : i32
    %c0_i32_1 = arith.constant 0 : i32
    return %c0_i32, %c0_i32_0 : i32, i32
  }
  func.func @transform_6(%arg0: i32, %arg1: i32) -> (i32, i32) {
    %c0_i32 = arith.constant 0 : i32
    %c0_i32_0 = arith.constant 0 : i32
    %c0_i32_1 = arith.constant 0 : i32
    return %c0_i32, %c0_i32_0 : i32, i32
  }
  func.func @transform_7(%arg0: i32, %arg1: i32) -> (i32, i32, i32) {
    %c0_i32 = arith.constant 0 : i32
    %c0_i32_0 = arith.constant 0 : i32
    return %arg1, %arg0, %c0_i32 : i32, i32, i32
  }
}

</mosaic_0001>

<llo_original>
// kernel: gru_model_forward.2
$region0: #{gru_model_forward.2}
  #allocation0 [shape = 'u32[]', space=smem, size = 0x4, offset = 0x4, fixed_abs, tag = 'smem constant byte address 0x4 - core index']
  #allocation1 [shape = 'u32[72,128]{1,0:T(1,128)}', space=vmem, size = 0x9000, scoped, tag = 'internal scratch']
  #allocation2 [shape = 'f32[8,128]{1,0:T(8,128)}', space=vmem, size = 0x1000, scoped, tag = 'scratch operand']
  #allocation3 [shape = 'f32[64,384]{1,0:T(8,128)}', space=vmem, size = 0x18000, scoped, tag = 'scratch operand']
  %s0 = inlined_call_operand.vmem [shape: bf16[8,8,8], index: 0, kind: input, shape index: {}]
  %s1 = inlined_call_operand.hbm [shape: bf16[8,384], index: 1, kind: input, shape index: {}]
  %s2 = inlined_call_operand.hbm [shape: bf16[128,384], index: 2, kind: input, shape index: {}]
  %s3 = inlined_call_operand.vmem [shape: f32[1,384], index: 3, kind: input, shape index: {}]
  %s4 = inlined_call_operand.vmem [shape: f32[1,384], index: 4, kind: input, shape index: {}]
  %s5 = inlined_call_operand.vmem [shape: bf16[8,8,128], index: 5, kind: output, shape index: {}]
  %s6 = sld [smem:[#allocation0]]
  $region42: #{gru_model_forward.2} parent=0
    _
  %s8 = ssub.s32 1, %s6
  %s9 = scalar_select 0, %s8, %s6
  $region1: #{gru_model_forward.2} parent=0
    #allocation4 [shape = 'u8[6144]{0}', space=vmem, size = 0x1800, scoped, tag = 'input window, operand 1, single buffered']
    #allocation5 [shape = 's32[1]{0}', space=sflag, size = 0x4, scoped, tag = 'scoped memory for gru_model_forward.2']
    #allocation6 [shape = 'u8[98304]{0}', space=vmem, size = 0x18000, scoped, tag = 'input window, operand 2, single buffered']
    #allocation7 [shape = 's32[1]{0}', space=sflag, size = 0x4, scoped, tag = 'scoped memory for gru_model_forward.2']
    %10 = vsyncpa [#allocation5], 0
    %11 = vsyncpa [#allocation7], 0
    // Predicated region
    $region2: #{gru_model_forward.2} parent=1 // pred_check
      _
    $region3: #{gru_model_forward.2} parent=1 // pred_check_branch
      %13 = sbr.rel (0) target = $region5
    $region4: #{gru_model_forward.2} parent=1 // pred_region
      _
    $region5: #{gru_model_forward.2} parent=1 // pred_fallthru
      _
    // Predicated region
    $region6: #{gru_model_forward.2} parent=1 // pred_check
      _
    $region7: #{gru_model_forward.2} parent=1 // pred_check_branch
      %15 = sbr.rel (0) target = $region9
    $region8: #{gru_model_forward.2} parent=1 // pred_region
      %17 = vsyncadd [#allocation5], 0
      %s19 = sshll.u32 %s1, 4
      %s20 = int_to_ptr.hbm [resolvable:$true] %s19
      %s21 = sshll.u32 [#allocation4], 4
      %s22 = int_to_ptr.vmem [resolvable:$true] %s21
      %24 = dma.hbm_to_vmem [thread:$0]  %s20, 192, %s22, [#allocation5]
    $region9: #{gru_model_forward.2} parent=1 // pred_fallthru
      _
    // Predicated region
    $region10: #{gru_model_forward.2} parent=1 // pred_check
      _
    $region11: #{gru_model_forward.2} parent=1 // pred_check_branch
      %26 = sbr.rel (0) target = $region13
    $region12: #{gru_model_forward.2} parent=1 // pred_region
      %28 = vsyncadd [#allocation7], 0
      %s29 = sshll.u32 %s2, 4
      %s30 = int_to_ptr.hbm [resolvable:$true] %s29
      %s31 = sshll.u32 [#allocation6], 4
      %s32 = int_to_ptr.vmem [resolvable:$true] %s31
      %37 = dma.hbm_to_vmem [thread:$0]  %s30, 3072, %s32, [#allocation7], 192, 192, 12
    $region13: #{gru_model_forward.2} parent=1 // pred_fallthru
      _
    // Predicated region
    $region14: #{gru_model_forward.2} parent=1 // pred_check
      _
    $region15: #{gru_model_forward.2} parent=1 // pred_check_branch
      %39 = sbr.rel (0) target = $region17
    $region16: #{gru_model_forward.2} parent=1 // pred_region
      _
    $region17: #{gru_model_forward.2} parent=1 // pred_fallthru
      _
    // Predicated region
    $region18: #{gru_model_forward.2} parent=1 // pred_check
      _
    $region19: #{gru_model_forward.2} parent=1 // pred_check_branch
      %41 = sbr.rel (0) target = $region21
    $region20: #{gru_model_forward.2} parent=1 // pred_region
      _
    $region21: #{gru_model_forward.2} parent=1 // pred_fallthru
      _
    // Predicated region
    $region22: #{gru_model_forward.2} parent=1 // pred_check
      _
    $region23: #{gru_model_forward.2} parent=1 // pred_check_branch
      %43 = sbr.rel (0) target = $region25
    $region24: #{gru_model_forward.2} parent=1 // pred_region
      %45 = dma.done [#allocation5], 192
    $region25: #{gru_model_forward.2} parent=1 // pred_fallthru
      _
    // Predicated region
    $region26: #{gru_model_forward.2} parent=1 // pred_check
      _
    $region27: #{gru_model_forward.2} parent=1 // pred_check_branch
      %47 = sbr.rel (0) target = $region29
    $region28: #{gru_model_forward.2} parent=1 // pred_region
      %49 = dma.done [#allocation7], 3072
    $region29: #{gru_model_forward.2} parent=1 // pred_fallthru
      _
    %p51 = scmp.eq.s32.totalorder 0, 0
    // Predicated region
    $region30: #{gru_model_forward.2} parent=1 // pred_check
      %p52 = pneg %p51
    $region31: #{gru_model_forward.2} parent=1 // pred_check_branch
      %54 = sbr.rel (%p52) target = $region33
    $region32: #{gru_model_forward.2} parent=1 // pred_region
      %55 = vst [vmem:[#allocation2] sm:$0xff] 0.0
    $region33: #{gru_model_forward.2} parent=1 // pred_fallthru
      _
    %v56 = vld [vmem:[%s0] sm:$0xf]
    %v57 = vld [vmem:[%s0 + $0x4] sm:$0xf]
    %v58 = vld [vmem:[%s0 + $0x8] sm:$0xf]
    %v59 = vld [vmem:[%s0 + $0xc] sm:$0xf]
    %v60 = vld [vmem:[%s0 + $0x10] sm:$0xf]
    %v61 = vld [vmem:[%s0 + $0x14] sm:$0xf]
    %v62 = vld [vmem:[%s0 + $0x18] sm:$0xf]
    %v63 = vld [vmem:[%s0 + $0x1c] sm:$0xf]
    %v64 = vld [vmem:[#allocation4] sm:$0xff]
    %v65 = vld [vmem:[#allocation4 + $0x8] sm:$0xf]
    %v66 = vld [vmem:[%s3] sm:$0x7]
    %v68 = vperm.slane %v66, 0
    %v69 = vperm.slane %v66, 1
    %v70 = vperm.slane %v66, 2
    %v82 = vunpack.c.l.b16 %v56
    %v83 = vunpack.c.l.b16 %v57
    %v84 = vunpack.c.l.b16 %v58
    %v85 = vunpack.c.l.b16 %v59
    %v86 = vunpack.c.l.b16 %v60
    %v87 = vunpack.c.l.b16 %v61
    %v88 = vunpack.c.l.b16 %v62
    %v89 = vunpack.c.l.b16 %v63
    %v90 = vpack.c.b16 %v83, %v82
    %v91 = vpack.c.b16 %v85, %v84
    %v92 = vpack.c.b16 %v87, %v86
    %v93 = vpack.c.b16 %v89, %v88
    %v96 = vunpack.c.l.b16 %v64
    %v97 = vunpack.c.h.b16 %v64
    %v98 = vunpack.c.l.b16 %v65
    %v99 = vpack.c.b16 %v96, %v96
    %v100 = vpack.c.b16 %v97, %v97
    %v101 = vpack.c.b16 %v98, %v98
    %vm102 = vcmask 64512
    %v104 = vsel %vm102, %v90, 0
    %v107 = vsel %vm102, %v91, 0
    %v110 = vsel %vm102, %v92, 0
    %v113 = vsel %vm102, %v93, 0
    %vm115 = vcmask 1043456
    %v117 = vsel %vm115, %v99, 0
    %v120 = vsel %vm115, %v100, 0
    %v123 = vsel %vm115, %v101, 0
    %125 = vmatpush.bf16.msra.mxu0 0
    %126 = vmatpush.bf16.msra.mxu0 0
    %127 = vmatpush.bf16.msra.mxu0 0
    %128 = vmatpush.bf16.msra.mxu0 0
    %129 = vmatpush.bf16.msra.mxu0 0
    %130 = vmatpush.bf16.msra.mxu0 0
    %131 = vmatpush.bf16.msra.mxu0 0
    %132 = vmatpush.bf16.msra.mxu0 %v117
    %133 = vmatmul.bf16.gmra.mxu0 %v104
    %v134 = vpop.f32.mrf.mxu0
    %v135 = vadd.f32 %v68, %v134
    %v136 = vpop.f32.mrf.mxu0
    %v137 = vadd.f32 %v68, %v136
    %138 = vmatmul.bf16.gmra.mxu0 %v107
    %v139 = vpop.f32.mrf.mxu0
    %v140 = vadd.f32 %v68, %v139
    %v141 = vpop.f32.mrf.mxu0
    %v142 = vadd.f32 %v68, %v141
    %143 = vmatmul.bf16.gmra.mxu0 %v110
    %v144 = vpop.f32.mrf.mxu0
    %v145 = vadd.f32 %v68, %v144
    %v146 = vpop.f32.mrf.mxu0
    %v147 = vadd.f32 %v68, %v146
    %148 = vmatmul.bf16.gmra.mxu0 %v113
    %v149 = vpop.f32.mrf.mxu0
    %v150 = vadd.f32 %v68, %v149
    %v151 = vpop.f32.mrf.mxu0
    %v152 = vadd.f32 %v68, %v151
    %153 = vdwg.mxu0
    %154 = vmatpush.bf16.msra.mxu0 0
    %155 = vmatpush.bf16.msra.mxu0 0
    %156 = vmatpush.bf16.msra.mxu0 0
    %157 = vmatpush.bf16.msra.mxu0 0
    %158 = vmatpush.bf16.msra.mxu0 0
    %159 = vmatpush.bf16.msra.mxu0 0
    %160 = vmatpush.bf16.msra.mxu0 0
    %161 = vmatpush.bf16.msra.mxu0 %v120
    %162 = vmatmul.bf16.gmra.mxu0 %v104
    %v163 = vpop.f32.mrf.mxu0
    %v164 = vadd.f32 %v69, %v163
    %v165 = vpop.f32.mrf.mxu0
    %v166 = vadd.f32 %v69, %v165
    %167 = vmatmul.bf16.gmra.mxu0 %v107
    %v168 = vpop.f32.mrf.mxu0
    %v169 = vadd.f32 %v69, %v168
    %v170 = vpop.f32.mrf.mxu0
    %v171 = vadd.f32 %v69, %v170
    %172 = vmatmul.bf16.gmra.mxu0 %v110
    %v173 = vpop.f32.mrf.mxu0
    %v174 = vadd.f32 %v69, %v173
    %v175 = vpop.f32.mrf.mxu0
    %v176 = vadd.f32 %v69, %v175
    %177 = vmatmul.bf16.gmra.mxu0 %v113
    %v178 = vpop.f32.mrf.mxu0
    %v179 = vadd.f32 %v69, %v178
    %v180 = vpop.f32.mrf.mxu0
    %v181 = vadd.f32 %v69, %v180
    %182 = vdwg.mxu0
    %183 = vmatpush.bf16.msra.mxu0 0
    %184 = vmatpush.bf16.msra.mxu0 0
    %185 = vmatpush.bf16.msra.mxu0 0
    %186 = vmatpush.bf16.msra.mxu0 0
    %187 = vmatpush.bf16.msra.mxu0 0
    %188 = vmatpush.bf16.msra.mxu0 0
    %189 = vmatpush.bf16.msra.mxu0 0
    %190 = vmatpush.bf16.msra.mxu0 %v123
    %191 = vmatmul.bf16.gmra.mxu0 %v104
    %v192 = vpop.f32.mrf.mxu0
    %v193 = vadd.f32 %v70, %v192
    %v194 = vpop.f32.mrf.mxu0
    %v195 = vadd.f32 %v70, %v194
    %196 = vmatmul.bf16.gmra.mxu0 %v107
    %v197 = vpop.f32.mrf.mxu0
    %v198 = vadd.f32 %v70, %v197
    %v199 = vpop.f32.mrf.mxu0
    %v200 = vadd.f32 %v70, %v199
    %201 = vmatmul.bf16.gmra.mxu0 %v110
    %v202 = vpop.f32.mrf.mxu0
    %v203 = vadd.f32 %v70, %v202
    %v204 = vpop.f32.mrf.mxu0
    %v205 = vadd.f32 %v70, %v204
    %206 = vmatmul.bf16.gmra.mxu0 %v113
    %v207 = vpop.f32.mrf.mxu0
    %v208 = vadd.f32 %v70, %v207
    %v209 = vpop.f32.mrf.mxu0
    %v210 = vadd.f32 %v70, %v209
    %211 = vdwg.mxu0
    %212 = vst [vmem:[#allocation3] sm:$0xff] %v135
    %213 = vst [vmem:[#allocation3 + $0x8] sm:$0xff] %v164
    %214 = vst [vmem:[#allocation3 + $0x10] sm:$0xff] %v193
    %215 = vst [vmem:[#allocation3 + $0x18] sm:$0xff] %v137
    %216 = vst [vmem:[#allocation3 + $0x20] sm:$0xff] %v166
    %217 = vst [vmem:[#allocation3 + $0x28] sm:$0xff] %v195
    %218 = vst [vmem:[#allocation3 + $0x30] sm:$0xff] %v140
    %219 = vst [vmem:[#allocation3 + $0x38] sm:$0xff] %v169
    %220 = vst [vmem:[#allocation3 + $0x40] sm:$0xff] %v198
    %221 = vst [vmem:[#allocation3 + $0x48] sm:$0xff] %v142
    %222 = vst [vmem:[#allocation3 + $0x50] sm:$0xff] %v171
    %223 = vst [vmem:[#allocation3 + $0x58] sm:$0xff] %v200
    %224 = vst [vmem:[#allocation3 + $0x60] sm:$0xff] %v145
    %225 = vst [vmem:[#allocation3 + $0x68] sm:$0xff] %v174
    %226 = vst [vmem:[#allocation3 + $0x70] sm:$0xff] %v203
    %227 = vst [vmem:[#allocation3 + $0x78] sm:$0xff] %v147
    %228 = vst [vmem:[#allocation3 + $0x80] sm:$0xff] %v176
    %229 = vst [vmem:[#allocation3 + $0x88] sm:$0xff] %v205
    %230 = vst [vmem:[#allocation3 + $0x90] sm:$0xff] %v150
    %231 = vst [vmem:[#allocation3 + $0x98] sm:$0xff] %v179
    %232 = vst [vmem:[#allocation3 + $0xa0] sm:$0xff] %v208
    %233 = vst [vmem:[#allocation3 + $0xa8] sm:$0xff] %v152
    %234 = vst [vmem:[#allocation3 + $0xb0] sm:$0xff] %v181
    %235 = vst [vmem:[#allocation3 + $0xb8] sm:$0xff] %v210
    %v236 = vld [vmem:[#allocation6] sm:$0xff]
    %v237 = vld [vmem:[#allocation6 + $0x8] sm:$0xf]
    %v238 = vld [vmem:[#allocation6 + $0xc] sm:$0xff]
    %v239 = vld [vmem:[#allocation6 + $0x14] sm:$0xf]
    %v240 = vld [vmem:[#allocation6 + $0x18] sm:$0xff]
    %v241 = vld [vmem:[#allocation6 + $0x20] sm:$0xf]
    %v242 = vld [vmem:[#allocation6 + $0x24] sm:$0xff]
    %v243 = vld [vmem:[#allocation6 + $0x2c] sm:$0xf]
    %v244 = vld [vmem:[#allocation6 + $0x30] sm:$0xff]
    %v245 = vld [vmem:[#allocation6 + $0x38] sm:$0xf]
    %v246 = vld [vmem:[#allocation6 + $0x3c] sm:$0xff]
    %v247 = vld [vmem:[#allocation6 + $0x44] sm:$0xf]
    %v248 = vld [vmem:[#allocation6 + $0x48] sm:$0xff]
    %v249 = vld [vmem:[#allocation6 + $0x50] sm:$0xf]
    %v250 = vld [vmem:[#allocation6 + $0x54] sm:$0xff]
    %v251 = vld [vmem:[#allocation6 + $0x5c] sm:$0xf]
    %v252 = vld [vmem:[#allocation6 + $0x60] sm:$0xff]
    %v253 = vld [vmem:[#allocation6 + $0x68] sm:$0xf]
    %v254 = vld [vmem:[#allocation6 + $0x6c] sm:$0xff]
    %v255 = vld [vmem:[#allocation6 + $0x74] sm:$0xf]
    %v256 = vld [vmem:[#allocation6 + $0x78] sm:$0xff]
    %v257 = vld [vmem:[#allocation6 + $0x80] sm:$0xf]
    %v258 = vld [vmem:[#allocation6 + $0x84] sm:$0xff]
    %v259 = vld [vmem:[#allocation6 + $0x8c] sm:$0xf]
    %v260 = vld [vmem:[#allocation6 + $0x90] sm:$0xff]
    %v261 = vld [vmem:[#allocation6 + $0x98] sm:$0xf]
    %v262 = vld [vmem:[#allocation6 + $0x9c] sm:$0xff]
    %v263 = vld [vmem:[#allocation6 + $0xa4] sm:$0xf]
    %v264 = vld [vmem:[#allocation6 + $0xa8] sm:$0xff]
    %v265 = vld [vmem:[#allocation6 + $0xb0] sm:$0xf]
    %v266 = vld [vmem:[#allocation6 + $0xb4] sm:$0xff]
    %v267 = vld [vmem:[#allocation6 + $0xbc] sm:$0xf]
    %v268 = vld [vmem:[%s4] sm:$0x7]
    %v270 = vperm.slane %v268, 0
    %v271 = vperm.slane %v268, 1
    %v272 = vperm.slane %v268, 2
    %v276 = vld [vmem:[#allocation2] sm:$0xff]
    %s277 = smul.u32 0, 3
    %s278 = smul.addr %s277, 8
    %s279 = scalar_lea.vmem [#allocation3], %s278
    %v280 = vld [vmem:[%s279] sm:$0xff]
    %v281 = vld [vmem:[%s279 + $0x8] sm:$0xff]
    %v282 = vld [vmem:[%s279 + $0x10] sm:$0xff]
    %v283 = vpack.c.bf16 %v276, %v276
    %v316 = vunpack.c.l.b16 %v236
    %v317 = vunpack.c.h.b16 %v236
    %v318 = vunpack.c.l.b16 %v237
    %v319 = vunpack.c.l.b16 %v238
    %v320 = vunpack.c.h.b16 %v238
    %v321 = vunpack.c.l.b16 %v239
    %v322 = vunpack.c.l.b16 %v240
    %v323 = vunpack.c.h.b16 %v240
    %v324 = vunpack.c.l.b16 %v241
    %v325 = vunpack.c.l.b16 %v242
    %v326 = vunpack.c.h.b16 %v242
    %v327 = vunpack.c.l.b16 %v243
    %v328 = vunpack.c.l.b16 %v244
    %v329 = vunpack.c.h.b16 %v244
    %v330 = vunpack.c.l.b16 %v245
    %v331 = vunpack.c.l.b16 %v246
    %v332 = vunpack.c.h.b16 %v246
    %v333 = vunpack.c.l.b16 %v247
    %v334 = vunpack.c.l.b16 %v248
    %v335 = vunpack.c.h.b16 %v248
    %v336 = vunpack.c.l.b16 %v249
    %v337 = vunpack.c.l.b16 %v250
    %v338 = vunpack.c.h.b16 %v250
    %v339 = vunpack.c.l.b16 %v251
    %v340 = vunpack.c.l.b16 %v252
    %v341 = vunpack.c.h.b16 %v252
    %v342 = vunpack.c.l.b16 %v253
    %v343 = vunpack.c.l.b16 %v254
    %v344 = vunpack.c.h.b16 %v254
    %v345 = vunpack.c.l.b16 %v255
    %v346 = vunpack.c.l.b16 %v256
    %v347 = vunpack.c.h.b16 %v256
    %v348 = vunpack.c.l.b16 %v257
    %v349 = vunpack.c.l.b16 %v258
    %v350 = vunpack.c.h.b16 %v258
    %v351 = vunpack.c.l.b16 %v259
    %v352 = vunpack.c.l.b16 %v260
    %v353 = vunpack.c.h.b16 %v260
    %v354 = vunpack.c.l.b16 %v261
    %v355 = vunpack.c.l.b16 %v262
    %v356 = vunpack.c.h.b16 %v262
    %v357 = vunpack.c.l.b16 %v263
    %v358 = vunpack.c.l.b16 %v264
    %v359 = vunpack.c.h.b16 %v264
    %v360 = vunpack.c.l.b16 %v265
    %v361 = vunpack.c.l.b16 %v266
    %v362 = vunpack.c.h.b16 %v266
    %v363 = vunpack.c.l.b16 %v267
    %v364 = vpack.c.b16 %v319, %v316
    %v365 = vpack.c.b16 %v320, %v317
    %v366 = vpack.c.b16 %v321, %v318
    %v367 = vpack.c.b16 %v325, %v322
    %v368 = vpack.c.b16 %v326, %v323
    %v369 = vpack.c.b16 %v327, %v324
    %v370 = vpack.c.b16 %v331, %v328
    %v371 = vpack.c.b16 %v332, %v329
    %v372 = vpack.c.b16 %v333, %v330
    %v373 = vpack.c.b16 %v337, %v334
    %v374 = vpack.c.b16 %v338, %v335
    %v375 = vpack.c.b16 %v339, %v336
    %v376 = vpack.c.b16 %v343, %v340
    %v377 = vpack.c.b16 %v344, %v341
    %v378 = vpack.c.b16 %v345, %v342
    %v379 = vpack.c.b16 %v349, %v346
    %v380 = vpack.c.b16 %v350, %v347
    %v381 = vpack.c.b16 %v351, %v348
    %v382 = vpack.c.b16 %v355, %v352
    %v383 = vpack.c.b16 %v356, %v353
    %v384 = vpack.c.b16 %v357, %v354
    %v385 = vpack.c.b16 %v361, %v358
    %v386 = vpack.c.b16 %v362, %v359
    %v387 = vpack.c.b16 %v363, %v360
    %412 = vmatpush.bf16.msra.mxu0 %v385
    %413 = vmatpush.bf16.msra.mxu0 %v382
    %414 = vmatpush.bf16.msra.mxu0 %v379
    %415 = vmatpush.bf16.msra.mxu0 %v376
    %416 = vmatpush.bf16.msra.mxu0 %v373
    %417 = vmatpush.bf16.msra.mxu0 %v370
    %418 = vmatpush.bf16.msra.mxu0 %v367
    %419 = vmatpush.bf16.msra.mxu0 %v364
    %420 = vmatmul.bf16.gmra.mxu0 %v283
    %v421 = vpop.f32.mrf.mxu0
    %v422 = vadd.f32 %v270, %v421
    %v423 = vpop.f32.mrf.mxu0
    %424 = vdwg.mxu0
    %425 = vmatpush.bf16.msra.mxu0 %v386
    %426 = vmatpush.bf16.msra.mxu0 %v383
    %427 = vmatpush.bf16.msra.mxu0 %v380
    %428 = vmatpush.bf16.msra.mxu0 %v377
    %429 = vmatpush.bf16.msra.mxu0 %v374
    %430 = vmatpush.bf16.msra.mxu0 %v371
    %431 = vmatpush.bf16.msra.mxu0 %v368
    %432 = vmatpush.bf16.msra.mxu0 %v365
    %433 = vmatmul.bf16.gmra.mxu0 %v283
    %v434 = vpop.f32.mrf.mxu0
    %v435 = vadd.f32 %v271, %v434
    %v436 = vpop.f32.mrf.mxu0
    %437 = vdwg.mxu0
    %438 = vmatpush.bf16.msra.mxu0 %v387
    %439 = vmatpush.bf16.msra.mxu0 %v384
    %440 = vmatpush.bf16.msra.mxu0 %v381
    %441 = vmatpush.bf16.msra.mxu0 %v378
    %442 = vmatpush.bf16.msra.mxu0 %v375
    %443 = vmatpush.bf16.msra.mxu0 %v372
    %444 = vmatpush.bf16.msra.mxu0 %v369
    %445 = vmatpush.bf16.msra.mxu0 %v366
    %446 = vmatmul.bf16.gmra.mxu0 %v283
    %v447 = vpop.f32.mrf.mxu0
    %v448 = vadd.f32 %v272, %v447
    %v449 = vpop.f32.mrf.mxu0
    %450 = vdwg.mxu0
    %v451 = vadd.f32 %v280, %v422
    %v452 = vxor.u32 %v451, 2147483648
    %v453 = vmul.f32 %v452, 1.442695
    %v454 = vpow.pop %v453
    %v455 = vadd.f32 %v454, 1.0
    %v456 = vrcp.pop %v455
    %v457 = vmul.f32 %v455, %v456
    %v458 = vsub.f32 1.0, %v457
    %v459 = vmul.f32 %v456, %v458
    %v460 = vadd.f32 %v456, %v459
    %vm461 = vweird.f32 %v455
    %vm462 = vweird.f32 %v456
    %vm463 = vmor %vm461, %vm462
    %v464 = vsel %vm463, %v456, %v460
    %v465 = vand.u32 2147483647, %v455
    %vm466 = vcmp.eq.f32.partialorder %v465, 8.507059e+37
    %v467 = vand.u32 %v455, 2147483648
    %v468 = vor.u32 1.1754944e-38, %v467
    %v469 = vsel %vm466, %v468, %v464
    %v470 = vmul.f32 1.0, %v469
    %v471 = vadd.f32 %v281, %v435
    %v472 = vxor.u32 %v471, 2147483648
    %v473 = vmul.f32 %v472, 1.442695
    %v474 = vpow.pop %v473
    %v475 = vadd.f32 %v474, 1.0
    %v476 = vrcp.pop %v475
    %v477 = vmul.f32 %v475, %v476
    %v478 = vsub.f32 1.0, %v477
    %v479 = vmul.f32 %v476, %v478
    %v480 = vadd.f32 %v476, %v479
    %vm481 = vweird.f32 %v475
    %vm482 = vweird.f32 %v476
    %vm483 = vmor %vm481, %vm482
    %v484 = vsel %vm483, %v476, %v480
    %v485 = vand.u32 2147483647, %v475
    %vm486 = vcmp.eq.f32.partialorder %v485, 8.507059e+37
    %v487 = vand.u32 %v475, 2147483648
    %v488 = vor.u32 1.1754944e-38, %v487
    %v489 = vsel %vm486, %v488, %v484
    %v490 = vmul.f32 1.0, %v489
    %v491 = vmul.f32 %v470, %v448
    %v492 = vadd.f32 %v282, %v491
    %v493 = vtanh.pop %v492
    %v494 = vsub.f32 1.0, %v490
    %v495 = vmul.f32 %v494, %v493
    %v496 = vmul.f32 %v490, %v276
    %v497 = vadd.f32 %v495, %v496
    %v498 = vpack.c.bf16 %v497, %v497
    %499 = vst [vmem:[%s5] sm:$0xf] %v498
    %s500 = smul.u32 1, 3
    %s501 = smul.addr %s500, 8
    %s502 = scalar_lea.vmem [#allocation3], %s501
    %v503 = vld [vmem:[%s502] sm:$0xff]
    %v504 = vld [vmem:[%s502 + $0x8] sm:$0xff]
    %v505 = vld [vmem:[%s502 + $0x10] sm:$0xff]
    %506 = vmatpush.bf16.msra.mxu0 %v385
    %507 = vmatpush.bf16.msra.mxu0 %v382
    %508 = vmatpush.bf16.msra.mxu0 %v379
    %509 = vmatpush.bf16.msra.mxu0 %v376
    %510 = vmatpush.bf16.msra.mxu0 %v373
    %511 = vmatpush.bf16.msra.mxu0 %v370
    %512 = vmatpush.bf16.msra.mxu0 %v367
    %513 = vmatpush.bf16.msra.mxu0 %v364
    %514 = vmatmul.bf16.gmra.mxu0 %v498
    %v515 = vpop.f32.mrf.mxu0
    %v516 = vadd.f32 %v270, %v515
    %v517 = vpop.f32.mrf.mxu0
    %518 = vdwg.mxu0
    %519 = vmatpush.bf16.msra.mxu0 %v386
    %520 = vmatpush.bf16.msra.mxu0 %v383
    %521 = vmatpush.bf16.msra.mxu0 %v380
    %522 = vmatpush.bf16.msra.mxu0 %v377
    %523 = vmatpush.bf16.msra.mxu0 %v374
    %524 = vmatpush.bf16.msra.mxu0 %v371
    %525 = vmatpush.bf16.msra.mxu0 %v368
    %526 = vmatpush.bf16.msra.mxu0 %v365
    %527 = vmatmul.bf16.gmra.mxu0 %v498
    %v528 = vpop.f32.mrf.mxu0
    %v529 = vadd.f32 %v271, %v528
    %v530 = vpop.f32.mrf.mxu0
    %531 = vdwg.mxu0
    %532 = vmatpush.bf16.msra.mxu0 %v387
    %533 = vmatpush.bf16.msra.mxu0 %v384
    %534 = vmatpush.bf16.msra.mxu0 %v381
    %535 = vmatpush.bf16.msra.mxu0 %v378
    %536 = vmatpush.bf16.msra.mxu0 %v375
    %537 = vmatpush.bf16.msra.mxu0 %v372
    %538 = vmatpush.bf16.msra.mxu0 %v369
    %539 = vmatpush.bf16.msra.mxu0 %v366
    %540 = vmatmul.bf16.gmra.mxu0 %v498
    %v541 = vpop.f32.mrf.mxu0
    %v542 = vadd.f32 %v272, %v541
    %v543 = vpop.f32.mrf.mxu0
    %544 = vdwg.mxu0
    %v545 = vadd.f32 %v503, %v516
    %v546 = vxor.u32 %v545, 2147483648
    %v547 = vmul.f32 %v546, 1.442695
    %v548 = vpow.pop %v547
    %v549 = vadd.f32 %v548, 1.0
    %v550 = vrcp.pop %v549
    %v551 = vmul.f32 %v549, %v550
    %v552 = vsub.f32 1.0, %v551
    %v553 = vmul.f32 %v550, %v552
    %v554 = vadd.f32 %v550, %v553
    %vm555 = vweird.f32 %v549
    %vm556 = vweird.f32 %v550
    %vm557 = vmor %vm555, %vm556
    %v558 = vsel %vm557, %v550, %v554
    %v559 = vand.u32 2147483647, %v549
    %vm560 = vcmp.eq.f32.partialorder %v559, 8.507059e+37
    %v561 = vand.u32 %v549, 2147483648
    %v562 = vor.u32 1.1754944e-38, %v561
    %v563 = vsel %vm560, %v562, %v558
    %v564 = vmul.f32 1.0, %v563
    %v565 = vadd.f32 %v504, %v529
    %v566 = vxor.u32 %v565, 2147483648
    %v567 = vmul.f32 %v566, 1.442695
    %v568 = vpow.pop %v567
    %v569 = vadd.f32 %v568, 1.0
    %v570 = vrcp.pop %v569
    %v571 = vmul.f32 %v569, %v570
    %v572 = vsub.f32 1.0, %v571
    %v573 = vmul.f32 %v570, %v572
    %v574 = vadd.f32 %v570, %v573
    %vm575 = vweird.f32 %v569
    %vm576 = vweird.f32 %v570
    %vm577 = vmor %vm575, %vm576
    %v578 = vsel %vm577, %v570, %v574
    %v579 = vand.u32 2147483647, %v569
    %vm580 = vcmp.eq.f32.partialorder %v579, 8.507059e+37
    %v581 = vand.u32 %v569, 2147483648
    %v582 = vor.u32 1.1754944e-38, %v581
    %v583 = vsel %vm580, %v582, %v578
    %v584 = vmul.f32 1.0, %v583
    %v585 = vmul.f32 %v564, %v542
    %v586 = vadd.f32 %v505, %v585
    %v587 = vtanh.pop %v586
    %v588 = vsub.f32 1.0, %v584
    %v589 = vmul.f32 %v588, %v587
    %v590 = vmul.f32 %v584, %v497
    %v591 = vadd.f32 %v589, %v590
    %v592 = vpack.c.bf16 %v591, %v591
    %s593 = scalar_lea.vmem %s5, 4
    %594 = vst [vmem:[%s593] sm:$0xf] %v592
    %s595 = smul.u32 2, 3
    %s596 = smul.addr %s595, 8
    %s597 = scalar_lea.vmem [#allocation3], %s596
    %v598 = vld [vmem:[%s597] sm:$0xff]
    %v599 = vld [vmem:[%s597 + $0x8] sm:$0xff]
    %v600 = vld [vmem:[%s597 + $0x10] sm:$0xff]
    %601 = vmatpush.bf16.msra.mxu0 %v385
    %602 = vmatpush.bf16.msra.mxu0 %v382
    %603 = vmatpush.bf16.msra.mxu0 %v379
    %604 = vmatpush.bf16.msra.mxu0 %v376
    %605 = vmatpush.bf16.msra.mxu0 %v373
    %606 = vmatpush.bf16.msra.mxu0 %v370
    %607 = vmatpush.bf16.msra.mxu0 %v367
    %608 = vmatpush.bf16.msra.mxu0 %v364
    %609 = vmatmul.bf16.gmra.mxu0 %v592
    %v610 = vpop.f32.mrf.mxu0
    %v611 = vadd.f32 %v270, %v610
    %v612 = vpop.f32.mrf.mxu0
    %613 = vdwg.mxu0
    %614 = vmatpush.bf16.msra.mxu0 %v386
    %615 = vmatpush.bf16.msra.mxu0 %v383
    %616 = vmatpush.bf16.msra.mxu0 %v380
    %617 = vmatpush.bf16.msra.mxu0 %v377
    %618 = vmatpush.bf16.msra.mxu0 %v374
    %619 = vmatpush.bf16.msra.mxu0 %v371
    %620 = vmatpush.bf16.msra.mxu0 %v368
    %621 = vmatpush.bf16.msra.mxu0 %v365
    %622 = vmatmul.bf16.gmra.mxu0 %v592
    %v623 = vpop.f32.mrf.mxu0
    %v624 = vadd.f32 %v271, %v623
    %v625 = vpop.f32.mrf.mxu0
    %626 = vdwg.mxu0
    %627 = vmatpush.bf16.msra.mxu0 %v387
    %628 = vmatpush.bf16.msra.mxu0 %v384
    %629 = vmatpush.bf16.msra.mxu0 %v381
    %630 = vmatpush.bf16.msra.mxu0 %v378
    %631 = vmatpush.bf16.msra.mxu0 %v375
    %632 = vmatpush.bf16.msra.mxu0 %v372
    %633 = vmatpush.bf16.msra.mxu0 %v369
    %634 = vmatpush.bf16.msra.mxu0 %v366
    %635 = vmatmul.bf16.gmra.mxu0 %v592
    %v636 = vpop.f32.mrf.mxu0
    %v637 = vadd.f32 %v272, %v636
    %v638 = vpop.f32.mrf.mxu0
    %639 = vdwg.mxu0
    %v640 = vadd.f32 %v598, %v611
    %v641 = vxor.u32 %v640, 2147483648
    %v642 = vmul.f32 %v641, 1.442695
    %v643 = vpow.pop %v642
    %v644 = vadd.f32 %v643, 1.0
    %v645 = vrcp.pop %v644
    %v646 = vmul.f32 %v644, %v645
    %v647 = vsub.f32 1.0, %v646
    %v648 = vmul.f32 %v645, %v647
    %v649 = vadd.f32 %v645, %v648
    %vm650 = vweird.f32 %v644
    %vm651 = vweird.f32 %v645
    %vm652 = vmor %vm650, %vm651
    %v653 = vsel %vm652, %v645, %v649
    %v654 = vand.u32 2147483647, %v644
    %vm655 = vcmp.eq.f32.partialorder %v654, 8.507059e+37
    %v656 = vand.u32 %v644, 2147483648
    %v657 = vor.u32 1.1754944e-38, %v656
    %v658 = vsel %vm655, %v657, %v653
    %v659 = vmul.f32 1.0, %v658
    %v660 = vadd.f32 %v599, %v624
    %v661 = vxor.u32 %v660, 2147483648
    %v662 = vmul.f32 %v661, 1.442695
    %v663 = vpow.pop %v662
    %v664 = vadd.f32 %v663, 1.0
    %v665 = vrcp.pop %v664
    %v666 = vmul.f32 %v664, %v665
    %v667 = vsub.f32 1.0, %v666
    %v668 = vmul.f32 %v665, %v667
    %v669 = vadd.f32 %v665, %v668
    %vm670 = vweird.f32 %v664
    %vm671 = vweird.f32 %v665
    %vm672 = vmor %vm670, %vm671
    %v673 = vsel %vm672, %v665, %v669
    %v674 = vand.u32 2147483647, %v664
    %vm675 = vcmp.eq.f32.partialorder %v674, 8.507059e+37
    %v676 = vand.u32 %v664, 2147483648
    %v677 = vor.u32 1.1754944e-38, %v676
    %v678 = vsel %vm675, %v677, %v673
    %v679 = vmul.f32 1.0, %v678
    %v680 = vmul.f32 %v659, %v637
    %v681 = vadd.f32 %v600, %v680
    %v682 = vtanh.pop %v681
    %v683 = vsub.f32 1.0, %v679
    %v684 = vmul.f32 %v683, %v682
    %v685 = vmul.f32 %v679, %v591
    %v686 = vadd.f32 %v684, %v685
    %v687 = vpack.c.bf16 %v686, %v686
    %s688 = scalar_lea.vmem %s5, 8
    %689 = vst [vmem:[%s688] sm:$0xf] %v687
    %s690 = smul.u32 3, 3
    %s691 = smul.addr %s690, 8
    %s692 = scalar_lea.vmem [#allocation3], %s691
    %v693 = vld [vmem:[%s692] sm:$0xff]
    %v694 = vld [vmem:[%s692 + $0x8] sm:$0xff]
    %v695 = vld [vmem:[%s692 + $0x10] sm:$0xff]
    %696 = vmatpush.bf16.msra.mxu0 %v385
    %697 = vmatpush.bf16.msra.mxu0 %v382
    %698 = vmatpush.bf16.msra.mxu0 %v379
    %699 = vmatpush.bf16.msra.mxu0 %v376
    %700 = vmatpush.bf16.msra.mxu0 %v373
    %701 = vmatpush.bf16.msra.mxu0 %v370
    %702 = vmatpush.bf16.msra.mxu0 %v367
    %703 = vmatpush.bf16.msra.mxu0 %v364
    %704 = vmatmul.bf16.gmra.mxu0 %v687
    %v705 = vpop.f32.mrf.mxu0
    %v706 = vadd.f32 %v270, %v705
    %v707 = vpop.f32.mrf.mxu0
    %708 = vdwg.mxu0
    %709 = vmatpush.bf16.msra.mxu0 %v386
    %710 = vmatpush.bf16.msra.mxu0 %v383
    %711 = vmatpush.bf16.msra.mxu0 %v380
    %712 = vmatpush.bf16.msra.mxu0 %v377
    %713 = vmatpush.bf16.msra.mxu0 %v374
    %714 = vmatpush.bf16.msra.mxu0 %v371
    %715 = vmatpush.bf16.msra.mxu0 %v368
    %716 = vmatpush.bf16.msra.mxu0 %v365
    %717 = vmatmul.bf16.gmra.mxu0 %v687
    %v718 = vpop.f32.mrf.mxu0
    %v719 = vadd.f32 %v271, %v718
    %v720 = vpop.f32.mrf.mxu0
    %721 = vdwg.mxu0
    %722 = vmatpush.bf16.msra.mxu0 %v387
    %723 = vmatpush.bf16.msra.mxu0 %v384
    %724 = vmatpush.bf16.msra.mxu0 %v381
    %725 = vmatpush.bf16.msra.mxu0 %v378
    %726 = vmatpush.bf16.msra.mxu0 %v375
    %727 = vmatpush.bf16.msra.mxu0 %v372
    %728 = vmatpush.bf16.msra.mxu0 %v369
    %729 = vmatpush.bf16.msra.mxu0 %v366
    %730 = vmatmul.bf16.gmra.mxu0 %v687
    %v731 = vpop.f32.mrf.mxu0
    %v732 = vadd.f32 %v272, %v731
    %v733 = vpop.f32.mrf.mxu0
    %734 = vdwg.mxu0
    %v735 = vadd.f32 %v693, %v706
    %v736 = vxor.u32 %v735, 2147483648
    %v737 = vmul.f32 %v736, 1.442695
    %v738 = vpow.pop %v737
    %v739 = vadd.f32 %v738, 1.0
    %v740 = vrcp.pop %v739
    %v741 = vmul.f32 %v739, %v740
    %v742 = vsub.f32 1.0, %v741
    %v743 = vmul.f32 %v740, %v742
    %v744 = vadd.f32 %v740, %v743
    %vm745 = vweird.f32 %v739
    %vm746 = vweird.f32 %v740
    %vm747 = vmor %vm745, %vm746
    %v748 = vsel %vm747, %v740, %v744
    %v749 = vand.u32 2147483647, %v739
    %vm750 = vcmp.eq.f32.partialorder %v749, 8.507059e+37
    %v751 = vand.u32 %v739, 2147483648
    %v752 = vor.u32 1.1754944e-38, %v751
    %v753 = vsel %vm750, %v752, %v748
    %v754 = vmul.f32 1.0, %v753
    %v755 = vadd.f32 %v694, %v719
    %v756 = vxor.u32 %v755, 2147483648
    %v757 = vmul.f32 %v756, 1.442695
    %v758 = vpow.pop %v757
    %v759 = vadd.f32 %v758, 1.0
    %v760 = vrcp.pop %v759
    %v761 = vmul.f32 %v759, %v760
    %v762 = vsub.f32 1.0, %v761
    %v763 = vmul.f32 %v760, %v762
    %v764 = vadd.f32 %v760, %v763
    %vm765 = vweird.f32 %v759
    %vm766 = vweird.f32 %v760
    %vm767 = vmor %vm765, %vm766
    %v768 = vsel %vm767, %v760, %v764
    %v769 = vand.u32 2147483647, %v759
    %vm770 = vcmp.eq.f32.partialorder %v769, 8.507059e+37
    %v771 = vand.u32 %v759, 2147483648
    %v772 = vor.u32 1.1754944e-38, %v771
    %v773 = vsel %vm770, %v772, %v768
    %v774 = vmul.f32 1.0, %v773
    %v775 = vmul.f32 %v754, %v732
    %v776 = vadd.f32 %v695, %v775
    %v777 = vtanh.pop %v776
    %v778 = vsub.f32 1.0, %v774
    %v779 = vmul.f32 %v778, %v777
    %v780 = vmul.f32 %v774, %v686
    %v781 = vadd.f32 %v779, %v780
    %v782 = vpack.c.bf16 %v781, %v781
    %s783 = scalar_lea.vmem %s5, 12
    %784 = vst [vmem:[%s783] sm:$0xf] %v782
    %s785 = smul.u32 4, 3
    %s786 = smul.addr %s785, 8
    %s787 = scalar_lea.vmem [#allocation3], %s786
    %v788 = vld [vmem:[%s787] sm:$0xff]
    %v789 = vld [vmem:[%s787 + $0x8] sm:$0xff]
    %v790 = vld [vmem:[%s787 + $0x10] sm:$0xff]
    %791 = vmatpush.bf16.msra.mxu0 %v385
    %792 = vmatpush.bf16.msra.mxu0 %v382
    %793 = vmatpush.bf16.msra.mxu0 %v379
    %794 = vmatpush.bf16.msra.mxu0 %v376
    %795 = vmatpush.bf16.msra.mxu0 %v373
    %796 = vmatpush.bf16.msra.mxu0 %v370
    %797 = vmatpush.bf16.msra.mxu0 %v367
    %798 = vmatpush.bf16.msra.mxu0 %v364
    %799 = vmatmul.bf16.gmra.mxu0 %v782
    %v800 = vpop.f32.mrf.mxu0
    %v801 = vadd.f32 %v270, %v800
    %v802 = vpop.f32.mrf.mxu0
    %803 = vdwg.mxu0
    %804 = vmatpush.bf16.msra.mxu0 %v386
    %805 = vmatpush.bf16.msra.mxu0 %v383
    %806 = vmatpush.bf16.msra.mxu0 %v380
    %807 = vmatpush.bf16.msra.mxu0 %v377
    %808 = vmatpush.bf16.msra.mxu0 %v374
    %809 = vmatpush.bf16.msra.mxu0 %v371
    %810 = vmatpush.bf16.msra.mxu0 %v368
    %811 = vmatpush.bf16.msra.mxu0 %v365
    %812 = vmatmul.bf16.gmra.mxu0 %v782
    %v813 = vpop.f32.mrf.mxu0
    %v814 = vadd.f32 %v271, %v813
    %v815 = vpop.f32.mrf.mxu0
    %816 = vdwg.mxu0
    %817 = vmatpush.bf16.msra.mxu0 %v387
    %818 = vmatpush.bf16.msra.mxu0 %v384
    %819 = vmatpush.bf16.msra.mxu0 %v381
    %820 = vmatpush.bf16.msra.mxu0 %v378
    %821 = vmatpush.bf16.msra.mxu0 %v375
    %822 = vmatpush.bf16.msra.mxu0 %v372
    %823 = vmatpush.bf16.msra.mxu0 %v369
    %824 = vmatpush.bf16.msra.mxu0 %v366
    %825 = vmatmul.bf16.gmra.mxu0 %v782
    %v826 = vpop.f32.mrf.mxu0
    %v827 = vadd.f32 %v272, %v826
    %v828 = vpop.f32.mrf.mxu0
    %829 = vdwg.mxu0
    %v830 = vadd.f32 %v788, %v801
    %v831 = vxor.u32 %v830, 2147483648
    %v832 = vmul.f32 %v831, 1.442695
    %v833 = vpow.pop %v832
    %v834 = vadd.f32 %v833, 1.0
    %v835 = vrcp.pop %v834
    %v836 = vmul.f32 %v834, %v835
    %v837 = vsub.f32 1.0, %v836
    %v838 = vmul.f32 %v835, %v837
    %v839 = vadd.f32 %v835, %v838
    %vm840 = vweird.f32 %v834
    %vm841 = vweird.f32 %v835
    %vm842 = vmor %vm840, %vm841
    %v843 = vsel %vm842, %v835, %v839
    %v844 = vand.u32 2147483647, %v834
    %vm845 = vcmp.eq.f32.partialorder %v844, 8.507059e+37
    %v846 = vand.u32 %v834, 2147483648
    %v847 = vor.u32 1.1754944e-38, %v846
    %v848 = vsel %vm845, %v847, %v843
    %v849 = vmul.f32 1.0, %v848
    %v850 = vadd.f32 %v789, %v814
    %v851 = vxor.u32 %v850, 2147483648
    %v852 = vmul.f32 %v851, 1.442695
    %v853 = vpow.pop %v852
    %v854 = vadd.f32 %v853, 1.0
    %v855 = vrcp.pop %v854
    %v856 = vmul.f32 %v854, %v855
    %v857 = vsub.f32 1.0, %v856
    %v858 = vmul.f32 %v855, %v857
    %v859 = vadd.f32 %v855, %v858
    %vm860 = vweird.f32 %v854
    %vm861 = vweird.f32 %v855
    %vm862 = vmor %vm860, %vm861
    %v863 = vsel %vm862, %v855, %v859
    %v864 = vand.u32 2147483647, %v854
    %vm865 = vcmp.eq.f32.partialorder %v864, 8.507059e+37
    %v866 = vand.u32 %v854, 2147483648
    %v867 = vor.u32 1.1754944e-38, %v866
    %v868 = vsel %vm865, %v867, %v863
    %v869 = vmul.f32 1.0, %v868
    %v870 = vmul.f32 %v849, %v827
    %v871 = vadd.f32 %v790, %v870
    %v872 = vtanh.pop %v871
    %v873 = vsub.f32 1.0, %v869
    %v874 = vmul.f32 %v873, %v872
    %v875 = vmul.f32 %v869, %v781
    %v876 = vadd.f32 %v874, %v875
    %v877 = vpack.c.bf16 %v876, %v876
    %s878 = scalar_lea.vmem %s5, 16
    %879 = vst [vmem:[%s878] sm:$0xf] %v877
    %s880 = smul.u32 5, 3
    %s881 = smul.addr %s880, 8
    %s882 = scalar_lea.vmem [#allocation3], %s881
    %v883 = vld [vmem:[%s882] sm:$0xff]
    %v884 = vld [vmem:[%s882 + $0x8] sm:$0xff]
    %v885 = vld [vmem:[%s882 + $0x10] sm:$0xff]
    %886 = vmatpush.bf16.msra.mxu0 %v385
    %887 = vmatpush.bf16.msra.mxu0 %v382
    %888 = vmatpush.bf16.msra.mxu0 %v379
    %889 = vmatpush.bf16.msra.mxu0 %v376
    %890 = vmatpush.bf16.msra.mxu0 %v373
    %891 = vmatpush.bf16.msra.mxu0 %v370
    %892 = vmatpush.bf16.msra.mxu0 %v367
    %893 = vmatpush.bf16.msra.mxu0 %v364
    %894 = vmatmul.bf16.gmra.mxu0 %v877
    %v895 = vpop.f32.mrf.mxu0
    %v896 = vadd.f32 %v270, %v895
    %v897 = vpop.f32.mrf.mxu0
    %898 = vdwg.mxu0
    %899 = vmatpush.bf16.msra.mxu0 %v386
    %900 = vmatpush.bf16.msra.mxu0 %v383
    %901 = vmatpush.bf16.msra.mxu0 %v380
    %902 = vmatpush.bf16.msra.mxu0 %v377
    %903 = vmatpush.bf16.msra.mxu0 %v374
    %904 = vmatpush.bf16.msra.mxu0 %v371
    %905 = vmatpush.bf16.msra.mxu0 %v368
    %906 = vmatpush.bf16.msra.mxu0 %v365
    %907 = vmatmul.bf16.gmra.mxu0 %v877
    %v908 = vpop.f32.mrf.mxu0
    %v909 = vadd.f32 %v271, %v908
    %v910 = vpop.f32.mrf.mxu0
    %911 = vdwg.mxu0
    %912 = vmatpush.bf16.msra.mxu0 %v387
    %913 = vmatpush.bf16.msra.mxu0 %v384
    %914 = vmatpush.bf16.msra.mxu0 %v381
    %915 = vmatpush.bf16.msra.mxu0 %v378
    %916 = vmatpush.bf16.msra.mxu0 %v375
    %917 = vmatpush.bf16.msra.mxu0 %v372
    %918 = vmatpush.bf16.msra.mxu0 %v369
    %919 = vmatpush.bf16.msra.mxu0 %v366
    %920 = vmatmul.bf16.gmra.mxu0 %v877
    %v921 = vpop.f32.mrf.mxu0
    %v922 = vadd.f32 %v272, %v921
    %v923 = vpop.f32.mrf.mxu0
    %924 = vdwg.mxu0
    %v925 = vadd.f32 %v883, %v896
    %v926 = vxor.u32 %v925, 2147483648
    %v927 = vmul.f32 %v926, 1.442695
    %v928 = vpow.pop %v927
    %v929 = vadd.f32 %v928, 1.0
    %v930 = vrcp.pop %v929
    %v931 = vmul.f32 %v929, %v930
    %v932 = vsub.f32 1.0, %v931
    %v933 = vmul.f32 %v930, %v932
    %v934 = vadd.f32 %v930, %v933
    %vm935 = vweird.f32 %v929
    %vm936 = vweird.f32 %v930
    %vm937 = vmor %vm935, %vm936
    %v938 = vsel %vm937, %v930, %v934
    %v939 = vand.u32 2147483647, %v929
    %vm940 = vcmp.eq.f32.partialorder %v939, 8.507059e+37
    %v941 = vand.u32 %v929, 2147483648
    %v942 = vor.u32 1.1754944e-38, %v941
    %v943 = vsel %vm940, %v942, %v938
    %v944 = vmul.f32 1.0, %v943
    %v945 = vadd.f32 %v884, %v909
    %v946 = vxor.u32 %v945, 2147483648
    %v947 = vmul.f32 %v946, 1.442695
    %v948 = vpow.pop %v947
    %v949 = vadd.f32 %v948, 1.0
    %v950 = vrcp.pop %v949
    %v951 = vmul.f32 %v949, %v950
    %v952 = vsub.f32 1.0, %v951
    %v953 = vmul.f32 %v950, %v952
    %v954 = vadd.f32 %v950, %v953
    %vm955 = vweird.f32 %v949
    %vm956 = vweird.f32 %v950
    %vm957 = vmor %vm955, %vm956
    %v958 = vsel %vm957, %v950, %v954
    %v959 = vand.u32 2147483647, %v949
    %vm960 = vcmp.eq.f32.partialorder %v959, 8.507059e+37
    %v961 = vand.u32 %v949, 2147483648
    %v962 = vor.u32 1.1754944e-38, %v961
    %v963 = vsel %vm960, %v962, %v958
    %v964 = vmul.f32 1.0, %v963
    %v965 = vmul.f32 %v944, %v922
    %v966 = vadd.f32 %v885, %v965
    %v967 = vtanh.pop %v966
    %v968 = vsub.f32 1.0, %v964
    %v969 = vmul.f32 %v968, %v967
    %v970 = vmul.f32 %v964, %v876
    %v971 = vadd.f32 %v969, %v970
    %v972 = vpack.c.bf16 %v971, %v971
    %s973 = scalar_lea.vmem %s5, 20
    %974 = vst [vmem:[%s973] sm:$0xf] %v972
    %s975 = smul.u32 6, 3
    %s976 = smul.addr %s975, 8
    %s977 = scalar_lea.vmem [#allocation3], %s976
    %v978 = vld [vmem:[%s977] sm:$0xff]
    %v979 = vld [vmem:[%s977 + $0x8] sm:$0xff]
    %v980 = vld [vmem:[%s977 + $0x10] sm:$0xff]
    %981 = vmatpush.bf16.msra.mxu0 %v385
    %982 = vmatpush.bf16.msra.mxu0 %v382
    %983 = vmatpush.bf16.msra.mxu0 %v379
    %984 = vmatpush.bf16.msra.mxu0 %v376
    %985 = vmatpush.bf16.msra.mxu0 %v373
    %986 = vmatpush.bf16.msra.mxu0 %v370
    %987 = vmatpush.bf16.msra.mxu0 %v367
    %988 = vmatpush.bf16.msra.mxu0 %v364
    %989 = vmatmul.bf16.gmra.mxu0 %v972
    %v990 = vpop.f32.mrf.mxu0
    %v991 = vadd.f32 %v270, %v990
    %v992 = vpop.f32.mrf.mxu0
    %993 = vdwg.mxu0
    %994 = vmatpush.bf16.msra.mxu0 %v386
    %995 = vmatpush.bf16.msra.mxu0 %v383
    %996 = vmatpush.bf16.msra.mxu0 %v380
    %997 = vmatpush.bf16.msra.mxu0 %v377
    %998 = vmatpush.bf16.msra.mxu0 %v374
    %999 = vmatpush.bf16.msra.mxu0 %v371
    %1000 = vmatpush.bf16.msra.mxu0 %v368
    %1001 = vmatpush.bf16.msra.mxu0 %v365
    %1002 = vmatmul.bf16.gmra.mxu0 %v972
    %v1003 = vpop.f32.mrf.mxu0
    %v1004 = vadd.f32 %v271, %v1003
    %v1005 = vpop.f32.mrf.mxu0
    %1006 = vdwg.mxu0
    %1007 = vmatpush.bf16.msra.mxu0 %v387
    %1008 = vmatpush.bf16.msra.mxu0 %v384
    %1009 = vmatpush.bf16.msra.mxu0 %v381
    %1010 = vmatpush.bf16.msra.mxu0 %v378
    %1011 = vmatpush.bf16.msra.mxu0 %v375
    %1012 = vmatpush.bf16.msra.mxu0 %v372
    %1013 = vmatpush.bf16.msra.mxu0 %v369
    %1014 = vmatpush.bf16.msra.mxu0 %v366
    %1015 = vmatmul.bf16.gmra.mxu0 %v972
    %v1016 = vpop.f32.mrf.mxu0
    %v1017 = vadd.f32 %v272, %v1016
    %v1018 = vpop.f32.mrf.mxu0
    %1019 = vdwg.mxu0
    %v1020 = vadd.f32 %v978, %v991
    %v1021 = vxor.u32 %v1020, 2147483648
    %v1022 = vmul.f32 %v1021, 1.442695
    %v1023 = vpow.pop %v1022
    %v1024 = vadd.f32 %v1023, 1.0
    %v1025 = vrcp.pop %v1024
    %v1026 = vmul.f32 %v1024, %v1025
    %v1027 = vsub.f32 1.0, %v1026
    %v1028 = vmul.f32 %v1025, %v1027
    %v1029 = vadd.f32 %v1025, %v1028
    %vm1030 = vweird.f32 %v1024
    %vm1031 = vweird.f32 %v1025
    %vm1032 = vmor %vm1030, %vm1031
    %v1033 = vsel %vm1032, %v1025, %v1029
    %v1034 = vand.u32 2147483647, %v1024
    %vm1035 = vcmp.eq.f32.partialorder %v1034, 8.507059e+37
    %v1036 = vand.u32 %v1024, 2147483648
    %v1037 = vor.u32 1.1754944e-38, %v1036
    %v1038 = vsel %vm1035, %v1037, %v1033
    %v1039 = vmul.f32 1.0, %v1038
    %v1040 = vadd.f32 %v979, %v1004
    %v1041 = vxor.u32 %v1040, 2147483648
    %v1042 = vmul.f32 %v1041, 1.442695
    %v1043 = vpow.pop %v1042
    %v1044 = vadd.f32 %v1043, 1.0
    %v1045 = vrcp.pop %v1044
    %v1046 = vmul.f32 %v1044, %v1045
    %v1047 = vsub.f32 1.0, %v1046
    %v1048 = vmul.f32 %v1045, %v1047
    %v1049 = vadd.f32 %v1045, %v1048
    %vm1050 = vweird.f32 %v1044
    %vm1051 = vweird.f32 %v1045
    %vm1052 = vmor %vm1050, %vm1051
    %v1053 = vsel %vm1052, %v1045, %v1049
    %v1054 = vand.u32 2147483647, %v1044
    %vm1055 = vcmp.eq.f32.partialorder %v1054, 8.507059e+37
    %v1056 = vand.u32 %v1044, 2147483648
    %v1057 = vor.u32 1.1754944e-38, %v1056
    %v1058 = vsel %vm1055, %v1057, %v1053
    %v1059 = vmul.f32 1.0, %v1058
    %v1060 = vmul.f32 %v1039, %v1017
    %v1061 = vadd.f32 %v980, %v1060
    %v1062 = vtanh.pop %v1061
    %v1063 = vsub.f32 1.0, %v1059
    %v1064 = vmul.f32 %v1063, %v1062
    %v1065 = vmul.f32 %v1059, %v971
    %v1066 = vadd.f32 %v1064, %v1065
    %v1067 = vpack.c.bf16 %v1066, %v1066
    %s1068 = scalar_lea.vmem %s5, 24
    %1069 = vst [vmem:[%s1068] sm:$0xf] %v1067
    %s1070 = smul.u32 7, 3
    %s1071 = smul.addr %s1070, 8
    %s1072 = scalar_lea.vmem [#allocation3], %s1071
    %v1073 = vld [vmem:[%s1072] sm:$0xff]
    %v1074 = vld [vmem:[%s1072 + $0x8] sm:$0xff]
    %v1075 = vld [vmem:[%s1072 + $0x10] sm:$0xff]
    %1076 = vmatpush.bf16.msra.mxu0 %v385
    %1077 = vmatpush.bf16.msra.mxu0 %v382
    %1078 = vmatpush.bf16.msra.mxu0 %v379
    %1079 = vmatpush.bf16.msra.mxu0 %v376
    %1080 = vmatpush.bf16.msra.mxu0 %v373
    %1081 = vmatpush.bf16.msra.mxu0 %v370
    %1082 = vmatpush.bf16.msra.mxu0 %v367
    %1083 = vmatpush.bf16.msra.mxu0 %v364
    %1084 = vmatmul.bf16.gmra.mxu0 %v1067
    %v1085 = vpop.f32.mrf.mxu0
    %v1086 = vadd.f32 %v270, %v1085
    %v1087 = vpop.f32.mrf.mxu0
    %1088 = vdwg.mxu0
    %1089 = vmatpush.bf16.msra.mxu0 %v386
    %1090 = vmatpush.bf16.msra.mxu0 %v383
    %1091 = vmatpush.bf16.msra.mxu0 %v380
    %1092 = vmatpush.bf16.msra.mxu0 %v377
    %1093 = vmatpush.bf16.msra.mxu0 %v374
    %1094 = vmatpush.bf16.msra.mxu0 %v371
    %1095 = vmatpush.bf16.msra.mxu0 %v368
    %1096 = vmatpush.bf16.msra.mxu0 %v365
    %1097 = vmatmul.bf16.gmra.mxu0 %v1067
    %v1098 = vpop.f32.mrf.mxu0
    %v1099 = vadd.f32 %v271, %v1098
    %v1100 = vpop.f32.mrf.mxu0
    %1101 = vdwg.mxu0
    %1102 = vmatpush.bf16.msra.mxu0 %v387
    %1103 = vmatpush.bf16.msra.mxu0 %v384
    %1104 = vmatpush.bf16.msra.mxu0 %v381
    %1105 = vmatpush.bf16.msra.mxu0 %v378
    %1106 = vmatpush.bf16.msra.mxu0 %v375
    %1107 = vmatpush.bf16.msra.mxu0 %v372
    %1108 = vmatpush.bf16.msra.mxu0 %v369
    %1109 = vmatpush.bf16.msra.mxu0 %v366
    %1110 = vmatmul.bf16.gmra.mxu0 %v1067
    %v1111 = vpop.f32.mrf.mxu0
    %v1112 = vadd.f32 %v272, %v1111
    %v1113 = vpop.f32.mrf.mxu0
    %1114 = vdwg.mxu0
    %v1115 = vadd.f32 %v1073, %v1086
    %v1116 = vxor.u32 %v1115, 2147483648
    %v1117 = vmul.f32 %v1116, 1.442695
    %v1118 = vpow.pop %v1117
    %v1119 = vadd.f32 %v1118, 1.0
    %v1120 = vrcp.pop %v1119
    %v1121 = vmul.f32 %v1119, %v1120
    %v1122 = vsub.f32 1.0, %v1121
    %v1123 = vmul.f32 %v1120, %v1122
    %v1124 = vadd.f32 %v1120, %v1123
    %vm1125 = vweird.f32 %v1119
    %vm1126 = vweird.f32 %v1120
    %vm1127 = vmor %vm1125, %vm1126
    %v1128 = vsel %vm1127, %v1120, %v1124
    %v1129 = vand.u32 2147483647, %v1119
    %vm1130 = vcmp.eq.f32.partialorder %v1129, 8.507059e+37
    %v1131 = vand.u32 %v1119, 2147483648
    %v1132 = vor.u32 1.1754944e-38, %v1131
    %v1133 = vsel %vm1130, %v1132, %v1128
    %v1134 = vmul.f32 1.0, %v1133
    %v1135 = vadd.f32 %v1074, %v1099
    %v1136 = vxor.u32 %v1135, 2147483648
    %v1137 = vmul.f32 %v1136, 1.442695
    %v1138 = vpow.pop %v1137
    %v1139 = vadd.f32 %v1138, 1.0
    %v1140 = vrcp.pop %v1139
    %v1141 = vmul.f32 %v1139, %v1140
    %v1142 = vsub.f32 1.0, %v1141
    %v1143 = vmul.f32 %v1140, %v1142
    %v1144 = vadd.f32 %v1140, %v1143
    %vm1145 = vweird.f32 %v1139
    %vm1146 = vweird.f32 %v1140
    %vm1147 = vmor %vm1145, %vm1146
    %v1148 = vsel %vm1147, %v1140, %v1144
    %v1149 = vand.u32 2147483647, %v1139
    %vm1150 = vcmp.eq.f32.partialorder %v1149, 8.507059e+37
    %v1151 = vand.u32 %v1139, 2147483648
    %v1152 = vor.u32 1.1754944e-38, %v1151
    %v1153 = vsel %vm1150, %v1152, %v1148
    %v1154 = vmul.f32 1.0, %v1153
    %v1155 = vmul.f32 %v1134, %v1112
    %v1156 = vadd.f32 %v1075, %v1155
    %v1157 = vtanh.pop %v1156
    %v1158 = vsub.f32 1.0, %v1154
    %v1159 = vmul.f32 %v1158, %v1157
    %v1160 = vmul.f32 %v1154, %v1066
    %v1161 = vadd.f32 %v1159, %v1160
    %v1162 = vpack.c.bf16 %v1161, %v1161
    %s1163 = scalar_lea.vmem %s5, 28
    %1164 = vst [vmem:[%s1163] sm:$0xf] %v1162
    %1165 = vst [vmem:[#allocation2] sm:$0xff] %v1161
    // Predicated region
    $region34: #{gru_model_forward.2} parent=1 // pred_check
      _
    $region35: #{gru_model_forward.2} parent=1 // pred_check_branch
      %1167 = sbr.rel (0) target = $region37
    $region36: #{gru_model_forward.2} parent=1 // pred_region
      _
    $region37: #{gru_model_forward.2} parent=1 // pred_fallthru
      _
    // Predicated region
    $region38: #{gru_model_forward.2} parent=1 // pred_check
      _
    $region39: #{gru_model_forward.2} parent=1 // pred_check_branch
      %1169 = sbr.rel (0) target = $region41
    $region40: #{gru_model_forward.2} parent=1 // pred_region
      _
    $region41: #{gru_model_forward.2} parent=1 // pred_fallthru
      _
    %1170 = vsyncpa [#allocation5], 1
    %1171 = vsyncpa [#allocation7], 1

// kernel: gru_model_forward.3
$region0: #{gru_model_forward.3}
  #allocation0 [shape = 'u32[]', space=smem, size = 0x4, offset = 0x4, fixed_abs, tag = 'smem constant byte address 0x4 - core index']
  #allocation1 [shape = 'u32[72,128]{1,0:T(1,128)}', space=vmem, size = 0x9000, scoped, tag = 'internal scratch']
  #allocation2 [shape = 'f32[8,128]{1,0:T(8,128)}', space=vmem, size = 0x1000, scoped, tag = 'scratch operand']
  #allocation3 [shape = 'f32[64,384]{1,0:T(8,128)}', space=vmem, size = 0x18000, scoped, tag = 'scratch operand']
  #allocation4 [shape = 'f32[64,128]{1,0:T(8,128)}', space=vmem, size = 0x8000, scoped, tag = 'scratch operand']
  %s0 = inlined_call_operand.vmem [shape: bf16[8,8,128], index: 0, kind: input, shape index: {}]
  %s1 = inlined_call_operand.hbm [shape: bf16[128,384], index: 1, kind: input, shape index: {}]
  %s2 = inlined_call_operand.hbm [shape: bf16[128,384], index: 2, kind: input, shape index: {}]
  %s3 = inlined_call_operand.vmem [shape: f32[1,384], index: 3, kind: input, shape index: {}]
  %s4 = inlined_call_operand.hbm [shape: f32[1,384], index: 4, kind: input, shape index: {}]
  %s5 = inlined_call_operand.vmem [shape: bf16[128,128], index: 5, kind: input, shape index: {}]
  %s6 = inlined_call_operand.hbm [shape: f32[1,128], index: 6, kind: input, shape index: {}]
  %s7 = inlined_call_operand.vmem [shape: f32[8,8,128], index: 7, kind: output, shape index: {}]
  %s8 = sld [smem:[#allocation0]]
  $region58: #{gru_model_forward.3} parent=0
    _
  %s10 = ssub.s32 1, %s8
  %s11 = scalar_select 0, %s10, %s8
  $region1: #{gru_model_forward.3} parent=0
    #allocation5 [shape = 'u8[98304]{0}', space=vmem, size = 0x18000, scoped, tag = 'input window, operand 1, single buffered']
    #allocation6 [shape = 's32[1]{0}', space=sflag, size = 0x4, scoped, tag = 'scoped memory for gru_model_forward.3']
    #allocation7 [shape = 'u8[98304]{0}', space=vmem, size = 0x18000, scoped, tag = 'input window, operand 2, single buffered']
    #allocation8 [shape = 's32[1]{0}', space=sflag, size = 0x4, scoped, tag = 'scoped memory for gru_model_forward.3']
    #allocation9 [shape = 'u8[1536]{0}', space=vmem, size = 0x800, scoped, tag = 'input window, operand 4, single buffered']
    #allocation10 [shape = 'u8[512]{0}', space=vmem, size = 0x400, scoped, tag = 'input window, operand 6, single buffered']
    #allocation11 [shape = 's32[1]{0}', space=sflag, size = 0x4, scoped, tag = 'scoped memory for gru_model_forward.3']
    %12 = vsyncpa [#allocation6], 0
    %13 = vsyncpa [#allocation8], 0
    %14 = vsyncpa [#allocation11], 0
    // Predicated region
    $region2: #{gru_model_forward.3} parent=1 // pred_check
      _
    $region3: #{gru_model_forward.3} parent=1 // pred_check_branch
      %16 = sbr.rel (0) target = $region5
    $region4: #{gru_model_forward.3} parent=1 // pred_region
      _
    $region5: #{gru_model_forward.3} parent=1 // pred_fallthru
      _
    // Predicated region
    $region6: #{gru_model_forward.3} parent=1 // pred_check
      _
    $region7: #{gru_model_forward.3} parent=1 // pred_check_branch
      %18 = sbr.rel (0) target = $region9
    $region8: #{gru_model_forward.3} parent=1 // pred_region
      %20 = vsyncadd [#allocation6], 0
      %s21 = sshll.u32 %s1, 4
      %s22 = int_to_ptr.hbm [resolvable:$true] %s21
      %s23 = sshll.u32 [#allocation5], 4
      %s24 = int_to_ptr.vmem [resolvable:$true] %s23
      %29 = dma.hbm_to_vmem [thread:$0]  %s22, 3072, %s24, [#allocation6], 192, 192, 12
    $region9: #{gru_model_forward.3} parent=1 // pred_fallthru
      _
    // Predicated region
    $region10: #{gru_model_forward.3} parent=1 // pred_check
      _
    $region11: #{gru_model_forward.3} parent=1 // pred_check_branch
      %31 = sbr.rel (0) target = $region13
    $region12: #{gru_model_forward.3} parent=1 // pred_region
      %33 = vsyncadd [#allocation8], 0
      %s34 = sshll.u32 %s2, 4
      %s35 = int_to_ptr.hbm [resolvable:$true] %s34
      %s36 = sshll.u32 [#allocation7], 4
      %s37 = int_to_ptr.vmem [resolvable:$true] %s36
      %42 = dma.hbm_to_vmem [thread:$0]  %s35, 3072, %s37, [#allocation8], 192, 192, 12
    $region13: #{gru_model_forward.3} parent=1 // pred_fallthru
      _
    // Predicated region
    $region14: #{gru_model_forward.3} parent=1 // pred_check
      _
    $region15: #{gru_model_forward.3} parent=1 // pred_check_branch
      %44 = sbr.rel (0) target = $region17
    $region16: #{gru_model_forward.3} parent=1 // pred_region
      _
    $region17: #{gru_model_forward.3} parent=1 // pred_fallthru
      _
    // Predicated region
    $region18: #{gru_model_forward.3} parent=1 // pred_check
      _
    $region19: #{gru_model_forward.3} parent=1 // pred_check_branch
      %46 = sbr.rel (0) target = $region21
    $region20: #{gru_model_forward.3} parent=1 // pred_region
      %48 = vsyncadd [#allocation8], 0
      %s50 = sshll.u32 %s4, 4
      %s51 = int_to_ptr.hbm [resolvable:$true] %s50
      %s52 = sshll.u32 [#allocation9], 4
      %s53 = int_to_ptr.vmem [resolvable:$true] %s52
      %55 = dma.hbm_to_vmem [thread:$0]  %s51, 48, %s53, [#allocation8]
    $region21: #{gru_model_forward.3} parent=1 // pred_fallthru
      _
    // Predicated region
    $region22: #{gru_model_forward.3} parent=1 // pred_check
      _
    $region23: #{gru_model_forward.3} parent=1 // pred_check_branch
      %57 = sbr.rel (0) target = $region25
    $region24: #{gru_model_forward.3} parent=1 // pred_region
      _
    $region25: #{gru_model_forward.3} parent=1 // pred_fallthru
      _
    // Predicated region
    $region26: #{gru_model_forward.3} parent=1 // pred_check
      _
    $region27: #{gru_model_forward.3} parent=1 // pred_check_branch
      %59 = sbr.rel (0) target = $region29
    $region28: #{gru_model_forward.3} parent=1 // pred_region
      %61 = vsyncadd [#allocation11], 0
      %s63 = sshll.u32 %s6, 4
      %s64 = int_to_ptr.hbm [resolvable:$true] %s63
      %s65 = sshll.u32 [#allocation10], 4
      %s66 = int_to_ptr.vmem [resolvable:$true] %s65
      %68 = dma.hbm_to_vmem [thread:$0]  %s64, 16, %s66, [#allocation11]
    $region29: #{gru_model_forward.3} parent=1 // pred_fallthru
      _
    // Predicated region
    $region30: #{gru_model_forward.3} parent=1 // pred_check
      _
    $region31: #{gru_model_forward.3} parent=1 // pred_check_branch
      %70 = sbr.rel (0) target = $region33
    $region32: #{gru_model_forward.3} parent=1 // pred_region
      %72 = dma.done [#allocation6], 3072
    $region33: #{gru_model_forward.3} parent=1 // pred_fallthru
      _
    // Predicated region
    $region34: #{gru_model_forward.3} parent=1 // pred_check
      _
    $region35: #{gru_model_forward.3} parent=1 // pred_check_branch
      %74 = sbr.rel (0) target = $region37
    $region36: #{gru_model_forward.3} parent=1 // pred_region
      %76 = dma.done [#allocation8], 3072
    $region37: #{gru_model_forward.3} parent=1 // pred_fallthru
      _
    // Predicated region
    $region38: #{gru_model_forward.3} parent=1 // pred_check
      _
    $region39: #{gru_model_forward.3} parent=1 // pred_check_branch
      %78 = sbr.rel (0) target = $region41
    $region40: #{gru_model_forward.3} parent=1 // pred_region
      %80 = dma.done [#allocation8], 48
    $region41: #{gru_model_forward.3} parent=1 // pred_fallthru
      _
    // Predicated region
    $region42: #{gru_model_forward.3} parent=1 // pred_check
      _
    $region43: #{gru_model_forward.3} parent=1 // pred_check_branch
      %82 = sbr.rel (0) target = $region45
    $region44: #{gru_model_forward.3} parent=1 // pred_region
      %84 = dma.done [#allocation11], 16
    $region45: #{gru_model_forward.3} parent=1 // pred_fallthru
      _
    %p85 = scmp.eq.s32.totalorder 0, 0
    // Predicated region
    $region46: #{gru_model_forward.3} parent=1 // pred_check
      %p86 = pneg %p85
    $region47: #{gru_model_forward.3} parent=1 // pred_check_branch
      %88 = sbr.rel (%p86) target = $region49
    $region48: #{gru_model_forward.3} parent=1 // pred_region
      %89 = vst [vmem:[#allocation2] sm:$0xff] 0.0
    $region49: #{gru_model_forward.3} parent=1 // pred_fallthru
      _
    %v90 = vld [vmem:[%s0] sm:$0xf]
    %v91 = vld [vmem:[%s0 + $0x4] sm:$0xf]
    %v92 = vld [vmem:[%s0 + $0x8] sm:$0xf]
    %v93 = vld [vmem:[%s0 + $0xc] sm:$0xf]
    %v94 = vld [vmem:[%s0 + $0x10] sm:$0xf]
    %v95 = vld [vmem:[%s0 + $0x14] sm:$0xf]
    %v96 = vld [vmem:[%s0 + $0x18] sm:$0xf]
    %v97 = vld [vmem:[%s0 + $0x1c] sm:$0xf]
    %v98 = vld [vmem:[#allocation5] sm:$0xff]
    %v99 = vld [vmem:[#allocation5 + $0x8] sm:$0xf]
    %v100 = vld [vmem:[#allocation5 + $0xc] sm:$0xff]
    %v101 = vld [vmem:[#allocation5 + $0x14] sm:$0xf]
    %v102 = vld [vmem:[#allocation5 + $0x18] sm:$0xff]
    %v103 = vld [vmem:[#allocation5 + $0x20] sm:$0xf]
    %v104 = vld [vmem:[#allocation5 + $0x24] sm:$0xff]
    %v105 = vld [vmem:[#allocation5 + $0x2c] sm:$0xf]
    %v106 = vld [vmem:[#allocation5 + $0x30] sm:$0xff]
    %v107 = vld [vmem:[#allocation5 + $0x38] sm:$0xf]
    %v108 = vld [vmem:[#allocation5 + $0x3c] sm:$0xff]
    %v109 = vld [vmem:[#allocation5 + $0x44] sm:$0xf]
    %v110 = vld [vmem:[#allocation5 + $0x48] sm:$0xff]
    %v111 = vld [vmem:[#allocation5 + $0x50] sm:$0xf]
    %v112 = vld [vmem:[#allocation5 + $0x54] sm:$0xff]
    %v113 = vld [vmem:[#allocation5 + $0x5c] sm:$0xf]
    %v114 = vld [vmem:[#allocation5 + $0x60] sm:$0xff]
    %v115 = vld [vmem:[#allocation5 + $0x68] sm:$0xf]
    %v116 = vld [vmem:[#allocation5 + $0x6c] sm:$0xff]
    %v117 = vld [vmem:[#allocation5 + $0x74] sm:$0xf]
    %v118 = vld [vmem:[#allocation5 + $0x78] sm:$0xff]
    %v119 = vld [vmem:[#allocation5 + $0x80] sm:$0xf]
    %v120 = vld [vmem:[#allocation5 + $0x84] sm:$0xff]
    %v121 = vld [vmem:[#allocation5 + $0x8c] sm:$0xf]
    %v122 = vld [vmem:[#allocation5 + $0x90] sm:$0xff]
    %v123 = vld [vmem:[#allocation5 + $0x98] sm:$0xf]
    %v124 = vld [vmem:[#allocation5 + $0x9c] sm:$0xff]
    %v125 = vld [vmem:[#allocation5 + $0xa4] sm:$0xf]
    %v126 = vld [vmem:[#allocation5 + $0xa8] sm:$0xff]
    %v127 = vld [vmem:[#allocation5 + $0xb0] sm:$0xf]
    %v128 = vld [vmem:[#allocation5 + $0xb4] sm:$0xff]
    %v129 = vld [vmem:[#allocation5 + $0xbc] sm:$0xf]
    %v130 = vld [vmem:[%s3] sm:$0x7]
    %v132 = vperm.slane %v130, 0
    %v133 = vperm.slane %v130, 1
    %v134 = vperm.slane %v130, 2
    %v146 = vunpack.c.l.b16 %v90
    %v147 = vunpack.c.l.b16 %v91
    %v148 = vunpack.c.l.b16 %v92
    %v149 = vunpack.c.l.b16 %v93
    %v150 = vunpack.c.l.b16 %v94
    %v151 = vunpack.c.l.b16 %v95
    %v152 = vunpack.c.l.b16 %v96
    %v153 = vunpack.c.l.b16 %v97
    %v154 = vpack.c.b16 %v147, %v146
    %v155 = vpack.c.b16 %v149, %v148
    %v156 = vpack.c.b16 %v151, %v150
    %v157 = vpack.c.b16 %v153, %v152
    %v194 = vunpack.c.l.b16 %v98
    %v195 = vunpack.c.h.b16 %v98
    %v196 = vunpack.c.l.b16 %v99
    %v197 = vunpack.c.l.b16 %v100
    %v198 = vunpack.c.h.b16 %v100
    %v199 = vunpack.c.l.b16 %v101
    %v200 = vunpack.c.l.b16 %v102
    %v201 = vunpack.c.h.b16 %v102
    %v202 = vunpack.c.l.b16 %v103
    %v203 = vunpack.c.l.b16 %v104
    %v204 = vunpack.c.h.b16 %v104
    %v205 = vunpack.c.l.b16 %v105
    %v206 = vunpack.c.l.b16 %v106
    %v207 = vunpack.c.h.b16 %v106
    %v208 = vunpack.c.l.b16 %v107
    %v209 = vunpack.c.l.b16 %v108
    %v210 = vunpack.c.h.b16 %v108
    %v211 = vunpack.c.l.b16 %v109
    %v212 = vunpack.c.l.b16 %v110
    %v213 = vunpack.c.h.b16 %v110
    %v214 = vunpack.c.l.b16 %v111
    %v215 = vunpack.c.l.b16 %v112
    %v216 = vunpack.c.h.b16 %v112
    %v217 = vunpack.c.l.b16 %v113
    %v218 = vunpack.c.l.b16 %v114
    %v219 = vunpack.c.h.b16 %v114
    %v220 = vunpack.c.l.b16 %v115
    %v221 = vunpack.c.l.b16 %v116
    %v222 = vunpack.c.h.b16 %v116
    %v223 = vunpack.c.l.b16 %v117
    %v224 = vunpack.c.l.b16 %v118
    %v225 = vunpack.c.h.b16 %v118
    %v226 = vunpack.c.l.b16 %v119
    %v227 = vunpack.c.l.b16 %v120
    %v228 = vunpack.c.h.b16 %v120
    %v229 = vunpack.c.l.b16 %v121
    %v230 = vunpack.c.l.b16 %v122
    %v231 = vunpack.c.h.b16 %v122
    %v232 = vunpack.c.l.b16 %v123
    %v233 = vunpack.c.l.b16 %v124
    %v234 = vunpack.c.h.b16 %v124
    %v235 = vunpack.c.l.b16 %v125
    %v236 = vunpack.c.l.b16 %v126
    %v237 = vunpack.c.h.b16 %v126
    %v238 = vunpack.c.l.b16 %v127
    %v239 = vunpack.c.l.b16 %v128
    %v240 = vunpack.c.h.b16 %v128
    %v241 = vunpack.c.l.b16 %v129
    %v242 = vpack.c.b16 %v197, %v194
    %v243 = vpack.c.b16 %v198, %v195
    %v244 = vpack.c.b16 %v199, %v196
    %v245 = vpack.c.b16 %v203, %v200
    %v246 = vpack.c.b16 %v204, %v201
    %v247 = vpack.c.b16 %v205, %v202
    %v248 = vpack.c.b16 %v209, %v206
    %v249 = vpack.c.b16 %v210, %v207
    %v250 = vpack.c.b16 %v211, %v208
    %v251 = vpack.c.b16 %v215, %v212
    %v252 = vpack.c.b16 %v216, %v213
    %v253 = vpack.c.b16 %v217, %v214
    %v254 = vpack.c.b16 %v221, %v218
    %v255 = vpack.c.b16 %v222, %v219
    %v256 = vpack.c.b16 %v223, %v220
    %v257 = vpack.c.b16 %v227, %v224
    %v258 = vpack.c.b16 %v228, %v225
    %v259 = vpack.c.b16 %v229, %v226
    %v260 = vpack.c.b16 %v233, %v230
    %v261 = vpack.c.b16 %v234, %v231
    %v262 = vpack.c.b16 %v235, %v232
    %v263 = vpack.c.b16 %v239, %v236
    %v264 = vpack.c.b16 %v240, %v237
    %v265 = vpack.c.b16 %v241, %v238
    %290 = vmatpush.bf16.msra.mxu0 %v263
    %291 = vmatpush.bf16.msra.mxu0 %v260
    %292 = vmatpush.bf16.msra.mxu0 %v257
    %293 = vmatpush.bf16.msra.mxu0 %v254
    %294 = vmatpush.bf16.msra.mxu0 %v251
    %295 = vmatpush.bf16.msra.mxu0 %v248
    %296 = vmatpush.bf16.msra.mxu0 %v245
    %297 = vmatpush.bf16.msra.mxu0 %v242
    %298 = vmatmul.bf16.gmra.mxu0 %v154
    %v299 = vpop.f32.mrf.mxu0
    %v300 = vadd.f32 %v132, %v299
    %v301 = vpop.f32.mrf.mxu0
    %v302 = vadd.f32 %v132, %v301
    %303 = vmatmul.bf16.gmra.mxu0 %v155
    %v304 = vpop.f32.mrf.mxu0
    %v305 = vadd.f32 %v132, %v304
    %v306 = vpop.f32.mrf.mxu0
    %v307 = vadd.f32 %v132, %v306
    %308 = vmatmul.bf16.gmra.mxu0 %v156
    %v309 = vpop.f32.mrf.mxu0
    %v310 = vadd.f32 %v132, %v309
    %v311 = vpop.f32.mrf.mxu0
    %v312 = vadd.f32 %v132, %v311
    %313 = vmatmul.bf16.gmra.mxu0 %v157
    %v314 = vpop.f32.mrf.mxu0
    %v315 = vadd.f32 %v132, %v314
    %v316 = vpop.f32.mrf.mxu0
    %v317 = vadd.f32 %v132, %v316
    %318 = vdwg.mxu0
    %319 = vmatpush.bf16.msra.mxu0 %v264
    %320 = vmatpush.bf16.msra.mxu0 %v261
    %321 = vmatpush.bf16.msra.mxu0 %v258
    %322 = vmatpush.bf16.msra.mxu0 %v255
    %323 = vmatpush.bf16.msra.mxu0 %v252
    %324 = vmatpush.bf16.msra.mxu0 %v249
    %325 = vmatpush.bf16.msra.mxu0 %v246
    %326 = vmatpush.bf16.msra.mxu0 %v243
    %327 = vmatmul.bf16.gmra.mxu0 %v154
    %v328 = vpop.f32.mrf.mxu0
    %v329 = vadd.f32 %v133, %v328
    %v330 = vpop.f32.mrf.mxu0
    %v331 = vadd.f32 %v133, %v330
    %332 = vmatmul.bf16.gmra.mxu0 %v155
    %v333 = vpop.f32.mrf.mxu0
    %v334 = vadd.f32 %v133, %v333
    %v335 = vpop.f32.mrf.mxu0
    %v336 = vadd.f32 %v133, %v335
    %337 = vmatmul.bf16.gmra.mxu0 %v156
    %v338 = vpop.f32.mrf.mxu0
    %v339 = vadd.f32 %v133, %v338
    %v340 = vpop.f32.mrf.mxu0
    %v341 = vadd.f32 %v133, %v340
    %342 = vmatmul.bf16.gmra.mxu0 %v157
    %v343 = vpop.f32.mrf.mxu0
    %v344 = vadd.f32 %v133, %v343
    %v345 = vpop.f32.mrf.mxu0
    %v346 = vadd.f32 %v133, %v345
    %347 = vdwg.mxu0
    %348 = vmatpush.bf16.msra.mxu0 %v265
    %349 = vmatpush.bf16.msra.mxu0 %v262
    %350 = vmatpush.bf16.msra.mxu0 %v259
    %351 = vmatpush.bf16.msra.mxu0 %v256
    %352 = vmatpush.bf16.msra.mxu0 %v253
    %353 = vmatpush.bf16.msra.mxu0 %v250
    %354 = vmatpush.bf16.msra.mxu0 %v247
    %355 = vmatpush.bf16.msra.mxu0 %v244
    %356 = vmatmul.bf16.gmra.mxu0 %v154
    %v357 = vpop.f32.mrf.mxu0
    %v358 = vadd.f32 %v134, %v357
    %v359 = vpop.f32.mrf.mxu0
    %v360 = vadd.f32 %v134, %v359
    %361 = vmatmul.bf16.gmra.mxu0 %v155
    %v362 = vpop.f32.mrf.mxu0
    %v363 = vadd.f32 %v134, %v362
    %v364 = vpop.f32.mrf.mxu0
    %v365 = vadd.f32 %v134, %v364
    %366 = vmatmul.bf16.gmra.mxu0 %v156
    %v367 = vpop.f32.mrf.mxu0
    %v368 = vadd.f32 %v134, %v367
    %v369 = vpop.f32.mrf.mxu0
    %v370 = vadd.f32 %v134, %v369
    %371 = vmatmul.bf16.gmra.mxu0 %v157
    %v372 = vpop.f32.mrf.mxu0
    %v373 = vadd.f32 %v134, %v372
    %v374 = vpop.f32.mrf.mxu0
    %v375 = vadd.f32 %v134, %v374
    %376 = vdwg.mxu0
    %377 = vst [vmem:[#allocation3] sm:$0xff] %v300
    %378 = vst [vmem:[#allocation3 + $0x8] sm:$0xff] %v329
    %379 = vst [vmem:[#allocation3 + $0x10] sm:$0xff] %v358
    %380 = vst [vmem:[#allocation3 + $0x18] sm:$0xff] %v302
    %381 = vst [vmem:[#allocation3 + $0x20] sm:$0xff] %v331
    %382 = vst [vmem:[#allocation3 + $0x28] sm:$0xff] %v360
    %383 = vst [vmem:[#allocation3 + $0x30] sm:$0xff] %v305
    %384 = vst [vmem:[#allocation3 + $0x38] sm:$0xff] %v334
    %385 = vst [vmem:[#allocation3 + $0x40] sm:$0xff] %v363
    %386 = vst [vmem:[#allocation3 + $0x48] sm:$0xff] %v307
    %387 = vst [vmem:[#allocation3 + $0x50] sm:$0xff] %v336
    %388 = vst [vmem:[#allocation3 + $0x58] sm:$0xff] %v365
    %389 = vst [vmem:[#allocation3 + $0x60] sm:$0xff] %v310
    %390 = vst [vmem:[#allocation3 + $0x68] sm:$0xff] %v339
    %391 = vst [vmem:[#allocation3 + $0x70] sm:$0xff] %v368
    %392 = vst [vmem:[#allocation3 + $0x78] sm:$0xff] %v312
    %393 = vst [vmem:[#allocation3 + $0x80] sm:$0xff] %v341
    %394 = vst [vmem:[#allocation3 + $0x88] sm:$0xff] %v370
    %395 = vst [vmem:[#allocation3 + $0x90] sm:$0xff] %v315
    %396 = vst [vmem:[#allocation3 + $0x98] sm:$0xff] %v344
    %397 = vst [vmem:[#allocation3 + $0xa0] sm:$0xff] %v373
    %398 = vst [vmem:[#allocation3 + $0xa8] sm:$0xff] %v317
    %399 = vst [vmem:[#allocation3 + $0xb0] sm:$0xff] %v346
    %400 = vst [vmem:[#allocation3 + $0xb8] sm:$0xff] %v375
    %v401 = vld [vmem:[#allocation7] sm:$0xff]
    %v402 = vld [vmem:[#allocation7 + $0x8] sm:$0xf]
    %v403 = vld [vmem:[#allocation7 + $0xc] sm:$0xff]
    %v404 = vld [vmem:[#allocation7 + $0x14] sm:$0xf]
    %v405 = vld [vmem:[#allocation7 + $0x18] sm:$0xff]
    %v406 = vld [vmem:[#allocation7 + $0x20] sm:$0xf]
    %v407 = vld [vmem:[#allocation7 + $0x24] sm:$0xff]
    %v408 = vld [vmem:[#allocation7 + $0x2c] sm:$0xf]
    %v409 = vld [vmem:[#allocation7 + $0x30] sm:$0xff]
    %v410 = vld [vmem:[#allocation7 + $0x38] sm:$0xf]
    %v411 = vld [vmem:[#allocation7 + $0x3c] sm:$0xff]
    %v412 = vld [vmem:[#allocation7 + $0x44] sm:$0xf]
    %v413 = vld [vmem:[#allocation7 + $0x48] sm:$0xff]
    %v414 = vld [vmem:[#allocation7 + $0x50] sm:$0xf]
    %v415 = vld [vmem:[#allocation7 + $0x54] sm:$0xff]
    %v416 = vld [vmem:[#allocation7 + $0x5c] sm:$0xf]
    %v417 = vld [vmem:[#allocation7 + $0x60] sm:$0xff]
    %v418 = vld [vmem:[#allocation7 + $0x68] sm:$0xf]
    %v419 = vld [vmem:[#allocation7 + $0x6c] sm:$0xff]
    %v420 = vld [vmem:[#allocation7 + $0x74] sm:$0xf]
    %v421 = vld [vmem:[#allocation7 + $0x78] sm:$0xff]
    %v422 = vld [vmem:[#allocation7 + $0x80] sm:$0xf]
    %v423 = vld [vmem:[#allocation7 + $0x84] sm:$0xff]
    %v424 = vld [vmem:[#allocation7 + $0x8c] sm:$0xf]
    %v425 = vld [vmem:[#allocation7 + $0x90] sm:$0xff]
    %v426 = vld [vmem:[#allocation7 + $0x98] sm:$0xf]
    %v427 = vld [vmem:[#allocation7 + $0x9c] sm:$0xff]
    %v428 = vld [vmem:[#allocation7 + $0xa4] sm:$0xf]
    %v429 = vld [vmem:[#allocation7 + $0xa8] sm:$0xff]
    %v430 = vld [vmem:[#allocation7 + $0xb0] sm:$0xf]
    %v431 = vld [vmem:[#allocation7 + $0xb4] sm:$0xff]
    %v432 = vld [vmem:[#allocation7 + $0xbc] sm:$0xf]
    %v433 = vld [vmem:[#allocation9] sm:$0x7]
    %v435 = vperm.slane %v433, 0
    %v436 = vperm.slane %v433, 1
    %v437 = vperm.slane %v433, 2
    %v441 = vld [vmem:[#allocation2] sm:$0xff]
    %s442 = smul.u32 0, 3
    %s443 = smul.addr %s442, 8
    %s444 = scalar_lea.vmem [#allocation3], %s443
    %v445 = vld [vmem:[%s444] sm:$0xff]
    %v446 = vld [vmem:[%s444 + $0x8] sm:$0xff]
    %v447 = vld [vmem:[%s444 + $0x10] sm:$0xff]
    %v448 = vpack.c.bf16 %v441, %v441
    %v481 = vunpack.c.l.b16 %v401
    %v482 = vunpack.c.h.b16 %v401
    %v483 = vunpack.c.l.b16 %v402
    %v484 = vunpack.c.l.b16 %v403
    %v485 = vunpack.c.h.b16 %v403
    %v486 = vunpack.c.l.b16 %v404
    %v487 = vunpack.c.l.b16 %v405
    %v488 = vunpack.c.h.b16 %v405
    %v489 = vunpack.c.l.b16 %v406
    %v490 = vunpack.c.l.b16 %v407
    %v491 = vunpack.c.h.b16 %v407
    %v492 = vunpack.c.l.b16 %v408
    %v493 = vunpack.c.l.b16 %v409
    %v494 = vunpack.c.h.b16 %v409
    %v495 = vunpack.c.l.b16 %v410
    %v496 = vunpack.c.l.b16 %v411
    %v497 = vunpack.c.h.b16 %v411
    %v498 = vunpack.c.l.b16 %v412
    %v499 = vunpack.c.l.b16 %v413
    %v500 = vunpack.c.h.b16 %v413
    %v501 = vunpack.c.l.b16 %v414
    %v502 = vunpack.c.l.b16 %v415
    %v503 = vunpack.c.h.b16 %v415
    %v504 = vunpack.c.l.b16 %v416
    %v505 = vunpack.c.l.b16 %v417
    %v506 = vunpack.c.h.b16 %v417
    %v507 = vunpack.c.l.b16 %v418
    %v508 = vunpack.c.l.b16 %v419
    %v509 = vunpack.c.h.b16 %v419
    %v510 = vunpack.c.l.b16 %v420
    %v511 = vunpack.c.l.b16 %v421
    %v512 = vunpack.c.h.b16 %v421
    %v513 = vunpack.c.l.b16 %v422
    %v514 = vunpack.c.l.b16 %v423
    %v515 = vunpack.c.h.b16 %v423
    %v516 = vunpack.c.l.b16 %v424
    %v517 = vunpack.c.l.b16 %v425
    %v518 = vunpack.c.h.b16 %v425
    %v519 = vunpack.c.l.b16 %v426
    %v520 = vunpack.c.l.b16 %v427
    %v521 = vunpack.c.h.b16 %v427
    %v522 = vunpack.c.l.b16 %v428
    %v523 = vunpack.c.l.b16 %v429
    %v524 = vunpack.c.h.b16 %v429
    %v525 = vunpack.c.l.b16 %v430
    %v526 = vunpack.c.l.b16 %v431
    %v527 = vunpack.c.h.b16 %v431
    %v528 = vunpack.c.l.b16 %v432
    %v529 = vpack.c.b16 %v484, %v481
    %v530 = vpack.c.b16 %v485, %v482
    %v531 = vpack.c.b16 %v486, %v483
    %v532 = vpack.c.b16 %v490, %v487
    %v533 = vpack.c.b16 %v491, %v488
    %v534 = vpack.c.b16 %v492, %v489
    %v535 = vpack.c.b16 %v496, %v493
    %v536 = vpack.c.b16 %v497, %v494
    %v537 = vpack.c.b16 %v498, %v495
    %v538 = vpack.c.b16 %v502, %v499
    %v539 = vpack.c.b16 %v503, %v500
    %v540 = vpack.c.b16 %v504, %v501
    %v541 = vpack.c.b16 %v508, %v505
    %v542 = vpack.c.b16 %v509, %v506
    %v543 = vpack.c.b16 %v510, %v507
    %v544 = vpack.c.b16 %v514, %v511
    %v545 = vpack.c.b16 %v515, %v512
    %v546 = vpack.c.b16 %v516, %v513
    %v547 = vpack.c.b16 %v520, %v517
    %v548 = vpack.c.b16 %v521, %v518
    %v549 = vpack.c.b16 %v522, %v519
    %v550 = vpack.c.b16 %v526, %v523
    %v551 = vpack.c.b16 %v527, %v524
    %v552 = vpack.c.b16 %v528, %v525
    %577 = vmatpush.bf16.msra.mxu0 %v550
    %578 = vmatpush.bf16.msra.mxu0 %v547
    %579 = vmatpush.bf16.msra.mxu0 %v544
    %580 = vmatpush.bf16.msra.mxu0 %v541
    %581 = vmatpush.bf16.msra.mxu0 %v538
    %582 = vmatpush.bf16.msra.mxu0 %v535
    %583 = vmatpush.bf16.msra.mxu0 %v532
    %584 = vmatpush.bf16.msra.mxu0 %v529
    %585 = vmatmul.bf16.gmra.mxu0 %v448
    %v586 = vpop.f32.mrf.mxu0
    %v587 = vadd.f32 %v435, %v586
    %v588 = vpop.f32.mrf.mxu0
    %589 = vdwg.mxu0
    %590 = vmatpush.bf16.msra.mxu0 %v551
    %591 = vmatpush.bf16.msra.mxu0 %v548
    %592 = vmatpush.bf16.msra.mxu0 %v545
    %593 = vmatpush.bf16.msra.mxu0 %v542
    %594 = vmatpush.bf16.msra.mxu0 %v539
    %595 = vmatpush.bf16.msra.mxu0 %v536
    %596 = vmatpush.bf16.msra.mxu0 %v533
    %597 = vmatpush.bf16.msra.mxu0 %v530
    %598 = vmatmul.bf16.gmra.mxu0 %v448
    %v599 = vpop.f32.mrf.mxu0
    %v600 = vadd.f32 %v436, %v599
    %v601 = vpop.f32.mrf.mxu0
    %602 = vdwg.mxu0
    %603 = vmatpush.bf16.msra.mxu0 %v552
    %604 = vmatpush.bf16.msra.mxu0 %v549
    %605 = vmatpush.bf16.msra.mxu0 %v546
    %606 = vmatpush.bf16.msra.mxu0 %v543
    %607 = vmatpush.bf16.msra.mxu0 %v540
    %608 = vmatpush.bf16.msra.mxu0 %v537
    %609 = vmatpush.bf16.msra.mxu0 %v534
    %610 = vmatpush.bf16.msra.mxu0 %v531
    %611 = vmatmul.bf16.gmra.mxu0 %v448
    %v612 = vpop.f32.mrf.mxu0
    %v613 = vadd.f32 %v437, %v612
    %v614 = vpop.f32.mrf.mxu0
    %615 = vdwg.mxu0
    %v616 = vadd.f32 %v445, %v587
    %v617 = vxor.u32 %v616, 2147483648
    %v618 = vmul.f32 %v617, 1.442695
    %v619 = vpow.pop %v618
    %v620 = vadd.f32 %v619, 1.0
    %v621 = vrcp.pop %v620
    %v622 = vmul.f32 %v620, %v621
    %v623 = vsub.f32 1.0, %v622
    %v624 = vmul.f32 %v621, %v623
    %v625 = vadd.f32 %v621, %v624
    %vm626 = vweird.f32 %v620
    %vm627 = vweird.f32 %v621
    %vm628 = vmor %vm626, %vm627
    %v629 = vsel %vm628, %v621, %v625
    %v630 = vand.u32 2147483647, %v620
    %vm631 = vcmp.eq.f32.partialorder %v630, 8.507059e+37
    %v632 = vand.u32 %v620, 2147483648
    %v633 = vor.u32 1.1754944e-38, %v632
    %v634 = vsel %vm631, %v633, %v629
    %v635 = vmul.f32 1.0, %v634
    %v636 = vadd.f32 %v446, %v600
    %v637 = vxor.u32 %v636, 2147483648
    %v638 = vmul.f32 %v637, 1.442695
    %v639 = vpow.pop %v638
    %v640 = vadd.f32 %v639, 1.0
    %v641 = vrcp.pop %v640
    %v642 = vmul.f32 %v640, %v641
    %v643 = vsub.f32 1.0, %v642
    %v644 = vmul.f32 %v641, %v643
    %v645 = vadd.f32 %v641, %v644
    %vm646 = vweird.f32 %v640
    %vm647 = vweird.f32 %v641
    %vm648 = vmor %vm646, %vm647
    %v649 = vsel %vm648, %v641, %v645
    %v650 = vand.u32 2147483647, %v640
    %vm651 = vcmp.eq.f32.partialorder %v650, 8.507059e+37
    %v652 = vand.u32 %v640, 2147483648
    %v653 = vor.u32 1.1754944e-38, %v652
    %v654 = vsel %vm651, %v653, %v649
    %v655 = vmul.f32 1.0, %v654
    %v656 = vmul.f32 %v635, %v613
    %v657 = vadd.f32 %v447, %v656
    %v658 = vtanh.pop %v657
    %v659 = vsub.f32 1.0, %v655
    %v660 = vmul.f32 %v659, %v658
    %v661 = vmul.f32 %v655, %v441
    %v662 = vadd.f32 %v660, %v661
    %663 = vst [vmem:[#allocation4] sm:$0xff] %v662
    %s664 = smul.u32 1, 3
    %s665 = smul.addr %s664, 8
    %s666 = scalar_lea.vmem [#allocation3], %s665
    %v667 = vld [vmem:[%s666] sm:$0xff]
    %v668 = vld [vmem:[%s666 + $0x8] sm:$0xff]
    %v669 = vld [vmem:[%s666 + $0x10] sm:$0xff]
    %v670 = vpack.c.bf16 %v662, %v662
    %671 = vmatpush.bf16.msra.mxu0 %v550
    %672 = vmatpush.bf16.msra.mxu0 %v547
    %673 = vmatpush.bf16.msra.mxu0 %v544
    %674 = vmatpush.bf16.msra.mxu0 %v541
    %675 = vmatpush.bf16.msra.mxu0 %v538
    %676 = vmatpush.bf16.msra.mxu0 %v535
    %677 = vmatpush.bf16.msra.mxu0 %v532
    %678 = vmatpush.bf16.msra.mxu0 %v529
    %679 = vmatmul.bf16.gmra.mxu0 %v670
    %v680 = vpop.f32.mrf.mxu0
    %v681 = vadd.f32 %v435, %v680
    %v682 = vpop.f32.mrf.mxu0
    %683 = vdwg.mxu0
    %684 = vmatpush.bf16.msra.mxu0 %v551
    %685 = vmatpush.bf16.msra.mxu0 %v548
    %686 = vmatpush.bf16.msra.mxu0 %v545
    %687 = vmatpush.bf16.msra.mxu0 %v542
    %688 = vmatpush.bf16.msra.mxu0 %v539
    %689 = vmatpush.bf16.msra.mxu0 %v536
    %690 = vmatpush.bf16.msra.mxu0 %v533
    %691 = vmatpush.bf16.msra.mxu0 %v530
    %692 = vmatmul.bf16.gmra.mxu0 %v670
    %v693 = vpop.f32.mrf.mxu0
    %v694 = vadd.f32 %v436, %v693
    %v695 = vpop.f32.mrf.mxu0
    %696 = vdwg.mxu0
    %697 = vmatpush.bf16.msra.mxu0 %v552
    %698 = vmatpush.bf16.msra.mxu0 %v549
    %699 = vmatpush.bf16.msra.mxu0 %v546
    %700 = vmatpush.bf16.msra.mxu0 %v543
    %701 = vmatpush.bf16.msra.mxu0 %v540
    %702 = vmatpush.bf16.msra.mxu0 %v537
    %703 = vmatpush.bf16.msra.mxu0 %v534
    %704 = vmatpush.bf16.msra.mxu0 %v531
    %705 = vmatmul.bf16.gmra.mxu0 %v670
    %v706 = vpop.f32.mrf.mxu0
    %v707 = vadd.f32 %v437, %v706
    %v708 = vpop.f32.mrf.mxu0
    %709 = vdwg.mxu0
    %v710 = vadd.f32 %v667, %v681
    %v711 = vxor.u32 %v710, 2147483648
    %v712 = vmul.f32 %v711, 1.442695
    %v713 = vpow.pop %v712
    %v714 = vadd.f32 %v713, 1.0
    %v715 = vrcp.pop %v714
    %v716 = vmul.f32 %v714, %v715
    %v717 = vsub.f32 1.0, %v716
    %v718 = vmul.f32 %v715, %v717
    %v719 = vadd.f32 %v715, %v718
    %vm720 = vweird.f32 %v714
    %vm721 = vweird.f32 %v715
    %vm722 = vmor %vm720, %vm721
    %v723 = vsel %vm722, %v715, %v719
    %v724 = vand.u32 2147483647, %v714
    %vm725 = vcmp.eq.f32.partialorder %v724, 8.507059e+37
    %v726 = vand.u32 %v714, 2147483648
    %v727 = vor.u32 1.1754944e-38, %v726
    %v728 = vsel %vm725, %v727, %v723
    %v729 = vmul.f32 1.0, %v728
    %v730 = vadd.f32 %v668, %v694
    %v731 = vxor.u32 %v730, 2147483648
    %v732 = vmul.f32 %v731, 1.442695
    %v733 = vpow.pop %v732
    %v734 = vadd.f32 %v733, 1.0
    %v735 = vrcp.pop %v734
    %v736 = vmul.f32 %v734, %v735
    %v737 = vsub.f32 1.0, %v736
    %v738 = vmul.f32 %v735, %v737
    %v739 = vadd.f32 %v735, %v738
    %vm740 = vweird.f32 %v734
    %vm741 = vweird.f32 %v735
    %vm742 = vmor %vm740, %vm741
    %v743 = vsel %vm742, %v735, %v739
    %v744 = vand.u32 2147483647, %v734
    %vm745 = vcmp.eq.f32.partialorder %v744, 8.507059e+37
    %v746 = vand.u32 %v734, 2147483648
    %v747 = vor.u32 1.1754944e-38, %v746
    %v748 = vsel %vm745, %v747, %v743
    %v749 = vmul.f32 1.0, %v748
    %v750 = vmul.f32 %v729, %v707
    %v751 = vadd.f32 %v669, %v750
    %v752 = vtanh.pop %v751
    %v753 = vsub.f32 1.0, %v749
    %v754 = vmul.f32 %v753, %v752
    %v755 = vmul.f32 %v749, %v662
    %v756 = vadd.f32 %v754, %v755
    %s757 = scalar_lea.vmem [#allocation4], 8
    %758 = vst [vmem:[%s757] sm:$0xff] %v756
    %s759 = smul.u32 2, 3
    %s760 = smul.addr %s759, 8
    %s761 = scalar_lea.vmem [#allocation3], %s760
    %v762 = vld [vmem:[%s761] sm:$0xff]
    %v763 = vld [vmem:[%s761 + $0x8] sm:$0xff]
    %v764 = vld [vmem:[%s761 + $0x10] sm:$0xff]
    %v765 = vpack.c.bf16 %v756, %v756
    %766 = vmatpush.bf16.msra.mxu0 %v550
    %767 = vmatpush.bf16.msra.mxu0 %v547
    %768 = vmatpush.bf16.msra.mxu0 %v544
    %769 = vmatpush.bf16.msra.mxu0 %v541
    %770 = vmatpush.bf16.msra.mxu0 %v538
    %771 = vmatpush.bf16.msra.mxu0 %v535
    %772 = vmatpush.bf16.msra.mxu0 %v532
    %773 = vmatpush.bf16.msra.mxu0 %v529
    %774 = vmatmul.bf16.gmra.mxu0 %v765
    %v775 = vpop.f32.mrf.mxu0
    %v776 = vadd.f32 %v435, %v775
    %v777 = vpop.f32.mrf.mxu0
    %778 = vdwg.mxu0
    %779 = vmatpush.bf16.msra.mxu0 %v551
    %780 = vmatpush.bf16.msra.mxu0 %v548
    %781 = vmatpush.bf16.msra.mxu0 %v545
    %782 = vmatpush.bf16.msra.mxu0 %v542
    %783 = vmatpush.bf16.msra.mxu0 %v539
    %784 = vmatpush.bf16.msra.mxu0 %v536
    %785 = vmatpush.bf16.msra.mxu0 %v533
    %786 = vmatpush.bf16.msra.mxu0 %v530
    %787 = vmatmul.bf16.gmra.mxu0 %v765
    %v788 = vpop.f32.mrf.mxu0
    %v789 = vadd.f32 %v436, %v788
    %v790 = vpop.f32.mrf.mxu0
    %791 = vdwg.mxu0
    %792 = vmatpush.bf16.msra.mxu0 %v552
    %793 = vmatpush.bf16.msra.mxu0 %v549
    %794 = vmatpush.bf16.msra.mxu0 %v546
    %795 = vmatpush.bf16.msra.mxu0 %v543
    %796 = vmatpush.bf16.msra.mxu0 %v540
    %797 = vmatpush.bf16.msra.mxu0 %v537
    %798 = vmatpush.bf16.msra.mxu0 %v534
    %799 = vmatpush.bf16.msra.mxu0 %v531
    %800 = vmatmul.bf16.gmra.mxu0 %v765
    %v801 = vpop.f32.mrf.mxu0
    %v802 = vadd.f32 %v437, %v801
    %v803 = vpop.f32.mrf.mxu0
    %804 = vdwg.mxu0
    %v805 = vadd.f32 %v762, %v776
    %v806 = vxor.u32 %v805, 2147483648
    %v807 = vmul.f32 %v806, 1.442695
    %v808 = vpow.pop %v807
    %v809 = vadd.f32 %v808, 1.0
    %v810 = vrcp.pop %v809
    %v811 = vmul.f32 %v809, %v810
    %v812 = vsub.f32 1.0, %v811
    %v813 = vmul.f32 %v810, %v812
    %v814 = vadd.f32 %v810, %v813
    %vm815 = vweird.f32 %v809
    %vm816 = vweird.f32 %v810
    %vm817 = vmor %vm815, %vm816
    %v818 = vsel %vm817, %v810, %v814
    %v819 = vand.u32 2147483647, %v809
    %vm820 = vcmp.eq.f32.partialorder %v819, 8.507059e+37
    %v821 = vand.u32 %v809, 2147483648
    %v822 = vor.u32 1.1754944e-38, %v821
    %v823 = vsel %vm820, %v822, %v818
    %v824 = vmul.f32 1.0, %v823
    %v825 = vadd.f32 %v763, %v789
    %v826 = vxor.u32 %v825, 2147483648
    %v827 = vmul.f32 %v826, 1.442695
    %v828 = vpow.pop %v827
    %v829 = vadd.f32 %v828, 1.0
    %v830 = vrcp.pop %v829
    %v831 = vmul.f32 %v829, %v830
    %v832 = vsub.f32 1.0, %v831
    %v833 = vmul.f32 %v830, %v832
    %v834 = vadd.f32 %v830, %v833
    %vm835 = vweird.f32 %v829
    %vm836 = vweird.f32 %v830
    %vm837 = vmor %vm835, %vm836
    %v838 = vsel %vm837, %v830, %v834
    %v839 = vand.u32 2147483647, %v829
    %vm840 = vcmp.eq.f32.partialorder %v839, 8.507059e+37
    %v841 = vand.u32 %v829, 2147483648
    %v842 = vor.u32 1.1754944e-38, %v841
    %v843 = vsel %vm840, %v842, %v838
    %v844 = vmul.f32 1.0, %v843
    %v845 = vmul.f32 %v824, %v802
    %v846 = vadd.f32 %v764, %v845
    %v847 = vtanh.pop %v846
    %v848 = vsub.f32 1.0, %v844
    %v849 = vmul.f32 %v848, %v847
    %v850 = vmul.f32 %v844, %v756
    %v851 = vadd.f32 %v849, %v850
    %s852 = scalar_lea.vmem [#allocation4], 16
    %853 = vst [vmem:[%s852] sm:$0xff] %v851
    %s854 = smul.u32 3, 3
    %s855 = smul.addr %s854, 8
    %s856 = scalar_lea.vmem [#allocation3], %s855
    %v857 = vld [vmem:[%s856] sm:$0xff]
    %v858 = vld [vmem:[%s856 + $0x8] sm:$0xff]
    %v859 = vld [vmem:[%s856 + $0x10] sm:$0xff]
    %v860 = vpack.c.bf16 %v851, %v851
    %861 = vmatpush.bf16.msra.mxu0 %v550
    %862 = vmatpush.bf16.msra.mxu0 %v547
    %863 = vmatpush.bf16.msra.mxu0 %v544
    %864 = vmatpush.bf16.msra.mxu0 %v541
    %865 = vmatpush.bf16.msra.mxu0 %v538
    %866 = vmatpush.bf16.msra.mxu0 %v535
    %867 = vmatpush.bf16.msra.mxu0 %v532
    %868 = vmatpush.bf16.msra.mxu0 %v529
    %869 = vmatmul.bf16.gmra.mxu0 %v860
    %v870 = vpop.f32.mrf.mxu0
    %v871 = vadd.f32 %v435, %v870
    %v872 = vpop.f32.mrf.mxu0
    %873 = vdwg.mxu0
    %874 = vmatpush.bf16.msra.mxu0 %v551
    %875 = vmatpush.bf16.msra.mxu0 %v548
    %876 = vmatpush.bf16.msra.mxu0 %v545
    %877 = vmatpush.bf16.msra.mxu0 %v542
    %878 = vmatpush.bf16.msra.mxu0 %v539
    %879 = vmatpush.bf16.msra.mxu0 %v536
    %880 = vmatpush.bf16.msra.mxu0 %v533
    %881 = vmatpush.bf16.msra.mxu0 %v530
    %882 = vmatmul.bf16.gmra.mxu0 %v860
    %v883 = vpop.f32.mrf.mxu0
    %v884 = vadd.f32 %v436, %v883
    %v885 = vpop.f32.mrf.mxu0
    %886 = vdwg.mxu0
    %887 = vmatpush.bf16.msra.mxu0 %v552
    %888 = vmatpush.bf16.msra.mxu0 %v549
    %889 = vmatpush.bf16.msra.mxu0 %v546
    %890 = vmatpush.bf16.msra.mxu0 %v543
    %891 = vmatpush.bf16.msra.mxu0 %v540
    %892 = vmatpush.bf16.msra.mxu0 %v537
    %893 = vmatpush.bf16.msra.mxu0 %v534
    %894 = vmatpush.bf16.msra.mxu0 %v531
    %895 = vmatmul.bf16.gmra.mxu0 %v860
    %v896 = vpop.f32.mrf.mxu0
    %v897 = vadd.f32 %v437, %v896
    %v898 = vpop.f32.mrf.mxu0
    %899 = vdwg.mxu0
    %v900 = vadd.f32 %v857, %v871
    %v901 = vxor.u32 %v900, 2147483648
    %v902 = vmul.f32 %v901, 1.442695
    %v903 = vpow.pop %v902
    %v904 = vadd.f32 %v903, 1.0
    %v905 = vrcp.pop %v904
    %v906 = vmul.f32 %v904, %v905
    %v907 = vsub.f32 1.0, %v906
    %v908 = vmul.f32 %v905, %v907
    %v909 = vadd.f32 %v905, %v908
    %vm910 = vweird.f32 %v904
    %vm911 = vweird.f32 %v905
    %vm912 = vmor %vm910, %vm911
    %v913 = vsel %vm912, %v905, %v909
    %v914 = vand.u32 2147483647, %v904
    %vm915 = vcmp.eq.f32.partialorder %v914, 8.507059e+37
    %v916 = vand.u32 %v904, 2147483648
    %v917 = vor.u32 1.1754944e-38, %v916
    %v918 = vsel %vm915, %v917, %v913
    %v919 = vmul.f32 1.0, %v918
    %v920 = vadd.f32 %v858, %v884
    %v921 = vxor.u32 %v920, 2147483648
    %v922 = vmul.f32 %v921, 1.442695
    %v923 = vpow.pop %v922
    %v924 = vadd.f32 %v923, 1.0
    %v925 = vrcp.pop %v924
    %v926 = vmul.f32 %v924, %v925
    %v927 = vsub.f32 1.0, %v926
    %v928 = vmul.f32 %v925, %v927
    %v929 = vadd.f32 %v925, %v928
    %vm930 = vweird.f32 %v924
    %vm931 = vweird.f32 %v925
    %vm932 = vmor %vm930, %vm931
    %v933 = vsel %vm932, %v925, %v929
    %v934 = vand.u32 2147483647, %v924
    %vm935 = vcmp.eq.f32.partialorder %v934, 8.507059e+37
    %v936 = vand.u32 %v924, 2147483648
    %v937 = vor.u32 1.1754944e-38, %v936
    %v938 = vsel %vm935, %v937, %v933
    %v939 = vmul.f32 1.0, %v938
    %v940 = vmul.f32 %v919, %v897
    %v941 = vadd.f32 %v859, %v940
    %v942 = vtanh.pop %v941
    %v943 = vsub.f32 1.0, %v939
    %v944 = vmul.f32 %v943, %v942
    %v945 = vmul.f32 %v939, %v851
    %v946 = vadd.f32 %v944, %v945
    %s947 = scalar_lea.vmem [#allocation4], 24
    %948 = vst [vmem:[%s947] sm:$0xff] %v946
    %s949 = smul.u32 4, 3
    %s950 = smul.addr %s949, 8
    %s951 = scalar_lea.vmem [#allocation3], %s950
    %v952 = vld [vmem:[%s951] sm:$0xff]
    %v953 = vld [vmem:[%s951 + $0x8] sm:$0xff]
    %v954 = vld [vmem:[%s951 + $0x10] sm:$0xff]
    %v955 = vpack.c.bf16 %v946, %v946
    %956 = vmatpush.bf16.msra.mxu0 %v550
    %957 = vmatpush.bf16.msra.mxu0 %v547
    %958 = vmatpush.bf16.msra.mxu0 %v544
    %959 = vmatpush.bf16.msra.mxu0 %v541
    %960 = vmatpush.bf16.msra.mxu0 %v538
    %961 = vmatpush.bf16.msra.mxu0 %v535
    %962 = vmatpush.bf16.msra.mxu0 %v532
    %963 = vmatpush.bf16.msra.mxu0 %v529
    %964 = vmatmul.bf16.gmra.mxu0 %v955
    %v965 = vpop.f32.mrf.mxu0
    %v966 = vadd.f32 %v435, %v965
    %v967 = vpop.f32.mrf.mxu0
    %968 = vdwg.mxu0
    %969 = vmatpush.bf16.msra.mxu0 %v551
    %970 = vmatpush.bf16.msra.mxu0 %v548
    %971 = vmatpush.bf16.msra.mxu0 %v545
    %972 = vmatpush.bf16.msra.mxu0 %v542
    %973 = vmatpush.bf16.msra.mxu0 %v539
    %974 = vmatpush.bf16.msra.mxu0 %v536
    %975 = vmatpush.bf16.msra.mxu0 %v533
    %976 = vmatpush.bf16.msra.mxu0 %v530
    %977 = vmatmul.bf16.gmra.mxu0 %v955
    %v978 = vpop.f32.mrf.mxu0
    %v979 = vadd.f32 %v436, %v978
    %v980 = vpop.f32.mrf.mxu0
    %981 = vdwg.mxu0
    %982 = vmatpush.bf16.msra.mxu0 %v552
    %983 = vmatpush.bf16.msra.mxu0 %v549
    %984 = vmatpush.bf16.msra.mxu0 %v546
    %985 = vmatpush.bf16.msra.mxu0 %v543
    %986 = vmatpush.bf16.msra.mxu0 %v540
    %987 = vmatpush.bf16.msra.mxu0 %v537
    %988 = vmatpush.bf16.msra.mxu0 %v534
    %989 = vmatpush.bf16.msra.mxu0 %v531
    %990 = vmatmul.bf16.gmra.mxu0 %v955
    %v991 = vpop.f32.mrf.mxu0
    %v992 = vadd.f32 %v437, %v991
    %v993 = vpop.f32.mrf.mxu0
    %994 = vdwg.mxu0
    %v995 = vadd.f32 %v952, %v966
    %v996 = vxor.u32 %v995, 2147483648
    %v997 = vmul.f32 %v996, 1.442695
    %v998 = vpow.pop %v997
    %v999 = vadd.f32 %v998, 1.0
    %v1000 = vrcp.pop %v999
    %v1001 = vmul.f32 %v999, %v1000
    %v1002 = vsub.f32 1.0, %v1001
    %v1003 = vmul.f32 %v1000, %v1002
    %v1004 = vadd.f32 %v1000, %v1003
    %vm1005 = vweird.f32 %v999
    %vm1006 = vweird.f32 %v1000
    %vm1007 = vmor %vm1005, %vm1006
    %v1008 = vsel %vm1007, %v1000, %v1004
    %v1009 = vand.u32 2147483647, %v999
    %vm1010 = vcmp.eq.f32.partialorder %v1009, 8.507059e+37
    %v1011 = vand.u32 %v999, 2147483648
    %v1012 = vor.u32 1.1754944e-38, %v1011
    %v1013 = vsel %vm1010, %v1012, %v1008
    %v1014 = vmul.f32 1.0, %v1013
    %v1015 = vadd.f32 %v953, %v979
    %v1016 = vxor.u32 %v1015, 2147483648
    %v1017 = vmul.f32 %v1016, 1.442695
    %v1018 = vpow.pop %v1017
    %v1019 = vadd.f32 %v1018, 1.0
    %v1020 = vrcp.pop %v1019
    %v1021 = vmul.f32 %v1019, %v1020
    %v1022 = vsub.f32 1.0, %v1021
    %v1023 = vmul.f32 %v1020, %v1022
    %v1024 = vadd.f32 %v1020, %v1023
    %vm1025 = vweird.f32 %v1019
    %vm1026 = vweird.f32 %v1020
    %vm1027 = vmor %vm1025, %vm1026
    %v1028 = vsel %vm1027, %v1020, %v1024
    %v1029 = vand.u32 2147483647, %v1019
    %vm1030 = vcmp.eq.f32.partialorder %v1029, 8.507059e+37
    %v1031 = vand.u32 %v1019, 2147483648
    %v1032 = vor.u32 1.1754944e-38, %v1031
    %v1033 = vsel %vm1030, %v1032, %v1028
    %v1034 = vmul.f32 1.0, %v1033
    %v1035 = vmul.f32 %v1014, %v992
    %v1036 = vadd.f32 %v954, %v1035
    %v1037 = vtanh.pop %v1036
    %v1038 = vsub.f32 1.0, %v1034
    %v1039 = vmul.f32 %v1038, %v1037
    %v1040 = vmul.f32 %v1034, %v946
    %v1041 = vadd.f32 %v1039, %v1040
    %s1042 = scalar_lea.vmem [#allocation4], 32
    %1043 = vst [vmem:[%s1042] sm:$0xff] %v1041
    %s1044 = smul.u32 5, 3
    %s1045 = smul.addr %s1044, 8
    %s1046 = scalar_lea.vmem [#allocation3], %s1045
    %v1047 = vld [vmem:[%s1046] sm:$0xff]
    %v1048 = vld [vmem:[%s1046 + $0x8] sm:$0xff]
    %v1049 = vld [vmem:[%s1046 + $0x10] sm:$0xff]
    %v1050 = vpack.c.bf16 %v1041, %v1041
    %1051 = vmatpush.bf16.msra.mxu0 %v550
    %1052 = vmatpush.bf16.msra.mxu0 %v547
    %1053 = vmatpush.bf16.msra.mxu0 %v544
    %1054 = vmatpush.bf16.msra.mxu0 %v541
    %1055 = vmatpush.bf16.msra.mxu0 %v538
    %1056 = vmatpush.bf16.msra.mxu0 %v535
    %1057 = vmatpush.bf16.msra.mxu0 %v532
    %1058 = vmatpush.bf16.msra.mxu0 %v529
    %1059 = vmatmul.bf16.gmra.mxu0 %v1050
    %v1060 = vpop.f32.mrf.mxu0
    %v1061 = vadd.f32 %v435, %v1060
    %v1062 = vpop.f32.mrf.mxu0
    %1063 = vdwg.mxu0
    %1064 = vmatpush.bf16.msra.mxu0 %v551
    %1065 = vmatpush.bf16.msra.mxu0 %v548
    %1066 = vmatpush.bf16.msra.mxu0 %v545
    %1067 = vmatpush.bf16.msra.mxu0 %v542
    %1068 = vmatpush.bf16.msra.mxu0 %v539
    %1069 = vmatpush.bf16.msra.mxu0 %v536
    %1070 = vmatpush.bf16.msra.mxu0 %v533
    %1071 = vmatpush.bf16.msra.mxu0 %v530
    %1072 = vmatmul.bf16.gmra.mxu0 %v1050
    %v1073 = vpop.f32.mrf.mxu0
    %v1074 = vadd.f32 %v436, %v1073
    %v1075 = vpop.f32.mrf.mxu0
    %1076 = vdwg.mxu0
    %1077 = vmatpush.bf16.msra.mxu0 %v552
    %1078 = vmatpush.bf16.msra.mxu0 %v549
    %1079 = vmatpush.bf16.msra.mxu0 %v546
    %1080 = vmatpush.bf16.msra.mxu0 %v543
    %1081 = vmatpush.bf16.msra.mxu0 %v540
    %1082 = vmatpush.bf16.msra.mxu0 %v537
    %1083 = vmatpush.bf16.msra.mxu0 %v534
    %1084 = vmatpush.bf16.msra.mxu0 %v531
    %1085 = vmatmul.bf16.gmra.mxu0 %v1050
    %v1086 = vpop.f32.mrf.mxu0
    %v1087 = vadd.f32 %v437, %v1086
    %v1088 = vpop.f32.mrf.mxu0
    %1089 = vdwg.mxu0
    %v1090 = vadd.f32 %v1047, %v1061
    %v1091 = vxor.u32 %v1090, 2147483648
    %v1092 = vmul.f32 %v1091, 1.442695
    %v1093 = vpow.pop %v1092
    %v1094 = vadd.f32 %v1093, 1.0
    %v1095 = vrcp.pop %v1094
    %v1096 = vmul.f32 %v1094, %v1095
    %v1097 = vsub.f32 1.0, %v1096
    %v1098 = vmul.f32 %v1095, %v1097
    %v1099 = vadd.f32 %v1095, %v1098
    %vm1100 = vweird.f32 %v1094
    %vm1101 = vweird.f32 %v1095
    %vm1102 = vmor %vm1100, %vm1101
    %v1103 = vsel %vm1102, %v1095, %v1099
    %v1104 = vand.u32 2147483647, %v1094
    %vm1105 = vcmp.eq.f32.partialorder %v1104, 8.507059e+37
    %v1106 = vand.u32 %v1094, 2147483648
    %v1107 = vor.u32 1.1754944e-38, %v1106
    %v1108 = vsel %vm1105, %v1107, %v1103
    %v1109 = vmul.f32 1.0, %v1108
    %v1110 = vadd.f32 %v1048, %v1074
    %v1111 = vxor.u32 %v1110, 2147483648
    %v1112 = vmul.f32 %v1111, 1.442695
    %v1113 = vpow.pop %v1112
    %v1114 = vadd.f32 %v1113, 1.0
    %v1115 = vrcp.pop %v1114
    %v1116 = vmul.f32 %v1114, %v1115
    %v1117 = vsub.f32 1.0, %v1116
    %v1118 = vmul.f32 %v1115, %v1117
    %v1119 = vadd.f32 %v1115, %v1118
    %vm1120 = vweird.f32 %v1114
    %vm1121 = vweird.f32 %v1115
    %vm1122 = vmor %vm1120, %vm1121
    %v1123 = vsel %vm1122, %v1115, %v1119
    %v1124 = vand.u32 2147483647, %v1114
    %vm1125 = vcmp.eq.f32.partialorder %v1124, 8.507059e+37
    %v1126 = vand.u32 %v1114, 2147483648
    %v1127 = vor.u32 1.1754944e-38, %v1126
    %v1128 = vsel %vm1125, %v1127, %v1123
    %v1129 = vmul.f32 1.0, %v1128
    %v1130 = vmul.f32 %v1109, %v1087
    %v1131 = vadd.f32 %v1049, %v1130
    %v1132 = vtanh.pop %v1131
    %v1133 = vsub.f32 1.0, %v1129
    %v1134 = vmul.f32 %v1133, %v1132
    %v1135 = vmul.f32 %v1129, %v1041
    %v1136 = vadd.f32 %v1134, %v1135
    %s1137 = scalar_lea.vmem [#allocation4], 40
    %1138 = vst [vmem:[%s1137] sm:$0xff] %v1136
    %s1139 = smul.u32 6, 3
    %s1140 = smul.addr %s1139, 8
    %s1141 = scalar_lea.vmem [#allocation3], %s1140
    %v1142 = vld [vmem:[%s1141] sm:$0xff]
    %v1143 = vld [vmem:[%s1141 + $0x8] sm:$0xff]
    %v1144 = vld [vmem:[%s1141 + $0x10] sm:$0xff]
    %v1145 = vpack.c.bf16 %v1136, %v1136
    %1146 = vmatpush.bf16.msra.mxu0 %v550
    %1147 = vmatpush.bf16.msra.mxu0 %v547
    %1148 = vmatpush.bf16.msra.mxu0 %v544
    %1149 = vmatpush.bf16.msra.mxu0 %v541
    %1150 = vmatpush.bf16.msra.mxu0 %v538
    %1151 = vmatpush.bf16.msra.mxu0 %v535
    %1152 = vmatpush.bf16.msra.mxu0 %v532
    %1153 = vmatpush.bf16.msra.mxu0 %v529
    %1154 = vmatmul.bf16.gmra.mxu0 %v1145
    %v1155 = vpop.f32.mrf.mxu0
    %v1156 = vadd.f32 %v435, %v1155
    %v1157 = vpop.f32.mrf.mxu0
    %1158 = vdwg.mxu0
    %1159 = vmatpush.bf16.msra.mxu0 %v551
    %1160 = vmatpush.bf16.msra.mxu0 %v548
    %1161 = vmatpush.bf16.msra.mxu0 %v545
    %1162 = vmatpush.bf16.msra.mxu0 %v542
    %1163 = vmatpush.bf16.msra.mxu0 %v539
    %1164 = vmatpush.bf16.msra.mxu0 %v536
    %1165 = vmatpush.bf16.msra.mxu0 %v533
    %1166 = vmatpush.bf16.msra.mxu0 %v530
    %1167 = vmatmul.bf16.gmra.mxu0 %v1145
    %v1168 = vpop.f32.mrf.mxu0
    %v1169 = vadd.f32 %v436, %v1168
    %v1170 = vpop.f32.mrf.mxu0
    %1171 = vdwg.mxu0
    %1172 = vmatpush.bf16.msra.mxu0 %v552
    %1173 = vmatpush.bf16.msra.mxu0 %v549
    %1174 = vmatpush.bf16.msra.mxu0 %v546
    %1175 = vmatpush.bf16.msra.mxu0 %v543
    %1176 = vmatpush.bf16.msra.mxu0 %v540
    %1177 = vmatpush.bf16.msra.mxu0 %v537
    %1178 = vmatpush.bf16.msra.mxu0 %v534
    %1179 = vmatpush.bf16.msra.mxu0 %v531
    %1180 = vmatmul.bf16.gmra.mxu0 %v1145
    %v1181 = vpop.f32.mrf.mxu0
    %v1182 = vadd.f32 %v437, %v1181
    %v1183 = vpop.f32.mrf.mxu0
    %1184 = vdwg.mxu0
    %v1185 = vadd.f32 %v1142, %v1156
    %v1186 = vxor.u32 %v1185, 2147483648
    %v1187 = vmul.f32 %v1186, 1.442695
    %v1188 = vpow.pop %v1187
    %v1189 = vadd.f32 %v1188, 1.0
    %v1190 = vrcp.pop %v1189
    %v1191 = vmul.f32 %v1189, %v1190
    %v1192 = vsub.f32 1.0, %v1191
    %v1193 = vmul.f32 %v1190, %v1192
    %v1194 = vadd.f32 %v1190, %v1193
    %vm1195 = vweird.f32 %v1189
    %vm1196 = vweird.f32 %v1190
    %vm1197 = vmor %vm1195, %vm1196
    %v1198 = vsel %vm1197, %v1190, %v1194
    %v1199 = vand.u32 2147483647, %v1189
    %vm1200 = vcmp.eq.f32.partialorder %v1199, 8.507059e+37
    %v1201 = vand.u32 %v1189, 2147483648
    %v1202 = vor.u32 1.1754944e-38, %v1201
    %v1203 = vsel %vm1200, %v1202, %v1198
    %v1204 = vmul.f32 1.0, %v1203
    %v1205 = vadd.f32 %v1143, %v1169
    %v1206 = vxor.u32 %v1205, 2147483648
    %v1207 = vmul.f32 %v1206, 1.442695
    %v1208 = vpow.pop %v1207
    %v1209 = vadd.f32 %v1208, 1.0
    %v1210 = vrcp.pop %v1209
    %v1211 = vmul.f32 %v1209, %v1210
    %v1212 = vsub.f32 1.0, %v1211
    %v1213 = vmul.f32 %v1210, %v1212
    %v1214 = vadd.f32 %v1210, %v1213
    %vm1215 = vweird.f32 %v1209
    %vm1216 = vweird.f32 %v1210
    %vm1217 = vmor %vm1215, %vm1216
    %v1218 = vsel %vm1217, %v1210, %v1214
    %v1219 = vand.u32 2147483647, %v1209
    %vm1220 = vcmp.eq.f32.partialorder %v1219, 8.507059e+37
    %v1221 = vand.u32 %v1209, 2147483648
    %v1222 = vor.u32 1.1754944e-38, %v1221
    %v1223 = vsel %vm1220, %v1222, %v1218
    %v1224 = vmul.f32 1.0, %v1223
    %v1225 = vmul.f32 %v1204, %v1182
    %v1226 = vadd.f32 %v1144, %v1225
    %v1227 = vtanh.pop %v1226
    %v1228 = vsub.f32 1.0, %v1224
    %v1229 = vmul.f32 %v1228, %v1227
    %v1230 = vmul.f32 %v1224, %v1136
    %v1231 = vadd.f32 %v1229, %v1230
    %s1232 = scalar_lea.vmem [#allocation4], 48
    %1233 = vst [vmem:[%s1232] sm:$0xff] %v1231
    %s1234 = smul.u32 7, 3
    %s1235 = smul.addr %s1234, 8
    %s1236 = scalar_lea.vmem [#allocation3], %s1235
    %v1237 = vld [vmem:[%s1236] sm:$0xff]
    %v1238 = vld [vmem:[%s1236 + $0x8] sm:$0xff]
    %v1239 = vld [vmem:[%s1236 + $0x10] sm:$0xff]
    %v1240 = vpack.c.bf16 %v1231, %v1231
    %1241 = vmatpush.bf16.msra.mxu0 %v550
    %1242 = vmatpush.bf16.msra.mxu0 %v547
    %1243 = vmatpush.bf16.msra.mxu0 %v544
    %1244 = vmatpush.bf16.msra.mxu0 %v541
    %1245 = vmatpush.bf16.msra.mxu0 %v538
    %1246 = vmatpush.bf16.msra.mxu0 %v535
    %1247 = vmatpush.bf16.msra.mxu0 %v532
    %1248 = vmatpush.bf16.msra.mxu0 %v529
    %1249 = vmatmul.bf16.gmra.mxu0 %v1240
    %v1250 = vpop.f32.mrf.mxu0
    %v1251 = vadd.f32 %v435, %v1250
    %v1252 = vpop.f32.mrf.mxu0
    %1253 = vdwg.mxu0
    %1254 = vmatpush.bf16.msra.mxu0 %v551
    %1255 = vmatpush.bf16.msra.mxu0 %v548
    %1256 = vmatpush.bf16.msra.mxu0 %v545
    %1257 = vmatpush.bf16.msra.mxu0 %v542
    %1258 = vmatpush.bf16.msra.mxu0 %v539
    %1259 = vmatpush.bf16.msra.mxu0 %v536
    %1260 = vmatpush.bf16.msra.mxu0 %v533
    %1261 = vmatpush.bf16.msra.mxu0 %v530
    %1262 = vmatmul.bf16.gmra.mxu0 %v1240
    %v1263 = vpop.f32.mrf.mxu0
    %v1264 = vadd.f32 %v436, %v1263
    %v1265 = vpop.f32.mrf.mxu0
    %1266 = vdwg.mxu0
    %1267 = vmatpush.bf16.msra.mxu0 %v552
    %1268 = vmatpush.bf16.msra.mxu0 %v549
    %1269 = vmatpush.bf16.msra.mxu0 %v546
    %1270 = vmatpush.bf16.msra.mxu0 %v543
    %1271 = vmatpush.bf16.msra.mxu0 %v540
    %1272 = vmatpush.bf16.msra.mxu0 %v537
    %1273 = vmatpush.bf16.msra.mxu0 %v534
    %1274 = vmatpush.bf16.msra.mxu0 %v531
    %1275 = vmatmul.bf16.gmra.mxu0 %v1240
    %v1276 = vpop.f32.mrf.mxu0
    %v1277 = vadd.f32 %v437, %v1276
    %v1278 = vpop.f32.mrf.mxu0
    %1279 = vdwg.mxu0
    %v1280 = vadd.f32 %v1237, %v1251
    %v1281 = vxor.u32 %v1280, 2147483648
    %v1282 = vmul.f32 %v1281, 1.442695
    %v1283 = vpow.pop %v1282
    %v1284 = vadd.f32 %v1283, 1.0
    %v1285 = vrcp.pop %v1284
    %v1286 = vmul.f32 %v1284, %v1285
    %v1287 = vsub.f32 1.0, %v1286
    %v1288 = vmul.f32 %v1285, %v1287
    %v1289 = vadd.f32 %v1285, %v1288
    %vm1290 = vweird.f32 %v1284
    %vm1291 = vweird.f32 %v1285
    %vm1292 = vmor %vm1290, %vm1291
    %v1293 = vsel %vm1292, %v1285, %v1289
    %v1294 = vand.u32 2147483647, %v1284
    %vm1295 = vcmp.eq.f32.partialorder %v1294, 8.507059e+37
    %v1296 = vand.u32 %v1284, 2147483648
    %v1297 = vor.u32 1.1754944e-38, %v1296
    %v1298 = vsel %vm1295, %v1297, %v1293
    %v1299 = vmul.f32 1.0, %v1298
    %v1300 = vadd.f32 %v1238, %v1264
    %v1301 = vxor.u32 %v1300, 2147483648
    %v1302 = vmul.f32 %v1301, 1.442695
    %v1303 = vpow.pop %v1302
    %v1304 = vadd.f32 %v1303, 1.0
    %v1305 = vrcp.pop %v1304
    %v1306 = vmul.f32 %v1304, %v1305
    %v1307 = vsub.f32 1.0, %v1306
    %v1308 = vmul.f32 %v1305, %v1307
    %v1309 = vadd.f32 %v1305, %v1308
    %vm1310 = vweird.f32 %v1304
    %vm1311 = vweird.f32 %v1305
    %vm1312 = vmor %vm1310, %vm1311
    %v1313 = vsel %vm1312, %v1305, %v1309
    %v1314 = vand.u32 2147483647, %v1304
    %vm1315 = vcmp.eq.f32.partialorder %v1314, 8.507059e+37
    %v1316 = vand.u32 %v1304, 2147483648
    %v1317 = vor.u32 1.1754944e-38, %v1316
    %v1318 = vsel %vm1315, %v1317, %v1313
    %v1319 = vmul.f32 1.0, %v1318
    %v1320 = vmul.f32 %v1299, %v1277
    %v1321 = vadd.f32 %v1239, %v1320
    %v1322 = vtanh.pop %v1321
    %v1323 = vsub.f32 1.0, %v1319
    %v1324 = vmul.f32 %v1323, %v1322
    %v1325 = vmul.f32 %v1319, %v1231
    %v1326 = vadd.f32 %v1324, %v1325
    %s1327 = scalar_lea.vmem [#allocation4], 56
    %1328 = vst [vmem:[%s1327] sm:$0xff] %v1326
    %1329 = vst [vmem:[#allocation2] sm:$0xff] %v1326
    %v1330 = vld [vmem:[#allocation4] sm:$0xff]
    %v1331 = vld [vmem:[#allocation4 + $0x8] sm:$0xff]
    %v1332 = vld [vmem:[#allocation4 + $0x10] sm:$0xff]
    %v1333 = vld [vmem:[#allocation4 + $0x18] sm:$0xff]
    %v1334 = vld [vmem:[#allocation4 + $0x20] sm:$0xff]
    %v1335 = vld [vmem:[#allocation4 + $0x28] sm:$0xff]
    %v1336 = vld [vmem:[#allocation4 + $0x30] sm:$0xff]
    %v1337 = vld [vmem:[#allocation4 + $0x38] sm:$0xff]
    %v1338 = vpack.c.bf16 %v1331, %v1330
    %v1339 = vpack.c.bf16 %v1333, %v1332
    %v1340 = vpack.c.bf16 %v1335, %v1334
    %v1341 = vpack.c.bf16 %v1337, %v1336
    %v1342 = vld [vmem:[%s5] sm:$0xf]
    %v1343 = vld [vmem:[%s5 + $0x4] sm:$0xf]
    %v1344 = vld [vmem:[%s5 + $0x8] sm:$0xf]
    %v1345 = vld [vmem:[%s5 + $0xc] sm:$0xf]
    %v1346 = vld [vmem:[%s5 + $0x10] sm:$0xf]
    %v1347 = vld [vmem:[%s5 + $0x14] sm:$0xf]
    %v1348 = vld [vmem:[%s5 + $0x18] sm:$0xf]
    %v1349 = vld [vmem:[%s5 + $0x1c] sm:$0xf]
    %v1350 = vld [vmem:[%s5 + $0x20] sm:$0xf]
    %v1351 = vld [vmem:[%s5 + $0x24] sm:$0xf]
    %v1352 = vld [vmem:[%s5 + $0x28] sm:$0xf]
    %v1353 = vld [vmem:[%s5 + $0x2c] sm:$0xf]
    %v1354 = vld [vmem:[%s5 + $0x30] sm:$0xf]
    %v1355 = vld [vmem:[%s5 + $0x34] sm:$0xf]
    %v1356 = vld [vmem:[%s5 + $0x38] sm:$0xf]
    %v1357 = vld [vmem:[%s5 + $0x3c] sm:$0xf]
    %v1358 = vld [vmem:[#allocation10] sm:$0x1]
    %v1360 = vperm.slane %v1358, 0
    %v1378 = vunpack.c.l.b16 %v1342
    %v1379 = vunpack.c.l.b16 %v1343
    %v1380 = vunpack.c.l.b16 %v1344
    %v1381 = vunpack.c.l.b16 %v1345
    %v1382 = vunpack.c.l.b16 %v1346
    %v1383 = vunpack.c.l.b16 %v1347
    %v1384 = vunpack.c.l.b16 %v1348
    %v1385 = vunpack.c.l.b16 %v1349
    %v1386 = vunpack.c.l.b16 %v1350
    %v1387 = vunpack.c.l.b16 %v1351
    %v1388 = vunpack.c.l.b16 %v1352
    %v1389 = vunpack.c.l.b16 %v1353
    %v1390 = vunpack.c.l.b16 %v1354
    %v1391 = vunpack.c.l.b16 %v1355
    %v1392 = vunpack.c.l.b16 %v1356
    %v1393 = vunpack.c.l.b16 %v1357
    %v1394 = vpack.c.b16 %v1379, %v1378
    %v1395 = vpack.c.b16 %v1381, %v1380
    %v1396 = vpack.c.b16 %v1383, %v1382
    %v1397 = vpack.c.b16 %v1385, %v1384
    %v1398 = vpack.c.b16 %v1387, %v1386
    %v1399 = vpack.c.b16 %v1389, %v1388
    %v1400 = vpack.c.b16 %v1391, %v1390
    %v1401 = vpack.c.b16 %v1393, %v1392
    %1410 = vmatpush.bf16.msra.mxu0 %v1401
    %1411 = vmatpush.bf16.msra.mxu0 %v1400
    %1412 = vmatpush.bf16.msra.mxu0 %v1399
    %1413 = vmatpush.bf16.msra.mxu0 %v1398
    %1414 = vmatpush.bf16.msra.mxu0 %v1397
    %1415 = vmatpush.bf16.msra.mxu0 %v1396
    %1416 = vmatpush.bf16.msra.mxu0 %v1395
    %1417 = vmatpush.bf16.msra.mxu0 %v1394
    %1418 = vmatmul.bf16.gmra.mxu0 %v1338
    %v1419 = vpop.f32.mrf.mxu0
    %v1420 = vadd.f32 %v1360, %v1419
    %v1421 = vpop.f32.mrf.mxu0
    %v1422 = vadd.f32 %v1360, %v1421
    %1423 = vmatmul.bf16.gmra.mxu0 %v1339
    %v1424 = vpop.f32.mrf.mxu0
    %v1425 = vadd.f32 %v1360, %v1424
    %v1426 = vpop.f32.mrf.mxu0
    %v1427 = vadd.f32 %v1360, %v1426
    %1428 = vmatmul.bf16.gmra.mxu0 %v1340
    %v1429 = vpop.f32.mrf.mxu0
    %v1430 = vadd.f32 %v1360, %v1429
    %v1431 = vpop.f32.mrf.mxu0
    %v1432 = vadd.f32 %v1360, %v1431
    %1433 = vmatmul.bf16.gmra.mxu0 %v1341
    %v1434 = vpop.f32.mrf.mxu0
    %v1435 = vadd.f32 %v1360, %v1434
    %v1436 = vpop.f32.mrf.mxu0
    %v1437 = vadd.f32 %v1360, %v1436
    %1438 = vdwg.mxu0
    %1439 = vst [vmem:[%s7] sm:$0xff] %v1420
    %1440 = vst [vmem:[%s7 + $0x8] sm:$0xff] %v1422
    %1441 = vst [vmem:[%s7 + $0x10] sm:$0xff] %v1425
    %1442 = vst [vmem:[%s7 + $0x18] sm:$0xff] %v1427
    %1443 = vst [vmem:[%s7 + $0x20] sm:$0xff] %v1430
    %1444 = vst [vmem:[%s7 + $0x28] sm:$0xff] %v1432
    %1445 = vst [vmem:[%s7 + $0x30] sm:$0xff] %v1435
    %1446 = vst [vmem:[%s7 + $0x38] sm:$0xff] %v1437
    // Predicated region
    $region50: #{gru_model_forward.3} parent=1 // pred_check
      _
    $region51: #{gru_model_forward.3} parent=1 // pred_check_branch
      %1448 = sbr.rel (0) target = $region53
    $region52: #{gru_model_forward.3} parent=1 // pred_region
      _
    $region53: #{gru_model_forward.3} parent=1 // pred_fallthru
      _
    // Predicated region
    $region54: #{gru_model_forward.3} parent=1 // pred_check
      _
    $region55: #{gru_model_forward.3} parent=1 // pred_check_branch
      %1450 = sbr.rel (0) target = $region57
    $region56: #{gru_model_forward.3} parent=1 // pred_region
      _
    $region57: #{gru_model_forward.3} parent=1 // pred_fallthru
      _
    %1451 = vsyncpa [#allocation6], 1
    %1452 = vsyncpa [#allocation8], 1
    %1453 = vsyncpa [#allocation11], 1

</llo_original>
